<compile_context>
chip_gen: v7x
topology: tpu7x:2x2x1
jax: 0.10.0
libtpu: 0.0.40
codegen_flags: <defaults>
</compile_context>

<pallas_src>
import numpy as np

import jax
import jax.numpy as jnp
from jax.experimental import pallas as pl
from jax.experimental.pallas import tpu as pltpu

# ---------------- configuration (small, deterministic) ----------------
N = 8                   # number of graph nodes (pooled over with mean, dim=0)
D = 32                  # input_features == hidden_features
M_DIM = 16              # EGNN m_dim (library default)
K = 3                   # num_nearest_neighbors
L = 3                   # three stacked EGNN layers
PWM = 16                # pwm_length
EDGE_IN = 2 * D + 1     # edge-MLP input dim (65)
EH = 2 * EDGE_IN        # edge-MLP hidden dim (130)
NH = 2 * D              # node-MLP hidden dim (64)
C_WIDE = 256            # lane width of the EH-padded ("wide") param buffer
C_NARROW = 128          # lane width of the node/output ("narrow") param buffer


# ---------------- packed-parameter layouts (shared host/kernel) ----------------
def _build_layouts():
    # wide buffer: EH(130)-wide tensors, zero-padded to 256 lanes
    wide = {}
    # one shared 8-row group for the 1-row EH-wide tensors (6 of 8 rows used)
    for l in range(L):
        wide[f"eW1d{l}"] = (2 * l, 1, C_WIDE)
        wide[f"eb1{l}"] = (2 * l + 1, 1, C_WIDE)
    off = 8
    for l in range(L):
        wide[f"eW1f{l}"] = (off, D, C_WIDE); off += D          # (32, EH)
        wide[f"eW1g{l}"] = (off, D, C_WIDE); off += D          # (32, EH)
        wide[f"eW2t{l}"] = (off, M_DIM, C_WIDE); off += M_DIM  # eW2^T: (16, EH)
    wide_rows = off                                            # 248

    # narrow buffer: node-MLP + output head, <=128 lanes
    narrow = {}
    # two shared 8-row groups for all 1-row biases (10 of 16 rows used)
    for l in range(L):
        narrow[f"nb1{l}"] = (l, 1, NH)
        narrow[f"nb2{l}"] = (3 + l, 1, D)
        narrow[f"eb2{l}"] = (6 + l, 1, M_DIM)
    narrow["linb"] = (9, 1, PWM)
    off = 16
    for l in range(L):
        narrow[f"nW1f{l}"] = (off, D, NH); off += D            # (32, 64)
        narrow[f"nW1m{l}"] = (off, M_DIM, NH); off += M_DIM    # (16, 64)
        narrow[f"nW2{l}"] = (off, NH, D); off += NH            # (64, 32)
    narrow["linW"] = (off, D, PWM); off += D                   # (32, 16)
    narrow_rows = off                                          # 384
    return wide, wide_rows, narrow, narrow_rows


WIDE_LAYOUT, WIDE_ROWS, NARROW_LAYOUT, NARROW_ROWS = _build_layouts()


def _silu(x):
    # x * sigmoid(x); the divide goes to the EUP reciprocal slot.
    return x * pl.reciprocal(1.0 + jnp.exp(-x), approx=False)


# ---------------- kernel (one graph per grid step) ----------------
def egnn_model_kernel(feats_ref, coords_ref, wide_ref, narrow_ref, out_ref):
    f32 = jnp.float32
    feats = feats_ref[...].astype(f32)      # (N, D)
    coords = coords_ref[...].astype(f32)    # (N, 3)
    n = feats.shape[0]
    BIG = jnp.float32(1e30)

    def wget(name):
        row, rows, cols = WIDE_LAYOUT[name]
        return wide_ref[row:row + rows, 0:cols]

    def nget(name):
        row, rows, cols = NARROW_LAYOUT[name]
        return narrow_ref[row:row + rows, 0:cols]

    # --- pairwise squared distances (exact componentwise form, 1 transpose) ---
    ct = jnp.transpose(coords, (1, 0))                       # (3, N)
    dist = jnp.zeros((n, n), f32)
    for c in range(3):
        dif = coords[:, c:c + 1] - ct[c:c + 1, :]            # (N, N)
        dist = dist + dif * dif

    # --- k-NN selection, hoisted out of the layer loop (coords never change) ---
    # Iterative masked row-min with lowest-column tie-break (distinct-index topk).
    col = jax.lax.broadcasted_iota(jnp.int32, (n, n), 1)
    d_work = dist
    onehots = []
    rds = []
    for _ in range(K):
        minval = jnp.min(d_work, axis=-1, keepdims=True)                 # (N,1)
        cand = d_work <= minval                                          # (N,N)
        sel = jnp.min(jnp.where(cand, col, n), axis=-1, keepdims=True)   # (N,1)
        oh = (col == sel).astype(f32)                                    # (N,N)
        onehots.append(oh)
        rds.append(jnp.sum(oh * dist, axis=-1, keepdims=True))           # (N,1)
        d_work = d_work + oh * BIG                                       # mask chosen
    G = jnp.concatenate(onehots, axis=0)                                 # (K*N, N)
    rd = jnp.concatenate(rds, axis=0)                                    # (K*N, 1)

    # --- 3 EGNN layers, statically unrolled; weights loaded at use sites ---
    for l in range(L):
        # edge MLP over all K*N (node, neighbour) pairs at once.
        # h_i contribution is K-invariant: compute once and tile along sublanes.
        hi = (jnp.dot(feats, wget(f"eW1f{l}"), preferred_element_type=f32)
              + wget(f"eb1{l}"))                                         # (N, 256)
        hi3 = jnp.concatenate([hi] * K, axis=0)                          # (K*N, 256)
        feats_j = jnp.dot(G, feats, preferred_element_type=f32)          # (K*N, D)
        pre = (hi3
               + jnp.dot(feats_j, wget(f"eW1g{l}"), preferred_element_type=f32)
               + rd * wget(f"eW1d{l}"))                                  # (K*N, 256)
        h = _silu(pre)
        # eW2 stored transposed: contract lane dims directly (no .T relayout).
        m = _silu(jax.lax.dot_general(
            h, wget(f"eW2t{l}"),
            dimension_numbers=(((1,), (1,)), ((), ())),
            preferred_element_type=f32) + nget(f"eb2{l}"))               # (K*N, M)

        # sum-pool the K messages of each node (static 8-aligned sublane slices)
        m_i = m[0:n, :]
        for kk in range(1, K):
            m_i = m_i + m[kk * n:(kk + 1) * n, :]                        # (N, M)

        # node MLP: Linear(D+M -> NH), SiLU, Linear(NH -> D); residual add
        h2 = _silu(jnp.dot(feats, nget(f"nW1f{l}"), preferred_element_type=f32)
                   + jnp.dot(m_i, nget(f"nW1m{l}"), preferred_element_type=f32)
                   + nget(f"nb1{l}"))                                    # (N, NH)
        feats = (feats
                 + jnp.dot(h2, nget(f"nW2{l}"), preferred_element_type=f32)
                 + nget(f"nb2{l}"))
        # coords unchanged (update_coords=False)

    pooled = jnp.mean(feats, axis=0, keepdims=True)                      # (1, D)
    out = jnp.dot(pooled, nget("linW"), preferred_element_type=f32) + nget("linb")
    out_ref[...] = out.astype(out_ref.dtype)


# ---------------- wrappers ----------------
def egnn_model_batched(feats, coords, wide, narrow):
    """feats: (B, N, D), coords: (B, N, 3) -> (B, 1, PWM).

    One grid step per graph; packed params DMA'd once (constant index_map) and
    kept VMEM-resident across the whole batch; batch axis marked parallel
    (second TensorCore on v7x)."""
    B = feats.shape[0]
    return pl.pallas_call(
        egnn_model_kernel,
        out_shape=jax.ShapeDtypeStruct((B, 1, PWM), jnp.float32),
        grid=(B,),
        in_specs=[
            pl.BlockSpec((None, N, D), lambda b: (b, 0, 0)),
            pl.BlockSpec((None, N, 3), lambda b: (b, 0, 0)),
            pl.BlockSpec((WIDE_ROWS, C_WIDE), lambda b: (0, 0)),
            pl.BlockSpec((NARROW_ROWS, C_NARROW), lambda b: (0, 0)),
        ],
        out_specs=pl.BlockSpec((None, 1, PWM), lambda b: (b, 0, 0)),
        compiler_params=pltpu.CompilerParams(
            dimension_semantics=("parallel",)),
    )(feats, coords, wide, narrow)


def egnn_model(feats, coords, wide, narrow):
    """Single-graph forward matching the PyTorch module: (N,D),(N,3) -> (1,PWM)."""
    return egnn_model_batched(feats[None], coords[None], wide, narrow)[0]


# ---------------- parameter init & host-side packing ----------------
def init_params(key):
    # Deterministic PyTorch-Linear-style init: U(-1/sqrt(fan_in), 1/sqrt(fan_in)).
    def lin(k, fan_in, shape):
        b = 1.0 / (fan_in ** 0.5)
        return jax.random.uniform(k, shape, jnp.float32, -b, b)

    ks = jax.random.split(key, 13)
    return {
        # edge MLP first linear, split across [h_i | h_j | d_ij] input blocks
        "eW1f": lin(ks[0], EDGE_IN, (L, D, EH)),
        "eW1g": lin(ks[1], EDGE_IN, (L, D, EH)),
        "eW1d": lin(ks[2], EDGE_IN, (L, 1, EH)),
        "eb1":  lin(ks[3], EDGE_IN, (L, EH)),
        "eW2":  lin(ks[4], EH, (L, EH, M_DIM)),
        "eb2":  lin(ks[5], EH, (L, M_DIM)),
        # node MLP first linear, split across [h_i | m_i] input blocks
        "nW1f": lin(ks[6], D + M_DIM, (L, D, NH)),
        "nW1m": lin(ks[7], D + M_DIM, (L, M_DIM, NH)),
        "nb1":  lin(ks[8], D + M_DIM, (L, NH)),
        "nW2":  lin(ks[9], NH, (L, NH, D)),
        "nb2":  lin(ks[10], NH, (L, D)),
        # final linear (hidden_features -> pwm_length)
        "linW": lin(ks[11], D, (D, PWM)),
        "linb": lin(ks[12], D, (PWM,)),
    }


def pack_params(params):
    """Pack weights into two f32 buffers: wide (EH-padded) and narrow (<=128 lanes)."""
    p = {k: np.asarray(v, np.float32) for k, v in params.items()}
    wide = np.zeros((WIDE_ROWS, C_WIDE), np.float32)
    narrow = np.zeros((NARROW_ROWS, C_NARROW), np.float32)

    def put(buf, layout, name, arr):
        a = np.asarray(arr, np.float32)
        if a.ndim == 1:
            a = a[None, :]
        row, rows, cols = layout[name]
        assert a.shape[0] <= rows and a.shape[1] <= cols, (name, a.shape)
        buf[row:row + a.shape[0], :a.shape[1]] = a

    for l in range(L):
        put(wide, WIDE_LAYOUT, f"eW1f{l}", p["eW1f"][l])
        put(wide, WIDE_LAYOUT, f"eW1g{l}", p["eW1g"][l])
        put(wide, WIDE_LAYOUT, f"eW1d{l}", p["eW1d"][l])
        put(wide, WIDE_LAYOUT, f"eb1{l}", p["eb1"][l])
        put(wide, WIDE_LAYOUT, f"eW2t{l}", p["eW2"][l].T)     # stored transposed
        put(narrow, NARROW_LAYOUT, f"eb2{l}", p["eb2"][l])
        put(narrow, NARROW_LAYOUT, f"nW1f{l}", p["nW1f"][l])
        put(narrow, NARROW_LAYOUT, f"nW1m{l}", p["nW1m"][l])
        put(narrow, NARROW_LAYOUT, f"nb1{l}", p["nb1"][l])
        put(narrow, NARROW_LAYOUT, f"nW2{l}", p["nW2"][l])
        put(narrow, NARROW_LAYOUT, f"nb2{l}", p["nb2"][l])
    put(narrow, NARROW_LAYOUT, "linW", p["linW"])
    put(narrow, NARROW_LAYOUT, "linb", p["linb"])
    return jnp.asarray(wide), jnp.asarray(narrow)


if __name__ == "__main__":
    key = jax.random.PRNGKey(0)
    kf, kc, kp = jax.random.split(key, 3)
    B = 4
    feats = jax.random.normal(kf, (B, N, D), dtype=jnp.float32)
    coords = jax.random.normal(kc, (B, N, 3), dtype=jnp.float32)
    params = init_params(kp)
    wide, narrow = pack_params(params)

    # batched forward: B graphs per pallas_call, weights VMEM-resident
    out_b = jax.block_until_ready(egnn_model_batched(feats, coords, wide, narrow))
    assert out_b.shape == (B, 1, PWM), out_b.shape
    assert bool(jnp.all(jnp.isfinite(out_b)))

    # single-graph forward matching the PyTorch module interface
    out_1 = jax.block_until_ready(egnn_model(feats[0], coords[0], wide, narrow))
    assert out_1.shape == (1, PWM), out_1.shape
    assert bool(jnp.all(jnp.isfinite(out_1)))

    print("KERNEL_OK")
</pallas_src>

<mosaic_0001>
module attributes {stable_mosaic.version = 11 : i64} {
  func.func @egnn_model_kernel(%arg0: i32, %arg1: memref<1x8x32xf32, #tpu.memory_space<vmem>>, %arg2: memref<1x8x3xf32, #tpu.memory_space<vmem>>, %arg3: memref<248x256xf32, #tpu.memory_space<vmem>>, %arg4: memref<384x128xf32, #tpu.memory_space<vmem>>, %arg5: memref<1x1x16xf32, #tpu.memory_space<vmem>>) attributes {dimension_semantics = [#tpu.dimension_semantics<parallel>], iteration_bounds = array<i64: 4>, scalar_prefetch = 0 : i64, scratch_operands = 0 : i64, tpu.core_type = #tpu.core_type<tc>, window_params = [{transform_indices = @transform_0, window_bounds = array<i64: 1, 8, 32>}, {transform_indices = @transform_1, window_bounds = array<i64: 1, 8, 3>}, {pipeline_mode = #tpu.pipeline_mode<synchronous>, transform_indices = @transform_2, window_bounds = array<i64: 248, 256>}, {pipeline_mode = #tpu.pipeline_mode<synchronous>, transform_indices = @transform_3, window_bounds = array<i64: 384, 128>}, {transform_indices = @transform_4, window_bounds = array<i64: 1, 1, 16>}]} {
    %c0 = arith.constant 0 : index
    %c0_0 = arith.constant 0 : index
    %c0_1 = arith.constant 0 : index
    %0 = vector.load %arg1[%c0, %c0_0, %c0_1] : memref<1x8x32xf32, #tpu.memory_space<vmem>>, vector<1x8x32xf32>
    %1 = vector.shape_cast %0 : vector<1x8x32xf32> to vector<8x32xf32>
    %c0_2 = arith.constant 0 : index
    %c0_3 = arith.constant 0 : index
    %c0_4 = arith.constant 0 : index
    %2 = vector.load %arg2[%c0_2, %c0_3, %c0_4] : memref<1x8x3xf32, #tpu.memory_space<vmem>>, vector<1x8x3xf32>
    %3 = vector.shape_cast %2 : vector<1x8x3xf32> to vector<8x3xf32>
    %4 = tpu.transpose %3, [1, 0] : vector<8x3xf32> -> vector<3x8xf32>
    %cst = arith.constant 0.000000e+00 : f32
    %5 = vector.broadcast %cst : f32 to vector<8x8xf32>
    %6 = vector.extract_strided_slice %3 {offsets = [0, 0], sizes = [8, 1], strides = [1, 1]} : vector<8x3xf32> to vector<8x1xf32>
    %7 = vector.extract_strided_slice %4 {offsets = [0, 0], sizes = [1, 8], strides = [1, 1]} : vector<3x8xf32> to vector<1x8xf32>
    %8 = vector.broadcast %6 : vector<8x1xf32> to vector<8x8xf32>
    %9 = vector.broadcast %7 : vector<1x8xf32> to vector<8x8xf32>
    %10 = arith.subf %8, %9 : vector<8x8xf32>
    %11 = arith.mulf %10, %10 : vector<8x8xf32>
    %12 = arith.addf %5, %11 : vector<8x8xf32>
    %13 = vector.extract_strided_slice %3 {offsets = [0, 1], sizes = [8, 1], strides = [1, 1]} : vector<8x3xf32> to vector<8x1xf32>
    %14 = vector.extract_strided_slice %4 {offsets = [1, 0], sizes = [1, 8], strides = [1, 1]} : vector<3x8xf32> to vector<1x8xf32>
    %15 = vector.broadcast %13 : vector<8x1xf32> to vector<8x8xf32>
    %16 = vector.broadcast %14 : vector<1x8xf32> to vector<8x8xf32>
    %17 = arith.subf %15, %16 : vector<8x8xf32>
    %18 = arith.mulf %17, %17 : vector<8x8xf32>
    %19 = arith.addf %12, %18 : vector<8x8xf32>
    %20 = vector.extract_strided_slice %3 {offsets = [0, 2], sizes = [8, 1], strides = [1, 1]} : vector<8x3xf32> to vector<8x1xf32>
    %21 = vector.extract_strided_slice %4 {offsets = [2, 0], sizes = [1, 8], strides = [1, 1]} : vector<3x8xf32> to vector<1x8xf32>
    %22 = vector.broadcast %20 : vector<8x1xf32> to vector<8x8xf32>
    %23 = vector.broadcast %21 : vector<1x8xf32> to vector<8x8xf32>
    %24 = arith.subf %22, %23 : vector<8x8xf32>
    %25 = arith.mulf %24, %24 : vector<8x8xf32>
    %26 = arith.addf %19, %25 : vector<8x8xf32>
    %27 = tpu.iota {dimensions = array<i32: 1>} : vector<8x8xi32>
    %cst_5 = arith.constant dense<0x7F800000> : vector<8xf32>
    %28 = vector.multi_reduction <minimumf>, %26, %cst_5 [1] : vector<8x8xf32> to vector<8xf32>
    %29 = vector.shape_cast %28 : vector<8xf32> to vector<8x1xf32>
    %30 = vector.broadcast %29 : vector<8x1xf32> to vector<8x8xf32>
    %31 = arith.cmpf ole, %26, %30 : vector<8x8xf32>
    %c8_i32 = arith.constant 8 : i32
    %32 = vector.broadcast %c8_i32 : i32 to vector<8x8xi32>
    %33 = arith.select %31, %27, %32 : vector<8x8xi1>, vector<8x8xi32>
    %cst_6 = arith.constant dense<2147483647> : vector<8xi32>
    %34 = vector.multi_reduction <minsi>, %33, %cst_6 [1] : vector<8x8xi32> to vector<8xi32>
    %35 = vector.shape_cast %34 : vector<8xi32> to vector<8x1xi32>
    %36 = vector.broadcast %35 : vector<8x1xi32> to vector<8x8xi32>
    %37 = arith.cmpi eq, %27, %36 : vector<8x8xi32>
    %38 = arith.extui %37 : vector<8x8xi1> to vector<8x8xi32>
    %39 = arith.sitofp %38 : vector<8x8xi32> to vector<8x8xf32>
    %40 = arith.mulf %39, %26 : vector<8x8xf32>
    %cst_7 = arith.constant dense<0.000000e+00> : vector<8xf32>
    %41 = vector.multi_reduction <add>, %40, %cst_7 [1] : vector<8x8xf32> to vector<8xf32>
    %42 = vector.shape_cast %41 : vector<8xf32> to vector<8x1xf32>
    %cst_8 = arith.constant 1.000000e+30 : f32
    %43 = vector.broadcast %cst_8 : f32 to vector<8x8xf32>
    %44 = arith.mulf %39, %43 : vector<8x8xf32>
    %45 = arith.addf %26, %44 : vector<8x8xf32>
    %cst_9 = arith.constant dense<0x7F800000> : vector<8xf32>
    %46 = vector.multi_reduction <minimumf>, %45, %cst_9 [1] : vector<8x8xf32> to vector<8xf32>
    %47 = vector.shape_cast %46 : vector<8xf32> to vector<8x1xf32>
    %48 = vector.broadcast %47 : vector<8x1xf32> to vector<8x8xf32>
    %49 = arith.cmpf ole, %45, %48 : vector<8x8xf32>
    %c8_i32_10 = arith.constant 8 : i32
    %50 = vector.broadcast %c8_i32_10 : i32 to vector<8x8xi32>
    %51 = arith.select %49, %27, %50 : vector<8x8xi1>, vector<8x8xi32>
    %cst_11 = arith.constant dense<2147483647> : vector<8xi32>
    %52 = vector.multi_reduction <minsi>, %51, %cst_11 [1] : vector<8x8xi32> to vector<8xi32>
    %53 = vector.shape_cast %52 : vector<8xi32> to vector<8x1xi32>
    %54 = vector.broadcast %53 : vector<8x1xi32> to vector<8x8xi32>
    %55 = arith.cmpi eq, %27, %54 : vector<8x8xi32>
    %56 = arith.extui %55 : vector<8x8xi1> to vector<8x8xi32>
    %57 = arith.sitofp %56 : vector<8x8xi32> to vector<8x8xf32>
    %58 = arith.mulf %57, %26 : vector<8x8xf32>
    %cst_12 = arith.constant dense<0.000000e+00> : vector<8xf32>
    %59 = vector.multi_reduction <add>, %58, %cst_12 [1] : vector<8x8xf32> to vector<8xf32>
    %60 = vector.shape_cast %59 : vector<8xf32> to vector<8x1xf32>
    %cst_13 = arith.constant 1.000000e+30 : f32
    %61 = vector.broadcast %cst_13 : f32 to vector<8x8xf32>
    %62 = arith.mulf %57, %61 : vector<8x8xf32>
    %63 = arith.addf %45, %62 : vector<8x8xf32>
    %cst_14 = arith.constant dense<0x7F800000> : vector<8xf32>
    %64 = vector.multi_reduction <minimumf>, %63, %cst_14 [1] : vector<8x8xf32> to vector<8xf32>
    %65 = vector.shape_cast %64 : vector<8xf32> to vector<8x1xf32>
    %66 = vector.broadcast %65 : vector<8x1xf32> to vector<8x8xf32>
    %67 = arith.cmpf ole, %63, %66 : vector<8x8xf32>
    %c8_i32_15 = arith.constant 8 : i32
    %68 = vector.broadcast %c8_i32_15 : i32 to vector<8x8xi32>
    %69 = arith.select %67, %27, %68 : vector<8x8xi1>, vector<8x8xi32>
    %cst_16 = arith.constant dense<2147483647> : vector<8xi32>
    %70 = vector.multi_reduction <minsi>, %69, %cst_16 [1] : vector<8x8xi32> to vector<8xi32>
    %71 = vector.shape_cast %70 : vector<8xi32> to vector<8x1xi32>
    %72 = vector.broadcast %71 : vector<8x1xi32> to vector<8x8xi32>
    %73 = arith.cmpi eq, %27, %72 : vector<8x8xi32>
    %74 = arith.extui %73 : vector<8x8xi1> to vector<8x8xi32>
    %75 = arith.sitofp %74 : vector<8x8xi32> to vector<8x8xf32>
    %76 = arith.mulf %75, %26 : vector<8x8xf32>
    %cst_17 = arith.constant dense<0.000000e+00> : vector<8xf32>
    %77 = vector.multi_reduction <add>, %76, %cst_17 [1] : vector<8x8xf32> to vector<8xf32>
    %78 = vector.shape_cast %77 : vector<8xf32> to vector<8x1xf32>
    %79 = tpu.concatenate %39, %57, %75 in 0 : vector<8x8xf32>, vector<8x8xf32>, vector<8x8xf32> -> vector<24x8xf32>
    %80 = tpu.concatenate %42, %60, %78 in 0 : vector<8x1xf32>, vector<8x1xf32>, vector<8x1xf32> -> vector<24x1xf32>
    %c8 = arith.constant 8 : index
    %c0_18 = arith.constant 0 : index
    %81 = vector.load %arg3[%c8, %c0_18] : memref<248x256xf32, #tpu.memory_space<vmem>>, vector<32x256xf32>
    %cst_19 = arith.constant dense<0.000000e+00> : vector<8x256xf32>
    %82 = tpu.matmul %1, %81, %cst_19 {dimension_numbers = #tpu.dot_dimension_numbers<[1], [0], [0], [1], [0, 0, 1, 1], [], []>} : vector<8x32xf32>, vector<32x256xf32>, vector<8x256xf32> -> vector<8x256xf32>
    %c1 = arith.constant 1 : index
    %c0_20 = arith.constant 0 : index
    %83 = vector.load %arg3[%c1, %c0_20] : memref<248x256xf32, #tpu.memory_space<vmem>>, vector<1x256xf32>
    %84 = vector.broadcast %83 : vector<1x256xf32> to vector<8x256xf32>
    %85 = arith.addf %82, %84 : vector<8x256xf32>
    %86 = tpu.concatenate %85, %85, %85 in 0 : vector<8x256xf32>, vector<8x256xf32>, vector<8x256xf32> -> vector<24x256xf32>
    %cst_21 = arith.constant dense<0.000000e+00> : vector<24x32xf32>
    %87 = tpu.matmul %79, %1, %cst_21 {dimension_numbers = #tpu.dot_dimension_numbers<[1], [0], [0], [1], [0, 0, 1, 1], [], []>} : vector<24x8xf32>, vector<8x32xf32>, vector<24x32xf32> -> vector<24x32xf32>
    %c40 = arith.constant 40 : index
    %c0_22 = arith.constant 0 : index
    %88 = vector.load %arg3[%c40, %c0_22] : memref<248x256xf32, #tpu.memory_space<vmem>>, vector<32x256xf32>
    %cst_23 = arith.constant dense<0.000000e+00> : vector<24x256xf32>
    %89 = tpu.matmul %87, %88, %cst_23 {dimension_numbers = #tpu.dot_dimension_numbers<[1], [0], [0], [1], [0, 0, 1, 1], [], []>} : vector<24x32xf32>, vector<32x256xf32>, vector<24x256xf32> -> vector<24x256xf32>
    %90 = arith.addf %86, %89 : vector<24x256xf32>
    %c0_24 = arith.constant 0 : index
    %c0_25 = arith.constant 0 : index
    %91 = vector.load %arg3[%c0_24, %c0_25] : memref<248x256xf32, #tpu.memory_space<vmem>>, vector<1x256xf32>
    %92 = vector.broadcast %80 : vector<24x1xf32> to vector<24x256xf32>
    %93 = vector.broadcast %91 : vector<1x256xf32> to vector<24x256xf32>
    %94 = arith.mulf %92, %93 : vector<24x256xf32>
    %95 = arith.addf %90, %94 : vector<24x256xf32>
    %cst_26 = arith.constant 0.000000e+00 : f32
    %96 = vector.broadcast %cst_26 : f32 to vector<24x256xf32>
    %97 = arith.subf %96, %95 : vector<24x256xf32>
    %98 = math.exp %97 : vector<24x256xf32>
    %cst_27 = arith.constant 1.000000e+00 : f32
    %99 = vector.broadcast %cst_27 : f32 to vector<24x256xf32>
    %100 = arith.addf %99, %98 : vector<24x256xf32>
    %101 = tpu.reciprocal %100 : vector<24x256xf32> -> vector<24x256xf32>
    %102 = arith.mulf %95, %101 : vector<24x256xf32>
    %c72 = arith.constant 72 : index
    %c0_28 = arith.constant 0 : index
    %103 = vector.load %arg3[%c72, %c0_28] : memref<248x256xf32, #tpu.memory_space<vmem>>, vector<16x256xf32>
    %cst_29 = arith.constant dense<0.000000e+00> : vector<24x16xf32>
    %104 = tpu.matmul %102, %103, %cst_29 {dimension_numbers = #tpu.dot_dimension_numbers<[1], [1], [0], [0], [0, 0, 1, 0], [], []>} : vector<24x256xf32>, vector<16x256xf32>, vector<24x16xf32> -> vector<24x16xf32>
    %c6 = arith.constant 6 : index
    %c0_30 = arith.constant 0 : index
    %105 = vector.load %arg4[%c6, %c0_30] : memref<384x128xf32, #tpu.memory_space<vmem>>, vector<1x16xf32>
    %106 = vector.broadcast %105 : vector<1x16xf32> to vector<24x16xf32>
    %107 = arith.addf %104, %106 : vector<24x16xf32>
    %cst_31 = arith.constant 0.000000e+00 : f32
    %108 = vector.broadcast %cst_31 : f32 to vector<24x16xf32>
    %109 = arith.subf %108, %107 : vector<24x16xf32>
    %110 = math.exp %109 : vector<24x16xf32>
    %cst_32 = arith.constant 1.000000e+00 : f32
    %111 = vector.broadcast %cst_32 : f32 to vector<24x16xf32>
    %112 = arith.addf %111, %110 : vector<24x16xf32>
    %113 = tpu.reciprocal %112 : vector<24x16xf32> -> vector<24x16xf32>
    %114 = arith.mulf %107, %113 : vector<24x16xf32>
    %115 = vector.extract_strided_slice %114 {offsets = [0, 0], sizes = [8, 16], strides = [1, 1]} : vector<24x16xf32> to vector<8x16xf32>
    %116 = vector.extract_strided_slice %114 {offsets = [8, 0], sizes = [8, 16], strides = [1, 1]} : vector<24x16xf32> to vector<8x16xf32>
    %117 = arith.addf %115, %116 : vector<8x16xf32>
    %118 = vector.extract_strided_slice %114 {offsets = [16, 0], sizes = [8, 16], strides = [1, 1]} : vector<24x16xf32> to vector<8x16xf32>
    %119 = arith.addf %117, %118 : vector<8x16xf32>
    %c16 = arith.constant 16 : index
    %c0_33 = arith.constant 0 : index
    %120 = vector.load %arg4[%c16, %c0_33] : memref<384x128xf32, #tpu.memory_space<vmem>>, vector<32x64xf32>
    %cst_34 = arith.constant dense<0.000000e+00> : vector<8x64xf32>
    %121 = tpu.matmul %1, %120, %cst_34 {dimension_numbers = #tpu.dot_dimension_numbers<[1], [0], [0], [1], [0, 0, 1, 1], [], []>} : vector<8x32xf32>, vector<32x64xf32>, vector<8x64xf32> -> vector<8x64xf32>
    %c48 = arith.constant 48 : index
    %c0_35 = arith.constant 0 : index
    %122 = vector.load %arg4[%c48, %c0_35] : memref<384x128xf32, #tpu.memory_space<vmem>>, vector<16x64xf32>
    %cst_36 = arith.constant dense<0.000000e+00> : vector<8x64xf32>
    %123 = tpu.matmul %119, %122, %cst_36 {dimension_numbers = #tpu.dot_dimension_numbers<[1], [0], [0], [1], [0, 0, 1, 1], [], []>} : vector<8x16xf32>, vector<16x64xf32>, vector<8x64xf32> -> vector<8x64xf32>
    %124 = arith.addf %121, %123 : vector<8x64xf32>
    %c0_37 = arith.constant 0 : index
    %c0_38 = arith.constant 0 : index
    %125 = vector.load %arg4[%c0_37, %c0_38] : memref<384x128xf32, #tpu.memory_space<vmem>>, vector<1x64xf32>
    %126 = vector.broadcast %125 : vector<1x64xf32> to vector<8x64xf32>
    %127 = arith.addf %124, %126 : vector<8x64xf32>
    %cst_39 = arith.constant 0.000000e+00 : f32
    %128 = vector.broadcast %cst_39 : f32 to vector<8x64xf32>
    %129 = arith.subf %128, %127 : vector<8x64xf32>
    %130 = math.exp %129 : vector<8x64xf32>
    %cst_40 = arith.constant 1.000000e+00 : f32
    %131 = vector.broadcast %cst_40 : f32 to vector<8x64xf32>
    %132 = arith.addf %131, %130 : vector<8x64xf32>
    %133 = tpu.reciprocal %132 : vector<8x64xf32> -> vector<8x64xf32>
    %134 = arith.mulf %127, %133 : vector<8x64xf32>
    %c64 = arith.constant 64 : index
    %c0_41 = arith.constant 0 : index
    %135 = vector.load %arg4[%c64, %c0_41] : memref<384x128xf32, #tpu.memory_space<vmem>>, vector<64x32xf32>
    %cst_42 = arith.constant dense<0.000000e+00> : vector<8x32xf32>
    %136 = tpu.matmul %134, %135, %cst_42 {dimension_numbers = #tpu.dot_dimension_numbers<[1], [0], [0], [1], [0, 0, 1, 1], [], []>} : vector<8x64xf32>, vector<64x32xf32>, vector<8x32xf32> -> vector<8x32xf32>
    %137 = arith.addf %1, %136 : vector<8x32xf32>
    %c3 = arith.constant 3 : index
    %c0_43 = arith.constant 0 : index
    %138 = vector.load %arg4[%c3, %c0_43] : memref<384x128xf32, #tpu.memory_space<vmem>>, vector<1x32xf32>
    %139 = vector.broadcast %138 : vector<1x32xf32> to vector<8x32xf32>
    %140 = arith.addf %137, %139 : vector<8x32xf32>
    %c88 = arith.constant 88 : index
    %c0_44 = arith.constant 0 : index
    %141 = vector.load %arg3[%c88, %c0_44] : memref<248x256xf32, #tpu.memory_space<vmem>>, vector<32x256xf32>
    %cst_45 = arith.constant dense<0.000000e+00> : vector<8x256xf32>
    %142 = tpu.matmul %140, %141, %cst_45 {dimension_numbers = #tpu.dot_dimension_numbers<[1], [0], [0], [1], [0, 0, 1, 1], [], []>} : vector<8x32xf32>, vector<32x256xf32>, vector<8x256xf32> -> vector<8x256xf32>
    %c3_46 = arith.constant 3 : index
    %c0_47 = arith.constant 0 : index
    %143 = vector.load %arg3[%c3_46, %c0_47] : memref<248x256xf32, #tpu.memory_space<vmem>>, vector<1x256xf32>
    %144 = vector.broadcast %143 : vector<1x256xf32> to vector<8x256xf32>
    %145 = arith.addf %142, %144 : vector<8x256xf32>
    %146 = tpu.concatenate %145, %145, %145 in 0 : vector<8x256xf32>, vector<8x256xf32>, vector<8x256xf32> -> vector<24x256xf32>
    %cst_48 = arith.constant dense<0.000000e+00> : vector<24x32xf32>
    %147 = tpu.matmul %79, %140, %cst_48 {dimension_numbers = #tpu.dot_dimension_numbers<[1], [0], [0], [1], [0, 0, 1, 1], [], []>} : vector<24x8xf32>, vector<8x32xf32>, vector<24x32xf32> -> vector<24x32xf32>
    %c120 = arith.constant 120 : index
    %c0_49 = arith.constant 0 : index
    %148 = vector.load %arg3[%c120, %c0_49] : memref<248x256xf32, #tpu.memory_space<vmem>>, vector<32x256xf32>
    %cst_50 = arith.constant dense<0.000000e+00> : vector<24x256xf32>
    %149 = tpu.matmul %147, %148, %cst_50 {dimension_numbers = #tpu.dot_dimension_numbers<[1], [0], [0], [1], [0, 0, 1, 1], [], []>} : vector<24x32xf32>, vector<32x256xf32>, vector<24x256xf32> -> vector<24x256xf32>
    %150 = arith.addf %146, %149 : vector<24x256xf32>
    %c2 = arith.constant 2 : index
    %c0_51 = arith.constant 0 : index
    %151 = vector.load %arg3[%c2, %c0_51] : memref<248x256xf32, #tpu.memory_space<vmem>>, vector<1x256xf32>
    %152 = vector.broadcast %80 : vector<24x1xf32> to vector<24x256xf32>
    %153 = vector.broadcast %151 : vector<1x256xf32> to vector<24x256xf32>
    %154 = arith.mulf %152, %153 : vector<24x256xf32>
    %155 = arith.addf %150, %154 : vector<24x256xf32>
    %cst_52 = arith.constant 0.000000e+00 : f32
    %156 = vector.broadcast %cst_52 : f32 to vector<24x256xf32>
    %157 = arith.subf %156, %155 : vector<24x256xf32>
    %158 = math.exp %157 : vector<24x256xf32>
    %cst_53 = arith.constant 1.000000e+00 : f32
    %159 = vector.broadcast %cst_53 : f32 to vector<24x256xf32>
    %160 = arith.addf %159, %158 : vector<24x256xf32>
    %161 = tpu.reciprocal %160 : vector<24x256xf32> -> vector<24x256xf32>
    %162 = arith.mulf %155, %161 : vector<24x256xf32>
    %c152 = arith.constant 152 : index
    %c0_54 = arith.constant 0 : index
    %163 = vector.load %arg3[%c152, %c0_54] : memref<248x256xf32, #tpu.memory_space<vmem>>, vector<16x256xf32>
    %cst_55 = arith.constant dense<0.000000e+00> : vector<24x16xf32>
    %164 = tpu.matmul %162, %163, %cst_55 {dimension_numbers = #tpu.dot_dimension_numbers<[1], [1], [0], [0], [0, 0, 1, 0], [], []>} : vector<24x256xf32>, vector<16x256xf32>, vector<24x16xf32> -> vector<24x16xf32>
    %c7 = arith.constant 7 : index
    %c0_56 = arith.constant 0 : index
    %165 = vector.load %arg4[%c7, %c0_56] : memref<384x128xf32, #tpu.memory_space<vmem>>, vector<1x16xf32>
    %166 = vector.broadcast %165 : vector<1x16xf32> to vector<24x16xf32>
    %167 = arith.addf %164, %166 : vector<24x16xf32>
    %cst_57 = arith.constant 0.000000e+00 : f32
    %168 = vector.broadcast %cst_57 : f32 to vector<24x16xf32>
    %169 = arith.subf %168, %167 : vector<24x16xf32>
    %170 = math.exp %169 : vector<24x16xf32>
    %cst_58 = arith.constant 1.000000e+00 : f32
    %171 = vector.broadcast %cst_58 : f32 to vector<24x16xf32>
    %172 = arith.addf %171, %170 : vector<24x16xf32>
    %173 = tpu.reciprocal %172 : vector<24x16xf32> -> vector<24x16xf32>
    %174 = arith.mulf %167, %173 : vector<24x16xf32>
    %175 = vector.extract_strided_slice %174 {offsets = [0, 0], sizes = [8, 16], strides = [1, 1]} : vector<24x16xf32> to vector<8x16xf32>
    %176 = vector.extract_strided_slice %174 {offsets = [8, 0], sizes = [8, 16], strides = [1, 1]} : vector<24x16xf32> to vector<8x16xf32>
    %177 = arith.addf %175, %176 : vector<8x16xf32>
    %178 = vector.extract_strided_slice %174 {offsets = [16, 0], sizes = [8, 16], strides = [1, 1]} : vector<24x16xf32> to vector<8x16xf32>
    %179 = arith.addf %177, %178 : vector<8x16xf32>
    %c128 = arith.constant 128 : index
    %c0_59 = arith.constant 0 : index
    %180 = vector.load %arg4[%c128, %c0_59] : memref<384x128xf32, #tpu.memory_space<vmem>>, vector<32x64xf32>
    %cst_60 = arith.constant dense<0.000000e+00> : vector<8x64xf32>
    %181 = tpu.matmul %140, %180, %cst_60 {dimension_numbers = #tpu.dot_dimension_numbers<[1], [0], [0], [1], [0, 0, 1, 1], [], []>} : vector<8x32xf32>, vector<32x64xf32>, vector<8x64xf32> -> vector<8x64xf32>
    %c160 = arith.constant 160 : index
    %c0_61 = arith.constant 0 : index
    %182 = vector.load %arg4[%c160, %c0_61] : memref<384x128xf32, #tpu.memory_space<vmem>>, vector<16x64xf32>
    %cst_62 = arith.constant dense<0.000000e+00> : vector<8x64xf32>
    %183 = tpu.matmul %179, %182, %cst_62 {dimension_numbers = #tpu.dot_dimension_numbers<[1], [0], [0], [1], [0, 0, 1, 1], [], []>} : vector<8x16xf32>, vector<16x64xf32>, vector<8x64xf32> -> vector<8x64xf32>
    %184 = arith.addf %181, %183 : vector<8x64xf32>
    %c1_63 = arith.constant 1 : index
    %c0_64 = arith.constant 0 : index
    %185 = vector.load %arg4[%c1_63, %c0_64] : memref<384x128xf32, #tpu.memory_space<vmem>>, vector<1x64xf32>
    %186 = vector.broadcast %185 : vector<1x64xf32> to vector<8x64xf32>
    %187 = arith.addf %184, %186 : vector<8x64xf32>
    %cst_65 = arith.constant 0.000000e+00 : f32
    %188 = vector.broadcast %cst_65 : f32 to vector<8x64xf32>
    %189 = arith.subf %188, %187 : vector<8x64xf32>
    %190 = math.exp %189 : vector<8x64xf32>
    %cst_66 = arith.constant 1.000000e+00 : f32
    %191 = vector.broadcast %cst_66 : f32 to vector<8x64xf32>
    %192 = arith.addf %191, %190 : vector<8x64xf32>
    %193 = tpu.reciprocal %192 : vector<8x64xf32> -> vector<8x64xf32>
    %194 = arith.mulf %187, %193 : vector<8x64xf32>
    %c176 = arith.constant 176 : index
    %c0_67 = arith.constant 0 : index
    %195 = vector.load %arg4[%c176, %c0_67] : memref<384x128xf32, #tpu.memory_space<vmem>>, vector<64x32xf32>
    %cst_68 = arith.constant dense<0.000000e+00> : vector<8x32xf32>
    %196 = tpu.matmul %194, %195, %cst_68 {dimension_numbers = #tpu.dot_dimension_numbers<[1], [0], [0], [1], [0, 0, 1, 1], [], []>} : vector<8x64xf32>, vector<64x32xf32>, vector<8x32xf32> -> vector<8x32xf32>
    %197 = arith.addf %140, %196 : vector<8x32xf32>
    %c4 = arith.constant 4 : index
    %c0_69 = arith.constant 0 : index
    %198 = vector.load %arg4[%c4, %c0_69] : memref<384x128xf32, #tpu.memory_space<vmem>>, vector<1x32xf32>
    %199 = vector.broadcast %198 : vector<1x32xf32> to vector<8x32xf32>
    %200 = arith.addf %197, %199 : vector<8x32xf32>
    %c168 = arith.constant 168 : index
    %c0_70 = arith.constant 0 : index
    %201 = vector.load %arg3[%c168, %c0_70] : memref<248x256xf32, #tpu.memory_space<vmem>>, vector<32x256xf32>
    %cst_71 = arith.constant dense<0.000000e+00> : vector<8x256xf32>
    %202 = tpu.matmul %200, %201, %cst_71 {dimension_numbers = #tpu.dot_dimension_numbers<[1], [0], [0], [1], [0, 0, 1, 1], [], []>} : vector<8x32xf32>, vector<32x256xf32>, vector<8x256xf32> -> vector<8x256xf32>
    %c5 = arith.constant 5 : index
    %c0_72 = arith.constant 0 : index
    %203 = vector.load %arg3[%c5, %c0_72] : memref<248x256xf32, #tpu.memory_space<vmem>>, vector<1x256xf32>
    %204 = vector.broadcast %203 : vector<1x256xf32> to vector<8x256xf32>
    %205 = arith.addf %202, %204 : vector<8x256xf32>
    %206 = tpu.concatenate %205, %205, %205 in 0 : vector<8x256xf32>, vector<8x256xf32>, vector<8x256xf32> -> vector<24x256xf32>
    %cst_73 = arith.constant dense<0.000000e+00> : vector<24x32xf32>
    %207 = tpu.matmul %79, %200, %cst_73 {dimension_numbers = #tpu.dot_dimension_numbers<[1], [0], [0], [1], [0, 0, 1, 1], [], []>} : vector<24x8xf32>, vector<8x32xf32>, vector<24x32xf32> -> vector<24x32xf32>
    %c200 = arith.constant 200 : index
    %c0_74 = arith.constant 0 : index
    %208 = vector.load %arg3[%c200, %c0_74] : memref<248x256xf32, #tpu.memory_space<vmem>>, vector<32x256xf32>
    %cst_75 = arith.constant dense<0.000000e+00> : vector<24x256xf32>
    %209 = tpu.matmul %207, %208, %cst_75 {dimension_numbers = #tpu.dot_dimension_numbers<[1], [0], [0], [1], [0, 0, 1, 1], [], []>} : vector<24x32xf32>, vector<32x256xf32>, vector<24x256xf32> -> vector<24x256xf32>
    %210 = arith.addf %206, %209 : vector<24x256xf32>
    %c4_76 = arith.constant 4 : index
    %c0_77 = arith.constant 0 : index
    %211 = vector.load %arg3[%c4_76, %c0_77] : memref<248x256xf32, #tpu.memory_space<vmem>>, vector<1x256xf32>
    %212 = vector.broadcast %80 : vector<24x1xf32> to vector<24x256xf32>
    %213 = vector.broadcast %211 : vector<1x256xf32> to vector<24x256xf32>
    %214 = arith.mulf %212, %213 : vector<24x256xf32>
    %215 = arith.addf %210, %214 : vector<24x256xf32>
    %cst_78 = arith.constant 0.000000e+00 : f32
    %216 = vector.broadcast %cst_78 : f32 to vector<24x256xf32>
    %217 = arith.subf %216, %215 : vector<24x256xf32>
    %218 = math.exp %217 : vector<24x256xf32>
    %cst_79 = arith.constant 1.000000e+00 : f32
    %219 = vector.broadcast %cst_79 : f32 to vector<24x256xf32>
    %220 = arith.addf %219, %218 : vector<24x256xf32>
    %221 = tpu.reciprocal %220 : vector<24x256xf32> -> vector<24x256xf32>
    %222 = arith.mulf %215, %221 : vector<24x256xf32>
    %c232 = arith.constant 232 : index
    %c0_80 = arith.constant 0 : index
    %223 = vector.load %arg3[%c232, %c0_80] : memref<248x256xf32, #tpu.memory_space<vmem>>, vector<16x256xf32>
    %cst_81 = arith.constant dense<0.000000e+00> : vector<24x16xf32>
    %224 = tpu.matmul %222, %223, %cst_81 {dimension_numbers = #tpu.dot_dimension_numbers<[1], [1], [0], [0], [0, 0, 1, 0], [], []>} : vector<24x256xf32>, vector<16x256xf32>, vector<24x16xf32> -> vector<24x16xf32>
    %c8_82 = arith.constant 8 : index
    %c0_83 = arith.constant 0 : index
    %225 = vector.load %arg4[%c8_82, %c0_83] : memref<384x128xf32, #tpu.memory_space<vmem>>, vector<1x16xf32>
    %226 = vector.broadcast %225 : vector<1x16xf32> to vector<24x16xf32>
    %227 = arith.addf %224, %226 : vector<24x16xf32>
    %cst_84 = arith.constant 0.000000e+00 : f32
    %228 = vector.broadcast %cst_84 : f32 to vector<24x16xf32>
    %229 = arith.subf %228, %227 : vector<24x16xf32>
    %230 = math.exp %229 : vector<24x16xf32>
    %cst_85 = arith.constant 1.000000e+00 : f32
    %231 = vector.broadcast %cst_85 : f32 to vector<24x16xf32>
    %232 = arith.addf %231, %230 : vector<24x16xf32>
    %233 = tpu.reciprocal %232 : vector<24x16xf32> -> vector<24x16xf32>
    %234 = arith.mulf %227, %233 : vector<24x16xf32>
    %235 = vector.extract_strided_slice %234 {offsets = [0, 0], sizes = [8, 16], strides = [1, 1]} : vector<24x16xf32> to vector<8x16xf32>
    %236 = vector.extract_strided_slice %234 {offsets = [8, 0], sizes = [8, 16], strides = [1, 1]} : vector<24x16xf32> to vector<8x16xf32>
    %237 = arith.addf %235, %236 : vector<8x16xf32>
    %238 = vector.extract_strided_slice %234 {offsets = [16, 0], sizes = [8, 16], strides = [1, 1]} : vector<24x16xf32> to vector<8x16xf32>
    %239 = arith.addf %237, %238 : vector<8x16xf32>
    %c240 = arith.constant 240 : index
    %c0_86 = arith.constant 0 : index
    %240 = vector.load %arg4[%c240, %c0_86] : memref<384x128xf32, #tpu.memory_space<vmem>>, vector<32x64xf32>
    %cst_87 = arith.constant dense<0.000000e+00> : vector<8x64xf32>
    %241 = tpu.matmul %200, %240, %cst_87 {dimension_numbers = #tpu.dot_dimension_numbers<[1], [0], [0], [1], [0, 0, 1, 1], [], []>} : vector<8x32xf32>, vector<32x64xf32>, vector<8x64xf32> -> vector<8x64xf32>
    %c272 = arith.constant 272 : index
    %c0_88 = arith.constant 0 : index
    %242 = vector.load %arg4[%c272, %c0_88] : memref<384x128xf32, #tpu.memory_space<vmem>>, vector<16x64xf32>
    %cst_89 = arith.constant dense<0.000000e+00> : vector<8x64xf32>
    %243 = tpu.matmul %239, %242, %cst_89 {dimension_numbers = #tpu.dot_dimension_numbers<[1], [0], [0], [1], [0, 0, 1, 1], [], []>} : vector<8x16xf32>, vector<16x64xf32>, vector<8x64xf32> -> vector<8x64xf32>
    %244 = arith.addf %241, %243 : vector<8x64xf32>
    %c2_90 = arith.constant 2 : index
    %c0_91 = arith.constant 0 : index
    %245 = vector.load %arg4[%c2_90, %c0_91] : memref<384x128xf32, #tpu.memory_space<vmem>>, vector<1x64xf32>
    %246 = vector.broadcast %245 : vector<1x64xf32> to vector<8x64xf32>
    %247 = arith.addf %244, %246 : vector<8x64xf32>
    %cst_92 = arith.constant 0.000000e+00 : f32
    %248 = vector.broadcast %cst_92 : f32 to vector<8x64xf32>
    %249 = arith.subf %248, %247 : vector<8x64xf32>
    %250 = math.exp %249 : vector<8x64xf32>
    %cst_93 = arith.constant 1.000000e+00 : f32
    %251 = vector.broadcast %cst_93 : f32 to vector<8x64xf32>
    %252 = arith.addf %251, %250 : vector<8x64xf32>
    %253 = tpu.reciprocal %252 : vector<8x64xf32> -> vector<8x64xf32>
    %254 = arith.mulf %247, %253 : vector<8x64xf32>
    %c288 = arith.constant 288 : index
    %c0_94 = arith.constant 0 : index
    %255 = vector.load %arg4[%c288, %c0_94] : memref<384x128xf32, #tpu.memory_space<vmem>>, vector<64x32xf32>
    %cst_95 = arith.constant dense<0.000000e+00> : vector<8x32xf32>
    %256 = tpu.matmul %254, %255, %cst_95 {dimension_numbers = #tpu.dot_dimension_numbers<[1], [0], [0], [1], [0, 0, 1, 1], [], []>} : vector<8x64xf32>, vector<64x32xf32>, vector<8x32xf32> -> vector<8x32xf32>
    %257 = arith.addf %200, %256 : vector<8x32xf32>
    %c5_96 = arith.constant 5 : index
    %c0_97 = arith.constant 0 : index
    %258 = vector.load %arg4[%c5_96, %c0_97] : memref<384x128xf32, #tpu.memory_space<vmem>>, vector<1x32xf32>
    %259 = vector.broadcast %258 : vector<1x32xf32> to vector<8x32xf32>
    %260 = arith.addf %257, %259 : vector<8x32xf32>
    %cst_98 = arith.constant dense<0.000000e+00> : vector<32xf32>
    %261 = vector.multi_reduction <add>, %260, %cst_98 [0] : vector<8x32xf32> to vector<32xf32>
    %262 = vector.shape_cast %261 : vector<32xf32> to vector<1x32xf32>
    %cst_99 = arith.constant 8.000000e+00 : f32
    %263 = vector.broadcast %cst_99 : f32 to vector<1x32xf32>
    %264 = arith.divf %262, %263 : vector<1x32xf32>
    %c352 = arith.constant 352 : index
    %c0_100 = arith.constant 0 : index
    %265 = vector.load %arg4[%c352, %c0_100] : memref<384x128xf32, #tpu.memory_space<vmem>>, vector<32x16xf32>
    %cst_101 = arith.constant dense<0.000000e+00> : vector<1x16xf32>
    %266 = tpu.matmul %264, %265, %cst_101 {dimension_numbers = #tpu.dot_dimension_numbers<[1], [0], [0], [1], [0, 0, 1, 1], [], []>} : vector<1x32xf32>, vector<32x16xf32>, vector<1x16xf32> -> vector<1x16xf32>
    %c9 = arith.constant 9 : index
    %c0_102 = arith.constant 0 : index
    %267 = vector.load %arg4[%c9, %c0_102] : memref<384x128xf32, #tpu.memory_space<vmem>>, vector<1x16xf32>
    %268 = arith.addf %266, %267 : vector<1x16xf32>
    %c0_103 = arith.constant 0 : index
    %c0_104 = arith.constant 0 : index
    %c0_105 = arith.constant 0 : index
    %269 = vector.load %arg5[%c0_103, %c0_104, %c0_105] : memref<1x1x16xf32, #tpu.memory_space<vmem>>, vector<1x1x16xf32>
    %270 = vector.shape_cast %269 : vector<1x1x16xf32> to vector<1x16xf32>
    %271 = vector.shape_cast %268 : vector<1x16xf32> to vector<1x1x16xf32>
    tpu.vector_store %arg5[%c0_103, %c0_104, %c0_105], %271 {strides = array<i32>} : memref<1x1x16xf32, #tpu.memory_space<vmem>>, vector<1x1x16xf32>,
    return
  }
  func.func @transform_0(%arg0: i32) -> (i32, i32, i32) {
    %c0_i32 = arith.constant 0 : i32
    %c0_i32_0 = arith.constant 0 : i32
    %c0_i32_1 = arith.constant 0 : i32
    return %arg0, %c0_i32, %c0_i32_0 : i32, i32, i32
  }
  func.func @transform_1(%arg0: i32) -> (i32, i32, i32) {
    %c0_i32 = arith.constant 0 : i32
    %c0_i32_0 = arith.constant 0 : i32
    %c0_i32_1 = arith.constant 0 : i32
    return %arg0, %c0_i32, %c0_i32_0 : i32, i32, i32
  }
  func.func @transform_2(%arg0: i32) -> (i32, i32) {
    %c0_i32 = arith.constant 0 : i32
    %c0_i32_0 = arith.constant 0 : i32
    %c0_i32_1 = arith.constant 0 : i32
    return %c0_i32, %c0_i32_0 : i32, i32
  }
  func.func @transform_3(%arg0: i32) -> (i32, i32) {
    %c0_i32 = arith.constant 0 : i32
    %c0_i32_0 = arith.constant 0 : i32
    %c0_i32_1 = arith.constant 0 : i32
    return %c0_i32, %c0_i32_0 : i32, i32
  }
  func.func @transform_4(%arg0: i32) -> (i32, i32, i32) {
    %c0_i32 = arith.constant 0 : i32
    %c0_i32_0 = arith.constant 0 : i32
    %c0_i32_1 = arith.constant 0 : i32
    return %arg0, %c0_i32, %c0_i32_0 : i32, i32, i32
  }
}

</mosaic_0001>

<llo_original>
// kernel: tpu_custom_call.1
$region0: #{tpu_custom_call.1}
  #allocation0 [shape = 'u32[]', space=smem, size = 0x4, offset = 0x4, fixed_abs, tag = 'smem constant byte address 0x4 - core index']
  #allocation1 [shape = 'u32[144,128]{1,0:T(1,128)}', space=vmem, size = 0x12000, scoped, tag = 'internal scratch']
  %s0 = inlined_call_operand.vmem [shape: f32[4,8,32], index: 0, kind: input, shape index: {}]
  %s1 = inlined_call_operand.vmem [shape: f32[4,8,3], index: 1, kind: input, shape index: {}]
  %s2 = inlined_call_operand.hbm [shape: f32[248,256], index: 2, kind: input, shape index: {}]
  %s3 = inlined_call_operand.hbm [shape: f32[384,128], index: 3, kind: input, shape index: {}]
  %s4 = inlined_call_operand.hbm [shape: f32[4,1,16], index: 4, kind: output, shape index: {}]
  %s5 = sld [smem:[#allocation0]]
  $region57: #{tpu_custom_call.1} parent=0
    _
  %s7 = ssub.s32 1, %s5
  %s8 = scalar_select 0, %s7, %s5
  $region1: #{tpu_custom_call.1} parent=0
    #allocation2 [shape = 'u8[253952]{0}', space=vmem, size = 0x3e000, scoped, tag = 'input window, operand 2, single buffered']
    #allocation3 [shape = 's32[2]{0}', space=sflag, size = 0x8, scoped, tag = 'scoped memory for tpu_custom_call.1']
    #allocation4 [shape = 's32[2]{0}', space=sflag, size = 0x8, scoped, tag = 'scoped memory for tpu_custom_call.1']
    #allocation5 [shape = 'u8[196608]{0}', space=vmem, size = 0x30000, scoped, tag = 'input window, operand 3, single buffered']
    #allocation6 [shape = 's32[1]{0}', space=sflag, size = 0x4, scoped, tag = 'scoped memory for tpu_custom_call.1']
    #allocation7 [shape = 'u8[1024]{0}', space=vmem, size = 0x400, scoped, tag = 'output window, operand 0']
    %9 = vsyncpa [#allocation3], 0
    %10 = vsyncpa [#allocation6], 0
    %11 = vsyncpa [#allocation4], 0
    %s12 = scalar_lea.sflag [#allocation4], 1
    %13 = vsyncpa %s12, 0
    loop: start=0, step=1, limit=6
    $region2: #{tpu_custom_call.1} parent=1 // loop_pre_header
      _
    $region3: #{tpu_custom_call.1} parent=1 // loop_header
      %s15 = sphi 0, %s19
      %p16 = scmp.ge.s32.totalorder %s15, 6
      %s25 = sphi 0, %s27
      %s28 = sphi 0, %s25
      %s29 = sphi 0, %s28
      %s45 = sphi 0, %s29
      %s51 = sphi 0, %s53
      %s54 = sphi 0, %s51
      %s55 = sphi 0, %s54
      %s71 = sphi 0, %s55
      %s75 = sphi 0, %s75
      %s77 = sphi 0, %s75
      %s78 = sphi 0, %s77
      %s92 = sphi 0, %s78
      %s96 = sphi 0, %s96
      %s98 = sphi 0, %s96
      %s99 = sphi 0, %s98
      %s113 = sphi 0, %s99
      %s119 = sphi 0, %s121
      %s122 = sphi 0, %s119
      %s123 = sphi 0, %s122
      %s139 = sphi 0, %s123
    $region4: #{tpu_custom_call.1} parent=1 // loop_header_branch
      %18 = sbr.rel (%p16) target = $region8
    $region5: #{tpu_custom_call.1} parent=1 // loop_body
      %s20 = ssub.s32 %s15, 1
      %s21 = ssub.s32 %s15, 2
      %s22 = sadd.s32 %s15, 1
      %s23 = ssub.s32 %s15, %s22
      %p24 = scmp.eq.s32.totalorder %s23, 0
      %s26 = sadd.s32 %s25, 1
      %s27 = scalar_select %p24, %s25, %s26
      %p30 = pneg %p24
      %p31 = scmp.eq.s32.totalorder %s15, 3
      %p32 = por %p30, %p31
      %p33 = scmp.ne.s32.totalorder %s25, %s28
      %p34 = scmp.eq.s32.totalorder %s15, 0
      %p35 = por %p33, %p34
      %p36 = scmp.ne.s32.totalorder %s25, %s28
      %p37 = scmp.eq.s32.totalorder %s20, 3
      %p38 = por %p36, %p37
      %p39 = scmp.ne.s32.totalorder %s28, %s29
      %p40 = scmp.eq.s32.totalorder %s20, 0
      %p41 = por %p39, %p40
      %p42 = scmp.ne.s32.totalorder %s28, %s29
      %p43 = scmp.eq.s32.totalorder %s21, 3
      %p44 = por %p42, %p43
      %p46 = scmp.ne.s32.totalorder %s29, %s45
      %p47 = scmp.eq.s32.totalorder %s21, 0
      %p48 = por %p46, %p47
      %s49 = ssub.s32 %s15, %s22
      %p50 = scmp.eq.s32.totalorder %s49, 0
      %s52 = sadd.s32 %s51, 1
      %s53 = scalar_select %p50, %s51, %s52
      %p56 = pneg %p50
      %p57 = scmp.eq.s32.totalorder %s15, 3
      %p58 = por %p56, %p57
      %p59 = scmp.ne.s32.totalorder %s51, %s54
      %p60 = scmp.eq.s32.totalorder %s15, 0
      %p61 = por %p59, %p60
      %p62 = scmp.ne.s32.totalorder %s51, %s54
      %p63 = scmp.eq.s32.totalorder %s20, 3
      %p64 = por %p62, %p63
      %p65 = scmp.ne.s32.totalorder %s54, %s55
      %p66 = scmp.eq.s32.totalorder %s20, 0
      %p67 = por %p65, %p66
      %p68 = scmp.ne.s32.totalorder %s54, %s55
      %p69 = scmp.eq.s32.totalorder %s21, 3
      %p70 = por %p68, %p69
      %p72 = scmp.ne.s32.totalorder %s55, %s71
      %p73 = scmp.eq.s32.totalorder %s21, 0
      %p74 = por %p72, %p73
      %s76 = sadd.s32 %s75, 1
      %p79 = scmp.eq.s32.totalorder %s15, 3
      %p80 = scmp.ne.s32.totalorder %s75, %s77
      %p81 = scmp.eq.s32.totalorder %s15, 0
      %p82 = por %p80, %p81
      %p83 = scmp.ne.s32.totalorder %s75, %s77
      %p84 = scmp.eq.s32.totalorder %s20, 3
      %p85 = por %p83, %p84
      %p86 = scmp.ne.s32.totalorder %s77, %s78
      %p87 = scmp.eq.s32.totalorder %s20, 0
      %p88 = por %p86, %p87
      %p89 = scmp.ne.s32.totalorder %s77, %s78
      %p90 = scmp.eq.s32.totalorder %s21, 3
      %p91 = por %p89, %p90
      %p93 = scmp.ne.s32.totalorder %s78, %s92
      %p94 = scmp.eq.s32.totalorder %s21, 0
      %p95 = por %p93, %p94
      %s97 = sadd.s32 %s96, 1
      %p100 = scmp.eq.s32.totalorder %s15, 3
      %p101 = scmp.ne.s32.totalorder %s96, %s98
      %p102 = scmp.eq.s32.totalorder %s15, 0
      %p103 = por %p101, %p102
      %p104 = scmp.ne.s32.totalorder %s96, %s98
      %p105 = scmp.eq.s32.totalorder %s20, 3
      %p106 = por %p104, %p105
      %p107 = scmp.ne.s32.totalorder %s98, %s99
      %p108 = scmp.eq.s32.totalorder %s20, 0
      %p109 = por %p107, %p108
      %p110 = scmp.ne.s32.totalorder %s98, %s99
      %p111 = scmp.eq.s32.totalorder %s21, 3
      %p112 = por %p110, %p111
      %p114 = scmp.ne.s32.totalorder %s99, %s113
      %p115 = scmp.eq.s32.totalorder %s21, 0
      %p116 = por %p114, %p115
      %s117 = ssub.s32 %s15, %s22
      %p118 = scmp.eq.s32.totalorder %s117, 0
      %s120 = sadd.s32 %s119, 1
      %s121 = scalar_select %p118, %s119, %s120
      %p124 = pneg %p118
      %p125 = scmp.eq.s32.totalorder %s15, 3
      %p126 = por %p124, %p125
      %p127 = scmp.ne.s32.totalorder %s119, %s122
      %p128 = scmp.eq.s32.totalorder %s15, 0
      %p129 = por %p127, %p128
      %p130 = scmp.ne.s32.totalorder %s119, %s122
      %p131 = scmp.eq.s32.totalorder %s20, 3
      %p132 = por %p130, %p131
      %p133 = scmp.ne.s32.totalorder %s122, %s123
      %p134 = scmp.eq.s32.totalorder %s20, 0
      %p135 = por %p133, %p134
      %p136 = scmp.ne.s32.totalorder %s122, %s123
      %p137 = scmp.eq.s32.totalorder %s21, 3
      %p138 = por %p136, %p137
      %p140 = scmp.ne.s32.totalorder %s123, %s139
      %p141 = scmp.eq.s32.totalorder %s21, 0
      %p142 = por %p140, %p141
      %p143 = scmp.le.s32.totalorder 1, %s15
      %p144 = scmp.lt.s32.totalorder %s15, 5
      %p145 = pnand %p143, %p144
      %p146 = pneg %p145
      // Predicated region
      $region9: #{tpu_custom_call.1} parent=5 // pred_check
        _
      $region10: #{tpu_custom_call.1} parent=5 // pred_check_branch
        %148 = sbr.rel (%p145) target = $region12
      $region11: #{tpu_custom_call.1} parent=5 // pred_region
        %s149 = ssub.s32 %s15, 1
        // Predicated region
        $region13: #{tpu_custom_call.1} parent=11 // pred_check
          %p150 = pneg %p88
        $region14: #{tpu_custom_call.1} parent=11 // pred_check_branch
          %152 = sbr.rel (%p150) target = $region16
        $region15: #{tpu_custom_call.1} parent=11 // pred_region
          %s154 = ssub.s32 7936, 7936
          %155 = vsyncadd [#allocation3], %s154
          %s156 = sshll.u32 [#allocation2], 4
          %s157 = int_to_ptr.vmem [resolvable:$true] %s156
          %162 = dma.hbm_to_vmem [thread:$0]  %s2, 7936, %s157, [#allocation3], 256, 256, 16
        $region16: #{tpu_custom_call.1} parent=11 // pred_fallthru
          _
        // Predicated region
        $region17: #{tpu_custom_call.1} parent=11 // pred_check
          %p163 = pneg %p109
        $region18: #{tpu_custom_call.1} parent=11 // pred_check_branch
          %165 = sbr.rel (%p163) target = $region20
        $region19: #{tpu_custom_call.1} parent=11 // pred_region
          %s167 = ssub.s32 6144, 6144
          %168 = vsyncadd [#allocation6], %s167
          %s169 = sshll.u32 [#allocation5], 4
          %s170 = int_to_ptr.vmem [resolvable:$true] %s169
          %175 = dma.hbm_to_vmem [thread:$0]  %s3, 6144, %s170, [#allocation6], 128, 128, 8
        $region20: #{tpu_custom_call.1} parent=11 // pred_fallthru
          _
      $region12: #{tpu_custom_call.1} parent=5 // pred_fallthru
        _
      %p176 = scmp.lt.s32.totalorder %s15, 4
      // Predicated region
      $region21: #{tpu_custom_call.1} parent=5 // pred_check
        %p177 = pneg %p176
      $region22: #{tpu_custom_call.1} parent=5 // pred_check_branch
        %179 = sbr.rel (%p177) target = $region24
      $region23: #{tpu_custom_call.1} parent=5 // pred_region
        // Predicated region
        $region25: #{tpu_custom_call.1} parent=23 // pred_check
          %p180 = pneg %p35
        $region26: #{tpu_custom_call.1} parent=23 // pred_check_branch
          %182 = sbr.rel (%p180) target = $region28
        $region27: #{tpu_custom_call.1} parent=23 // pred_region
          %p183 = scmp.lt.s32.totalorder %s15, 3
          %s184 = scalar_select %p183, %s15, 3
          %s185 = smul.addr %s184, 8
          %s186 = scalar_lea.vmem %s0, %s185
        $region28: #{tpu_custom_call.1} parent=23 // pred_fallthru
          _
        // Predicated region
        $region29: #{tpu_custom_call.1} parent=23 // pred_check
          %p187 = pneg %p61
        $region30: #{tpu_custom_call.1} parent=23 // pred_check_branch
          %189 = sbr.rel (%p187) target = $region32
        $region31: #{tpu_custom_call.1} parent=23 // pred_region
          %p190 = scmp.lt.s32.totalorder %s15, 3
          %s191 = scalar_select %p190, %s15, 3
          %s192 = smul.addr %s191, 8
          %s193 = scalar_lea.vmem %s1, %s192
        $region32: #{tpu_custom_call.1} parent=23 // pred_fallthru
          _
      $region24: #{tpu_custom_call.1} parent=5 // pred_fallthru
        _
      %p194 = scmp.le.s32.totalorder 1, %s15
      %p195 = scmp.lt.s32.totalorder %s15, 5
      %p196 = pnand %p194, %p195
      %p197 = pneg %p196
      // Predicated region
      $region33: #{tpu_custom_call.1} parent=5 // pred_check
        _
      $region34: #{tpu_custom_call.1} parent=5 // pred_check_branch
        %199 = sbr.rel (%p196) target = $region36
      $region35: #{tpu_custom_call.1} parent=5 // pred_region
        %s200 = ssub.s32 %s15, 1
        // Predicated region
        $region37: #{tpu_custom_call.1} parent=35 // pred_check
          %p201 = pneg %p88
        $region38: #{tpu_custom_call.1} parent=35 // pred_check_branch
          %203 = sbr.rel (%p201) target = $region40
        $region39: #{tpu_custom_call.1} parent=35 // pred_region
          %204 = dma.done [#allocation3], 7936
        $region40: #{tpu_custom_call.1} parent=35 // pred_fallthru
          _
        // Predicated region
        $region41: #{tpu_custom_call.1} parent=35 // pred_check
          %p205 = pneg %p109
        $region42: #{tpu_custom_call.1} parent=35 // pred_check_branch
          %207 = sbr.rel (%p205) target = $region44
        $region43: #{tpu_custom_call.1} parent=35 // pred_region
          %208 = dma.done [#allocation6], 6144
        $region44: #{tpu_custom_call.1} parent=35 // pred_fallthru
          _
        %p209 = scmp.lt.s32.totalorder %s20, 3
        %s210 = scalar_select %p209, %s20, 3
        %s211 = smul.addr %s210, 8
        %s212 = scalar_lea.vmem %s0, %s211
        %p213 = pneg %p41
        %p214 = pneg %p38
        %p215 = scmp.lt.s32.totalorder %s20, 3
        %s216 = scalar_select %p215, %s20, 3
        %s217 = smul.addr %s216, 8
        %s218 = scalar_lea.vmem %s1, %s217
        %p219 = pneg %p67
        %p220 = pneg %p64
        %p221 = pneg %p88
        %p222 = pneg %p85
        %p223 = pneg %p109
        %p224 = pneg %p106
        %p225 = pneg %p135
        %p226 = pneg %p132
        %s227 = sand.u32 %s122, 1
        %s228 = scalar_lea.sflag [#allocation4], %s227
        %s229 = sand.u32 %s122, 1
        %s230 = scalar_lea.vmem [#allocation7], %s229
        %p231 = scmp.lt.s32.totalorder %s20, 3
        %s232 = scalar_select %p231, %s20, 3
        %s233 = smul.addr %s232, 8
        %s234 = scalar_lea.vmem %s0, %s233
        %p235 = scmp.lt.s32.totalorder %s20, 3
        %s236 = scalar_select %p235, %s20, 3
        %s237 = smul.addr %s236, 8
        %s238 = scalar_lea.vmem %s1, %s237
        %v239 = vld [vmem:[%s234] sm:$0xff]
        %v240 = vld [vmem:[%s238] sm:$0xff]
        %241 = vxpose.xlu0.b32.start [1/16] %v240, 128
        %242 = vxpose.xlu0.b32.cont [2/16] 0.0, 128
        %243 = vxpose.xlu0.b32.cont [3/16] 0.0, 128
        %244 = vxpose.xlu0.b32.cont [4/16] 0.0, 128
        %245 = vxpose.xlu0.b32.cont [5/16] 0.0, 128
        %246 = vxpose.xlu0.b32.cont [6/16] 0.0, 128
        %247 = vxpose.xlu0.b32.cont [7/16] 0.0, 128
        %248 = vxpose.xlu0.b32.cont [8/16] 0.0, 128
        %249 = vxpose.xlu0.b32.cont [9/16] 0.0, 128
        %250 = vxpose.xlu0.b32.cont [10/16] 0.0, 128
        %251 = vxpose.xlu0.b32.cont [11/16] 0.0, 128
        %252 = vxpose.xlu0.b32.cont [12/16] 0.0, 128
        %253 = vxpose.xlu0.b32.cont [13/16] 0.0, 128
        %254 = vxpose.xlu0.b32.cont [14/16] 0.0, 128
        %255 = vxpose.xlu0.b32.cont [15/16] 0.0, 128
        %256 = vxpose.xlu0.b32.end [16/16] 0.0, 128
        %v257 = vpop.trf.xlu0
        %v258 = vpop.trf.xlu0
        %v259 = vpop.trf.xlu0
        %v260 = vpop.trf.xlu0
        %v261 = vpop.trf.xlu0
        %v262 = vpop.trf.xlu0
        %v263 = vpop.trf.xlu0
        %v264 = vpop.trf.xlu0
        %v265 = vpop.trf.xlu0
        %v266 = vpop.trf.xlu0
        %v267 = vpop.trf.xlu0
        %v268 = vpop.trf.xlu0
        %v269 = vpop.trf.xlu0
        %v270 = vpop.trf.xlu0
        %v271 = vpop.trf.xlu0
        %v272 = vpop.trf.xlu0
        %274 = vset.pattern.permute.xlu0 0
        %275 = vperm.xlu0 %274, %v240
        %v276 = vpop.permute.xlu0 %275
        %v278 = vlaneseq
        %v279 = vshrl.u32 %v278, 7
        %v280 = vsub.s32 0, %v279
        %v281 = vrot.slane %v257, %v280
        %v282 = vsub.f32 %v276, %v281
        %v283 = vmul.f32 %v282, %v282
        %v284 = vadd.f32 %v283, 0.0
        %285 = vset.pattern.permute.xlu0 1
        %286 = vperm.xlu0 %285, %v240
        %v287 = vpop.permute.xlu0 %286
        %v289 = vlaneseq
        %v290 = vshrl.u32 %v289, 7
        %v291 = vsub.s32 1, %v290
        %v292 = vrot.slane %v257, %v291
        %v293 = vsub.f32 %v287, %v292
        %v294 = vmul.f32 %v293, %v293
        %v295 = vadd.f32 %v284, %v294
        %296 = vset.pattern.permute.xlu0 2
        %297 = vperm.xlu0 %296, %v240
        %v298 = vpop.permute.xlu0 %297
        %v300 = vlaneseq
        %v301 = vshrl.u32 %v300, 7
        %v302 = vsub.s32 2, %v301
        %v303 = vrot.slane %v257, %v302
        %v304 = vsub.f32 %v298, %v303
        %v305 = vmul.f32 %v304, %v304
        %v306 = vadd.f32 %v295, %v305
        %v307 = vlaneseq
        %v308 = vand.u32 %v307, 127
        %vm309 = vcmask 64512
        %v310 = vsel %vm309, %v306, inf
        %311 = vmin.xlane.f32.xlu0 %v310
        %v312 = vpop.xlane.xlu0 %311
        %vm313 = vcmp.le.f32.partialorder %v306, %v312
        %v314 = vsel %vm313, %v308, 8
        %v315 = vsel %vm309, %v314, 2147483647
        %v316 = vand.u32 %v315, 65535
        %v317 = vshra.s32 %v315, 16
        %v318 = vcvt.s32.f32 %v316
        %v319 = vcvt.s32.f32 %v317
        %320 = vmin.xlane.f32.xlu0 %v319
        %v321 = vpop.xlane.xlu0 %320
        %vm322 = vcmp.eq.f32.partialorder %v319, %v321
        %v323 = vsel %vm322, %v318, inf
        %324 = vmin.xlane.f32.xlu0 %v323
        %v325 = vpop.xlane.xlu0 %324
        %v326 = vcvt.f32.s32 %v325
        %v327 = vcvt.f32.s32 %v321
        %v328 = vshll.u32 %v327, 16
        %v329 = vadd.s32 %v328, %v326
        %vm330 = vcmp.eq.s32.totalorder %v308, %v329
        %v331 = vsel %vm330, 1, 0
        %v332 = vcvt.s32.f32 %v331
        %v333 = vmul.f32 %v332, %v306
        %v334 = vsel %vm309, %v333, 0.0
        %335 = vadd.xlane.f32.xlu0 %v334
        %v336 = vpop.xlane.xlu0 %335
        %v337 = vmul.f32 %v332, 1e+30
        %v338 = vadd.f32 %v306, %v337
        %v339 = vsel %vm309, %v338, inf
        %340 = vmin.xlane.f32.xlu0 %v339
        %v341 = vpop.xlane.xlu0 %340
        %vm342 = vcmp.le.f32.partialorder %v338, %v341
        %v343 = vsel %vm342, %v308, 8
        %v344 = vsel %vm309, %v343, 2147483647
        %v345 = vand.u32 %v344, 65535
        %v346 = vshra.s32 %v344, 16
        %v347 = vcvt.s32.f32 %v345
        %v348 = vcvt.s32.f32 %v346
        %349 = vmin.xlane.f32.xlu0 %v348
        %v350 = vpop.xlane.xlu0 %349
        %vm351 = vcmp.eq.f32.partialorder %v348, %v350
        %v352 = vsel %vm351, %v347, inf
        %353 = vmin.xlane.f32.xlu0 %v352
        %v354 = vpop.xlane.xlu0 %353
        %v355 = vcvt.f32.s32 %v354
        %v356 = vcvt.f32.s32 %v350
        %v357 = vshll.u32 %v356, 16
        %v358 = vadd.s32 %v357, %v355
        %vm359 = vcmp.eq.s32.totalorder %v308, %v358
        %v360 = vsel %vm359, 1, 0
        %v361 = vcvt.s32.f32 %v360
        %v362 = vmul.f32 %v361, %v306
        %v363 = vsel %vm309, %v362, 0.0
        %364 = vadd.xlane.f32.xlu0 %v363
        %v365 = vpop.xlane.xlu0 %364
        %v366 = vmul.f32 %v361, 1e+30
        %v367 = vadd.f32 %v338, %v366
        %v368 = vsel %vm309, %v367, inf
        %369 = vmin.xlane.f32.xlu0 %v368
        %v370 = vpop.xlane.xlu0 %369
        %vm371 = vcmp.le.f32.partialorder %v367, %v370
        %v372 = vsel %vm371, %v308, 8
        %v373 = vsel %vm309, %v372, 2147483647
        %v374 = vand.u32 %v373, 65535
        %v375 = vshra.s32 %v373, 16
        %v376 = vcvt.s32.f32 %v374
        %v377 = vcvt.s32.f32 %v375
        %378 = vmin.xlane.f32.xlu0 %v377
        %v379 = vpop.xlane.xlu0 %378
        %vm380 = vcmp.eq.f32.partialorder %v377, %v379
        %v381 = vsel %vm380, %v376, inf
        %382 = vmin.xlane.f32.xlu0 %v381
        %v383 = vpop.xlane.xlu0 %382
        %v384 = vcvt.f32.s32 %v383
        %v385 = vcvt.f32.s32 %v379
        %v386 = vshll.u32 %v385, 16
        %v387 = vadd.s32 %v386, %v384
        %vm388 = vcmp.eq.s32.totalorder %v308, %v387
        %v389 = vsel %vm388, 1, 0
        %v390 = vcvt.s32.f32 %v389
        %v391 = vmul.f32 %v390, %v306
        %v392 = vsel %vm309, %v391, 0.0
        %393 = vadd.xlane.f32.xlu0 %v392
        %v394 = vpop.xlane.xlu0 %393
        %v395 = vld [vmem:[#allocation2 + $0x10] sm:$0xff]
        %v396 = vld [vmem:[#allocation2 + $0x18] sm:$0xff]
        %v397 = vld [vmem:[#allocation2 + $0x20] sm:$0xff]
        %v398 = vld [vmem:[#allocation2 + $0x28] sm:$0xff]
        %v399 = vld [vmem:[#allocation2 + $0x30] sm:$0xff]
        %v400 = vld [vmem:[#allocation2 + $0x38] sm:$0xff]
        %v401 = vld [vmem:[#allocation2 + $0x40] sm:$0xff]
        %v402 = vld [vmem:[#allocation2 + $0x48] sm:$0xff]
        %s403 = scalar_lea.vmem [#allocation2], 1
        %v404 = vld [vmem:[%s403] ss:$8 sm:$0x3]
        %v406 = vlaneseq
        %v407 = vshrl.u32 %v406, 7
        %v408 = vsub.s32 0, %v407
        %v409 = vrot.slane %v404, %v408
        %v410 = vlaneseq
        %v411 = vshrl.u32 %v410, 7
        %v412 = vsub.s32 1, %v411
        %v413 = vrot.slane %v404, %v412
        %vm416 = vcmask 261120
        %v418 = vsel %vm416, %v239, 0
        %420 = vmatprep.subr.mxu0 %v396
        %421 = vmatpush1.msra.mxu0 %v395
        %422 = vmatprep.subr.mxu0 %v398
        %423 = vmatpush1.msra.mxu0 %v397
        %424 = vmatprep.subr.mxu0 %v400
        %425 = vmatpush1.msra.mxu0 %v399
        %426 = vmatprep.subr.mxu0 %v402
        %427 = vmatpush1.msra.mxu0 %v401
        %428 = vmatprep.subr.mxu0 0.0
        %429 = vmatpush1.msra.mxu0 0.0
        %430 = vmatprep.subr.mxu0 0.0
        %431 = vmatpush1.msra.mxu0 0.0
        %432 = vmatprep.subr.mxu0 0.0
        %433 = vmatpush1.msra.mxu0 0.0
        %434 = vmatprep.subr.mxu0 0.0
        %435 = vmatpush1.msra.mxu0 0.0
        %436 = vmatprep.subr.mxu0 0.0
        %437 = vmatpush1.msra.mxu0 0.0
        %438 = vmatprep.subr.mxu0 0.0
        %439 = vmatpush1.msra.mxu0 0.0
        %440 = vmatprep.subr.mxu0 0.0
        %441 = vmatpush1.msra.mxu0 0.0
        %442 = vmatprep.subr.mxu0 0.0
        %443 = vmatpush1.msra.mxu0 0.0
        %444 = vmatprep.subr.mxu0 0.0
        %445 = vmatpush1.msra.mxu0 0.0
        %446 = vmatprep.subr.mxu0 0.0
        %447 = vmatpush1.msra.mxu0 0.0
        %448 = vmatprep.subr.mxu0 0.0
        %449 = vmatpush1.msra.mxu0 0.0
        %450 = vmatprep.subr.mxu0 0.0
        %451 = vmatpush1.msra.mxu0 0.0
        %452 = vmatprep.subr.mxu0 0.0
        %453 = vmatpush1.msra.mxu0 0.0
        %454 = vmatprep.subr.mxu0 0.0
        %455 = vmatpush1.msra.mxu0 0.0
        %456 = vmatprep.subr.mxu0 0.0
        %457 = vmatpush1.msra.mxu0 0.0
        %458 = vmatprep.subr.mxu0 0.0
        %459 = vmatpush1.msra.mxu0 0.0
        %460 = vmatprep.subr.mxu0 0.0
        %461 = vmatpush1.msra.mxu0 0.0
        %462 = vmatprep.subr.mxu0 0.0
        %463 = vmatpush1.msra.mxu0 0.0
        %464 = vmatprep.subr.mxu0 0.0
        %465 = vmatpush1.msra.mxu0 0.0
        %466 = vmatprep.subr.mxu0 0.0
        %467 = vmatpush1.msra.mxu0 0.0
        %468 = vmatprep.subr.mxu0 0.0
        %469 = vmatpush1.msra.mxu0 0.0
        %470 = vmatprep.subr.mxu0 0.0
        %471 = vmatpush1.msra.mxu0 0.0
        %472 = vmatprep.subr.mxu0 0.0
        %473 = vmatpush1.msra.mxu0 0.0
        %474 = vmatprep.subr.mxu0 0.0
        %475 = vmatpush1.msra.mxu0 0.0
        %476 = vmatprep.subr.mxu0 0.0
        %477 = vmatpush1.msra.mxu0 0.0
        %478 = vmatprep.subr.mxu0 0.0
        %479 = vmatpush1.msra.mxu0 0.0
        %480 = vmatprep.subr.mxu0 0.0
        %481 = vmatpush1.msra.mxu0 0.0
        %482 = vmatprep.subr.mxu0 0.0
        %483 = vmatpush1.msra.mxu0 0.0
        %484 = vmatprep.mubr.f32.mxu0 0.0
        %485 = vmatmul.mubr.f32.gmra.mrb[0].mxu0 %v418
        %v486 = vpop.f32.mrb[0].mxu0
        %v487 = vadd.f32 %v409, %v486
        %v488 = vpop.f32.mrb[0].mxu0
        %v489 = vadd.f32 %v413, %v488
        %490 = vdwg.mxu0
        %v492 = vsel %vm309, %v332, 0
        %v495 = vsel %vm309, %v361, 0
        %v498 = vsel %vm309, %v390, 0
        %500 = vmatprep.subr.mxu0 0.0
        %501 = vmatpush1.msra.mxu0 %v239
        %502 = vmatprep.subr.mxu0 0.0
        %503 = vmatpush1.msra.mxu0 0.0
        %504 = vmatprep.subr.mxu0 0.0
        %505 = vmatpush1.msra.mxu0 0.0
        %506 = vmatprep.subr.mxu0 0.0
        %507 = vmatpush1.msra.mxu0 0.0
        %508 = vmatprep.subr.mxu0 0.0
        %509 = vmatpush1.msra.mxu0 0.0
        %510 = vmatprep.subr.mxu0 0.0
        %511 = vmatpush1.msra.mxu0 0.0
        %512 = vmatprep.subr.mxu0 0.0
        %513 = vmatpush1.msra.mxu0 0.0
        %514 = vmatprep.subr.mxu0 0.0
        %515 = vmatpush1.msra.mxu0 0.0
        %516 = vmatprep.subr.mxu0 0.0
        %517 = vmatpush1.msra.mxu0 0.0
        %518 = vmatprep.subr.mxu0 0.0
        %519 = vmatpush1.msra.mxu0 0.0
        %520 = vmatprep.subr.mxu0 0.0
        %521 = vmatpush1.msra.mxu0 0.0
        %522 = vmatprep.subr.mxu0 0.0
        %523 = vmatpush1.msra.mxu0 0.0
        %524 = vmatprep.subr.mxu0 0.0
        %525 = vmatpush1.msra.mxu0 0.0
        %526 = vmatprep.subr.mxu0 0.0
        %527 = vmatpush1.msra.mxu0 0.0
        %528 = vmatprep.subr.mxu0 0.0
        %529 = vmatpush1.msra.mxu0 0.0
        %530 = vmatprep.subr.mxu0 0.0
        %531 = vmatpush1.msra.mxu0 0.0
        %532 = vmatprep.subr.mxu0 0.0
        %533 = vmatpush1.msra.mxu0 0.0
        %534 = vmatprep.subr.mxu0 0.0
        %535 = vmatpush1.msra.mxu0 0.0
        %536 = vmatprep.subr.mxu0 0.0
        %537 = vmatpush1.msra.mxu0 0.0
        %538 = vmatprep.subr.mxu0 0.0
        %539 = vmatpush1.msra.mxu0 0.0
        %540 = vmatprep.subr.mxu0 0.0
        %541 = vmatpush1.msra.mxu0 0.0
        %542 = vmatprep.subr.mxu0 0.0
        %543 = vmatpush1.msra.mxu0 0.0
        %544 = vmatprep.subr.mxu0 0.0
        %545 = vmatpush1.msra.mxu0 0.0
        %546 = vmatprep.subr.mxu0 0.0
        %547 = vmatpush1.msra.mxu0 0.0
        %548 = vmatprep.subr.mxu0 0.0
        %549 = vmatpush1.msra.mxu0 0.0
        %550 = vmatprep.subr.mxu0 0.0
        %551 = vmatpush1.msra.mxu0 0.0
        %552 = vmatprep.subr.mxu0 0.0
        %553 = vmatpush1.msra.mxu0 0.0
        %554 = vmatprep.subr.mxu0 0.0
        %555 = vmatpush1.msra.mxu0 0.0
        %556 = vmatprep.subr.mxu0 0.0
        %557 = vmatpush1.msra.mxu0 0.0
        %558 = vmatprep.subr.mxu0 0.0
        %559 = vmatpush1.msra.mxu0 0.0
        %560 = vmatprep.subr.mxu0 0.0
        %561 = vmatpush1.msra.mxu0 0.0
        %562 = vmatprep.subr.mxu0 0.0
        %563 = vmatpush1.msra.mxu0 0.0
        %564 = vmatprep.mubr.f32.mxu0 0.0
        %565 = vmatmul.mubr.f32.gmra.mrb[0].mxu0 %v492
        %v566 = vpop.f32.mrb[0].mxu0
        %v567 = vadd.f32 0.0, %v566
        %v568 = vpop.f32.mrb[0].mxu0
        %569 = vmatprep.mubr.f32.mxu0 0.0
        %570 = vmatmul.mubr.f32.gmra.mrb[0].mxu0 %v495
        %v571 = vpop.f32.mrb[0].mxu0
        %v572 = vadd.f32 0.0, %v571
        %v573 = vpop.f32.mrb[0].mxu0
        %574 = vmatprep.mubr.f32.mxu0 0.0
        %575 = vmatmul.mubr.f32.gmra.mrb[0].mxu0 %v498
        %v576 = vpop.f32.mrb[0].mxu0
        %v577 = vadd.f32 0.0, %v576
        %v578 = vpop.f32.mrb[0].mxu0
        %579 = vdwg.mxu0
        %v580 = vld [vmem:[#allocation2 + $0x50] sm:$0xff]
        %v581 = vld [vmem:[#allocation2 + $0x58] sm:$0xff]
        %v582 = vld [vmem:[#allocation2 + $0x60] sm:$0xff]
        %v583 = vld [vmem:[#allocation2 + $0x68] sm:$0xff]
        %v584 = vld [vmem:[#allocation2 + $0x70] sm:$0xff]
        %v585 = vld [vmem:[#allocation2 + $0x78] sm:$0xff]
        %v586 = vld [vmem:[#allocation2 + $0x80] sm:$0xff]
        %v587 = vld [vmem:[#allocation2 + $0x88] sm:$0xff]
        %v589 = vsel %vm416, %v567, 0
        %v592 = vsel %vm416, %v572, 0
        %v595 = vsel %vm416, %v577, 0
        %597 = vmatprep.subr.mxu0 %v581
        %598 = vmatpush1.msra.mxu0 %v580
        %599 = vmatprep.subr.mxu0 %v583
        %600 = vmatpush1.msra.mxu0 %v582
        %601 = vmatprep.subr.mxu0 %v585
        %602 = vmatpush1.msra.mxu0 %v584
        %603 = vmatprep.subr.mxu0 %v587
        %604 = vmatpush1.msra.mxu0 %v586
        %605 = vmatprep.subr.mxu0 0.0
        %606 = vmatpush1.msra.mxu0 0.0
        %607 = vmatprep.subr.mxu0 0.0
        %608 = vmatpush1.msra.mxu0 0.0
        %609 = vmatprep.subr.mxu0 0.0
        %610 = vmatpush1.msra.mxu0 0.0
        %611 = vmatprep.subr.mxu0 0.0
        %612 = vmatpush1.msra.mxu0 0.0
        %613 = vmatprep.subr.mxu0 0.0
        %614 = vmatpush1.msra.mxu0 0.0
        %615 = vmatprep.subr.mxu0 0.0
        %616 = vmatpush1.msra.mxu0 0.0
        %617 = vmatprep.subr.mxu0 0.0
        %618 = vmatpush1.msra.mxu0 0.0
        %619 = vmatprep.subr.mxu0 0.0
        %620 = vmatpush1.msra.mxu0 0.0
        %621 = vmatprep.subr.mxu0 0.0
        %622 = vmatpush1.msra.mxu0 0.0
        %623 = vmatprep.subr.mxu0 0.0
        %624 = vmatpush1.msra.mxu0 0.0
        %625 = vmatprep.subr.mxu0 0.0
        %626 = vmatpush1.msra.mxu0 0.0
        %627 = vmatprep.subr.mxu0 0.0
        %628 = vmatpush1.msra.mxu0 0.0
        %629 = vmatprep.subr.mxu0 0.0
        %630 = vmatpush1.msra.mxu0 0.0
        %631 = vmatprep.subr.mxu0 0.0
        %632 = vmatpush1.msra.mxu0 0.0
        %633 = vmatprep.subr.mxu0 0.0
        %634 = vmatpush1.msra.mxu0 0.0
        %635 = vmatprep.subr.mxu0 0.0
        %636 = vmatpush1.msra.mxu0 0.0
        %637 = vmatprep.subr.mxu0 0.0
        %638 = vmatpush1.msra.mxu0 0.0
        %639 = vmatprep.subr.mxu0 0.0
        %640 = vmatpush1.msra.mxu0 0.0
        %641 = vmatprep.subr.mxu0 0.0
        %642 = vmatpush1.msra.mxu0 0.0
        %643 = vmatprep.subr.mxu0 0.0
        %644 = vmatpush1.msra.mxu0 0.0
        %645 = vmatprep.subr.mxu0 0.0
        %646 = vmatpush1.msra.mxu0 0.0
        %647 = vmatprep.subr.mxu0 0.0
        %648 = vmatpush1.msra.mxu0 0.0
        %649 = vmatprep.subr.mxu0 0.0
        %650 = vmatpush1.msra.mxu0 0.0
        %651 = vmatprep.subr.mxu0 0.0
        %652 = vmatpush1.msra.mxu0 0.0
        %653 = vmatprep.subr.mxu0 0.0
        %654 = vmatpush1.msra.mxu0 0.0
        %655 = vmatprep.subr.mxu0 0.0
        %656 = vmatpush1.msra.mxu0 0.0
        %657 = vmatprep.subr.mxu0 0.0
        %658 = vmatpush1.msra.mxu0 0.0
        %659 = vmatprep.subr.mxu0 0.0
        %660 = vmatpush1.msra.mxu0 0.0
        %661 = vmatprep.mubr.f32.mxu0 0.0
        %662 = vmatmul.mubr.f32.gmra.mrb[0].mxu0 %v589
        %v663 = vpop.f32.mrb[0].mxu0
        %v664 = vadd.f32 0.0, %v663
        %v665 = vpop.f32.mrb[0].mxu0
        %v666 = vadd.f32 0.0, %v665
        %667 = vmatprep.mubr.f32.mxu0 0.0
        %668 = vmatmul.mubr.f32.gmra.mrb[0].mxu0 %v592
        %v669 = vpop.f32.mrb[0].mxu0
        %v670 = vadd.f32 0.0, %v669
        %v671 = vpop.f32.mrb[0].mxu0
        %v672 = vadd.f32 0.0, %v671
        %673 = vmatprep.mubr.f32.mxu0 0.0
        %674 = vmatmul.mubr.f32.gmra.mrb[0].mxu0 %v595
        %v675 = vpop.f32.mrb[0].mxu0
        %v676 = vadd.f32 0.0, %v675
        %v677 = vpop.f32.mrb[0].mxu0
        %v678 = vadd.f32 0.0, %v677
        %679 = vdwg.mxu0
        %v680 = vadd.f32 %v487, %v664
        %v681 = vadd.f32 %v489, %v666
        %v682 = vadd.f32 %v487, %v670
        %v683 = vadd.f32 %v489, %v672
        %v684 = vadd.f32 %v487, %v676
        %v685 = vadd.f32 %v489, %v678
        %v686 = vld [vmem:[#allocation2] ss:$8 sm:$0x3]
        %688 = vset.pattern.permute.xlu0 0
        %689 = vperm.xlu0 %688, %v336
        %v690 = vpop.permute.xlu0 %689
        %693 = vset.pattern.permute.xlu0 0
        %694 = vperm.xlu0 %693, %v365
        %v695 = vpop.permute.xlu0 %694
        %698 = vset.pattern.permute.xlu0 0
        %699 = vperm.xlu0 %698, %v394
        %v700 = vpop.permute.xlu0 %699
        %v703 = vlaneseq
        %v704 = vshrl.u32 %v703, 7
        %v705 = vsub.s32 0, %v704
        %v706 = vrot.slane %v686, %v705
        %v707 = vlaneseq
        %v708 = vshrl.u32 %v707, 7
        %v709 = vsub.s32 1, %v708
        %v710 = vrot.slane %v686, %v709
        %v713 = vmul.f32 %v690, %v706
        %v714 = vmul.f32 %v690, %v710
        %v715 = vmul.f32 %v695, %v706
        %v716 = vmul.f32 %v695, %v710
        %v717 = vmul.f32 %v700, %v706
        %v718 = vmul.f32 %v700, %v710
        %v719 = vadd.f32 %v680, %v713
        %v720 = vadd.f32 %v681, %v714
        %v721 = vadd.f32 %v682, %v715
        %v722 = vadd.f32 %v683, %v716
        %v723 = vadd.f32 %v684, %v717
        %v724 = vadd.f32 %v685, %v718
        %v725 = vsub.f32 0.0, %v719
        %v726 = vsub.f32 0.0, %v720
        %v727 = vsub.f32 0.0, %v721
        %v728 = vsub.f32 0.0, %v722
        %v729 = vsub.f32 0.0, %v723
        %v730 = vsub.f32 0.0, %v724
        %v731 = vmul.f32 %v725, 1.442695
        %v732 = vpow.pop %v731
        %v733 = vmul.f32 %v726, 1.442695
        %v734 = vpow.pop %v733
        %v735 = vmul.f32 %v727, 1.442695
        %v736 = vpow.pop %v735
        %v737 = vmul.f32 %v728, 1.442695
        %v738 = vpow.pop %v737
        %v739 = vmul.f32 %v729, 1.442695
        %v740 = vpow.pop %v739
        %v741 = vmul.f32 %v730, 1.442695
        %v742 = vpow.pop %v741
        %v743 = vadd.f32 %v732, 1.0
        %v744 = vadd.f32 %v734, 1.0
        %v745 = vadd.f32 %v736, 1.0
        %v746 = vadd.f32 %v738, 1.0
        %v747 = vadd.f32 %v740, 1.0
        %v748 = vadd.f32 %v742, 1.0
        %v749 = vrcp.pop %v743
        %v750 = vrcp.pop %v744
        %v751 = vrcp.pop %v745
        %v752 = vrcp.pop %v746
        %v753 = vrcp.pop %v747
        %v754 = vrcp.pop %v748
        %v755 = vmul.f32 %v719, %v749
        %v756 = vmul.f32 %v720, %v750
        %v757 = vmul.f32 %v721, %v751
        %v758 = vmul.f32 %v722, %v752
        %v759 = vmul.f32 %v723, %v753
        %v760 = vmul.f32 %v724, %v754
        %v761 = vld [vmem:[#allocation2 + $0x90] sm:$0xff]
        %v762 = vld [vmem:[#allocation2 + $0x98] sm:$0xff]
        %v763 = vld [vmem:[#allocation2 + $0xa0] sm:$0xff]
        %v764 = vld [vmem:[#allocation2 + $0xa8] sm:$0xff]
        %v765 = vld [vmem:[#allocation5 + $0x6] sm:$0x1]
        %v766 = vlaneseq
        %v767 = vshrl.u32 %v766, 7
        %v768 = vsub.s32 0, %v767
        %v769 = vrot.slane %v765, %v768
        %770 = vmatprep.subr.mxu0 %v762
        %771 = vmatpush1.xpose.msra.mxu0 %v761
        %772 = vmatprep.subr.mxu0 %v764
        %773 = vmatpush1.xpose.msra.mxu0 %v763
        %774 = vmatprep.subr.mxu0 0.0
        %775 = vmatpush1.xpose.msra.mxu0 0.0
        %776 = vmatprep.subr.mxu0 0.0
        %777 = vmatpush1.xpose.msra.mxu0 0.0
        %778 = vmatprep.subr.mxu0 0.0
        %779 = vmatpush1.xpose.msra.mxu0 0.0
        %780 = vmatprep.subr.mxu0 0.0
        %781 = vmatpush1.xpose.msra.mxu0 0.0
        %782 = vmatprep.subr.mxu0 0.0
        %783 = vmatpush1.xpose.msra.mxu0 0.0
        %784 = vmatprep.subr.mxu0 0.0
        %785 = vmatpush1.xpose.msra.mxu0 0.0
        %786 = vmatprep.subr.mxu0 0.0
        %787 = vmatpush1.xpose.msra.mxu0 0.0
        %788 = vmatprep.subr.mxu0 0.0
        %789 = vmatpush1.xpose.msra.mxu0 0.0
        %790 = vmatprep.subr.mxu0 0.0
        %791 = vmatpush1.xpose.msra.mxu0 0.0
        %792 = vmatprep.subr.mxu0 0.0
        %793 = vmatpush1.xpose.msra.mxu0 0.0
        %794 = vmatprep.subr.mxu0 0.0
        %795 = vmatpush1.xpose.msra.mxu0 0.0
        %796 = vmatprep.subr.mxu0 0.0
        %797 = vmatpush1.xpose.msra.mxu0 0.0
        %798 = vmatprep.subr.mxu0 0.0
        %799 = vmatpush1.xpose.msra.mxu0 0.0
        %800 = vmatprep.subr.mxu0 0.0
        %801 = vmatpush1.xpose.msra.mxu0 0.0
        %802 = vmatprep.subr.mxu0 0.0
        %803 = vmatpush1.xpose.msra.mxu0 0.0
        %804 = vmatprep.subr.mxu0 0.0
        %805 = vmatpush1.xpose.msra.mxu0 0.0
        %806 = vmatprep.subr.mxu0 0.0
        %807 = vmatpush1.xpose.msra.mxu0 0.0
        %808 = vmatprep.subr.mxu0 0.0
        %809 = vmatpush1.xpose.msra.mxu0 0.0
        %810 = vmatprep.subr.mxu0 0.0
        %811 = vmatpush1.xpose.msra.mxu0 0.0
        %812 = vmatprep.subr.mxu0 0.0
        %813 = vmatpush1.xpose.msra.mxu0 0.0
        %814 = vmatprep.subr.mxu0 0.0
        %815 = vmatpush1.xpose.msra.mxu0 0.0
        %816 = vmatprep.subr.mxu0 0.0
        %817 = vmatpush1.xpose.msra.mxu0 0.0
        %818 = vmatprep.subr.mxu0 0.0
        %819 = vmatpush1.xpose.msra.mxu0 0.0
        %820 = vmatprep.subr.mxu0 0.0
        %821 = vmatpush1.xpose.msra.mxu0 0.0
        %822 = vmatprep.subr.mxu0 0.0
        %823 = vmatpush1.xpose.msra.mxu0 0.0
        %824 = vmatprep.subr.mxu0 0.0
        %825 = vmatpush1.xpose.msra.mxu0 0.0
        %826 = vmatprep.subr.mxu0 0.0
        %827 = vmatpush1.xpose.msra.mxu0 0.0
        %828 = vmatprep.subr.mxu0 0.0
        %829 = vmatpush1.xpose.msra.mxu0 0.0
        %830 = vmatprep.subr.mxu0 0.0
        %831 = vmatpush1.xpose.msra.mxu0 0.0
        %832 = vmatprep.subr.mxu0 0.0
        %833 = vmatpush1.xpose.msra.mxu0 0.0
        %834 = vmatprep.mubr.f32.mxu0 %v756
        %835 = vmatmul.mubr.f32.gmra.mrb[0].mxu0 %v755
        %v836 = vpop.f32.mrb[0].mxu0
        %v837 = vadd.f32 %v769, %v836
        %v838 = vpop.f32.mrb[0].mxu0
        %839 = vmatprep.mubr.f32.mxu0 %v758
        %840 = vmatmul.mubr.f32.gmra.mrb[0].mxu0 %v757
        %v841 = vpop.f32.mrb[0].mxu0
        %v842 = vadd.f32 %v769, %v841
        %v843 = vpop.f32.mrb[0].mxu0
        %844 = vmatprep.mubr.f32.mxu0 %v760
        %845 = vmatmul.mubr.f32.gmra.mrb[0].mxu0 %v759
        %v846 = vpop.f32.mrb[0].mxu0
        %v847 = vadd.f32 %v769, %v846
        %v848 = vpop.f32.mrb[0].mxu0
        %849 = vdwg.mxu0
        %v850 = vsub.f32 0.0, %v837
        %v851 = vsub.f32 0.0, %v842
        %v852 = vsub.f32 0.0, %v847
        %v853 = vmul.f32 %v850, 1.442695
        %v854 = vpow.pop %v853
        %v855 = vmul.f32 %v851, 1.442695
        %v856 = vpow.pop %v855
        %v857 = vmul.f32 %v852, 1.442695
        %v858 = vpow.pop %v857
        %v859 = vadd.f32 %v854, 1.0
        %v860 = vadd.f32 %v856, 1.0
        %v861 = vadd.f32 %v858, 1.0
        %v862 = vrcp.pop %v859
        %v863 = vrcp.pop %v860
        %v864 = vrcp.pop %v861
        %v865 = vmul.f32 %v837, %v862
        %v866 = vmul.f32 %v842, %v863
        %v867 = vmul.f32 %v847, %v864
        %v868 = vadd.f32 %v865, %v866
        %v869 = vadd.f32 %v868, %v867
        %v870 = vld [vmem:[#allocation5 + $0x10] sm:$0xff]
        %v871 = vld [vmem:[#allocation5 + $0x18] sm:$0xff]
        %v872 = vld [vmem:[#allocation5 + $0x20] sm:$0xff]
        %v873 = vld [vmem:[#allocation5 + $0x28] sm:$0xff]
        %v874 = vld [vmem:[#allocation5 + $0x30] sm:$0xff]
        %v875 = vld [vmem:[#allocation5 + $0x38] sm:$0xff]
        %vm876 = vcmask 130048
        %v878 = vsel %vm876, %v869, 0
        %880 = vmatprep.subr.mxu0 0.0
        %881 = vmatpush1.msra.mxu0 %v874
        %882 = vmatprep.subr.mxu0 0.0
        %883 = vmatpush1.msra.mxu0 %v875
        %884 = vmatprep.subr.mxu0 0.0
        %885 = vmatpush1.msra.mxu0 0.0
        %886 = vmatprep.subr.mxu0 0.0
        %887 = vmatpush1.msra.mxu0 0.0
        %888 = vmatprep.subr.mxu0 0.0
        %889 = vmatpush1.msra.mxu0 0.0
        %890 = vmatprep.subr.mxu0 0.0
        %891 = vmatpush1.msra.mxu0 0.0
        %892 = vmatprep.subr.mxu0 0.0
        %893 = vmatpush1.msra.mxu0 0.0
        %894 = vmatprep.subr.mxu0 0.0
        %895 = vmatpush1.msra.mxu0 0.0
        %896 = vmatprep.subr.mxu0 0.0
        %897 = vmatpush1.msra.mxu0 0.0
        %898 = vmatprep.subr.mxu0 0.0
        %899 = vmatpush1.msra.mxu0 0.0
        %900 = vmatprep.subr.mxu0 0.0
        %901 = vmatpush1.msra.mxu0 0.0
        %902 = vmatprep.subr.mxu0 0.0
        %903 = vmatpush1.msra.mxu0 0.0
        %904 = vmatprep.subr.mxu0 0.0
        %905 = vmatpush1.msra.mxu0 0.0
        %906 = vmatprep.subr.mxu0 0.0
        %907 = vmatpush1.msra.mxu0 0.0
        %908 = vmatprep.subr.mxu0 0.0
        %909 = vmatpush1.msra.mxu0 0.0
        %910 = vmatprep.subr.mxu0 0.0
        %911 = vmatpush1.msra.mxu0 0.0
        %912 = vmatprep.subr.mxu0 0.0
        %913 = vmatpush1.msra.mxu0 0.0
        %914 = vmatprep.subr.mxu0 0.0
        %915 = vmatpush1.msra.mxu0 0.0
        %916 = vmatprep.subr.mxu0 0.0
        %917 = vmatpush1.msra.mxu0 0.0
        %918 = vmatprep.subr.mxu0 0.0
        %919 = vmatpush1.msra.mxu0 0.0
        %920 = vmatprep.subr.mxu0 0.0
        %921 = vmatpush1.msra.mxu0 0.0
        %922 = vmatprep.subr.mxu0 0.0
        %923 = vmatpush1.msra.mxu0 0.0
        %924 = vmatprep.subr.mxu0 0.0
        %925 = vmatpush1.msra.mxu0 0.0
        %926 = vmatprep.subr.mxu0 0.0
        %927 = vmatpush1.msra.mxu0 0.0
        %928 = vmatprep.subr.mxu0 0.0
        %929 = vmatpush1.msra.mxu0 0.0
        %930 = vmatprep.subr.mxu0 0.0
        %931 = vmatpush1.msra.mxu0 0.0
        %932 = vmatprep.subr.mxu0 0.0
        %933 = vmatpush1.msra.mxu0 0.0
        %934 = vmatprep.subr.mxu0 0.0
        %935 = vmatpush1.msra.mxu0 0.0
        %936 = vmatprep.subr.mxu0 0.0
        %937 = vmatpush1.msra.mxu0 0.0
        %938 = vmatprep.subr.mxu0 0.0
        %939 = vmatpush1.msra.mxu0 0.0
        %940 = vmatprep.subr.mxu0 0.0
        %941 = vmatpush1.msra.mxu0 0.0
        %942 = vmatprep.subr.mxu0 0.0
        %943 = vmatpush1.msra.mxu0 0.0
        %944 = vmatprep.mubr.f32.mxu0 0.0
        %945 = vmatmul.mubr.f32.gmra.mrb[0].mxu0 %v878
        %v946 = vpop.f32.mrb[0].mxu0
        %v947 = vadd.f32 0.0, %v946
        %v948 = vpop.f32.mrb[0].mxu0
        %949 = vdwg.mxu0
        %950 = vmatprep.subr.mxu0 0.0
        %951 = vmatpush1.msra.mxu0 %v870
        %952 = vmatprep.subr.mxu0 0.0
        %953 = vmatpush1.msra.mxu0 %v871
        %954 = vmatprep.subr.mxu0 0.0
        %955 = vmatpush1.msra.mxu0 %v872
        %956 = vmatprep.subr.mxu0 0.0
        %957 = vmatpush1.msra.mxu0 %v873
        %958 = vmatprep.subr.mxu0 0.0
        %959 = vmatpush1.msra.mxu0 0.0
        %960 = vmatprep.subr.mxu0 0.0
        %961 = vmatpush1.msra.mxu0 0.0
        %962 = vmatprep.subr.mxu0 0.0
        %963 = vmatpush1.msra.mxu0 0.0
        %964 = vmatprep.subr.mxu0 0.0
        %965 = vmatpush1.msra.mxu0 0.0
        %966 = vmatprep.subr.mxu0 0.0
        %967 = vmatpush1.msra.mxu0 0.0
        %968 = vmatprep.subr.mxu0 0.0
        %969 = vmatpush1.msra.mxu0 0.0
        %970 = vmatprep.subr.mxu0 0.0
        %971 = vmatpush1.msra.mxu0 0.0
        %972 = vmatprep.subr.mxu0 0.0
        %973 = vmatpush1.msra.mxu0 0.0
        %974 = vmatprep.subr.mxu0 0.0
        %975 = vmatpush1.msra.mxu0 0.0
        %976 = vmatprep.subr.mxu0 0.0
        %977 = vmatpush1.msra.mxu0 0.0
        %978 = vmatprep.subr.mxu0 0.0
        %979 = vmatpush1.msra.mxu0 0.0
        %980 = vmatprep.subr.mxu0 0.0
        %981 = vmatpush1.msra.mxu0 0.0
        %982 = vmatprep.subr.mxu0 0.0
        %983 = vmatpush1.msra.mxu0 0.0
        %984 = vmatprep.subr.mxu0 0.0
        %985 = vmatpush1.msra.mxu0 0.0
        %986 = vmatprep.subr.mxu0 0.0
        %987 = vmatpush1.msra.mxu0 0.0
        %988 = vmatprep.subr.mxu0 0.0
        %989 = vmatpush1.msra.mxu0 0.0
        %990 = vmatprep.subr.mxu0 0.0
        %991 = vmatpush1.msra.mxu0 0.0
        %992 = vmatprep.subr.mxu0 0.0
        %993 = vmatpush1.msra.mxu0 0.0
        %994 = vmatprep.subr.mxu0 0.0
        %995 = vmatpush1.msra.mxu0 0.0
        %996 = vmatprep.subr.mxu0 0.0
        %997 = vmatpush1.msra.mxu0 0.0
        %998 = vmatprep.subr.mxu0 0.0
        %999 = vmatpush1.msra.mxu0 0.0
        %1000 = vmatprep.subr.mxu0 0.0
        %1001 = vmatpush1.msra.mxu0 0.0
        %1002 = vmatprep.subr.mxu0 0.0
        %1003 = vmatpush1.msra.mxu0 0.0
        %1004 = vmatprep.subr.mxu0 0.0
        %1005 = vmatpush1.msra.mxu0 0.0
        %1006 = vmatprep.subr.mxu0 0.0
        %1007 = vmatpush1.msra.mxu0 0.0
        %1008 = vmatprep.subr.mxu0 0.0
        %1009 = vmatpush1.msra.mxu0 0.0
        %1010 = vmatprep.subr.mxu0 0.0
        %1011 = vmatpush1.msra.mxu0 0.0
        %1012 = vmatprep.subr.mxu0 0.0
        %1013 = vmatpush1.msra.mxu0 0.0
        %1014 = vmatprep.mubr.f32.mxu0 0.0
        %1015 = vmatmul.mubr.f32.gmra.mrb[0].mxu0 %v418
        %v1016 = vpop.f32.mrb[0].mxu0
        %v1017 = vadd.f32 %v947, %v1016
        %v1018 = vpop.f32.mrb[0].mxu0
        %1019 = vdwg.mxu0
        %v1020 = vld [vmem:[#allocation5] sm:$0x1]
        %v1021 = vlaneseq
        %v1022 = vshrl.u32 %v1021, 7
        %v1023 = vsub.s32 0, %v1022
        %v1024 = vrot.slane %v1020, %v1023
        %v1025 = vadd.f32 %v1017, %v1024
        %v1026 = vsub.f32 0.0, %v1025
        %v1027 = vmul.f32 %v1026, 1.442695
        %v1028 = vpow.pop %v1027
        %v1029 = vadd.f32 %v1028, 1.0
        %v1030 = vrcp.pop %v1029
        %v1031 = vmul.f32 %v1025, %v1030
        %v1032 = vld [vmem:[#allocation5 + $0x40] sm:$0xff]
        %v1033 = vld [vmem:[#allocation5 + $0x48] sm:$0xff]
        %v1034 = vld [vmem:[#allocation5 + $0x50] sm:$0xff]
        %v1035 = vld [vmem:[#allocation5 + $0x58] sm:$0xff]
        %v1036 = vld [vmem:[#allocation5 + $0x60] sm:$0xff]
        %v1037 = vld [vmem:[#allocation5 + $0x68] sm:$0xff]
        %v1038 = vld [vmem:[#allocation5 + $0x70] sm:$0xff]
        %v1039 = vld [vmem:[#allocation5 + $0x78] sm:$0xff]
        %vm1040 = vcmask 523264
        %v1042 = vsel %vm1040, %v1031, 0
        %1044 = vmatprep.subr.mxu0 0.0
        %1045 = vmatpush1.msra.mxu0 %v1032
        %1046 = vmatprep.subr.mxu0 0.0
        %1047 = vmatpush1.msra.mxu0 %v1033
        %1048 = vmatprep.subr.mxu0 0.0
        %1049 = vmatpush1.msra.mxu0 %v1034
        %1050 = vmatprep.subr.mxu0 0.0
        %1051 = vmatpush1.msra.mxu0 %v1035
        %1052 = vmatprep.subr.mxu0 0.0
        %1053 = vmatpush1.msra.mxu0 %v1036
        %1054 = vmatprep.subr.mxu0 0.0
        %1055 = vmatpush1.msra.mxu0 %v1037
        %1056 = vmatprep.subr.mxu0 0.0
        %1057 = vmatpush1.msra.mxu0 %v1038
        %1058 = vmatprep.subr.mxu0 0.0
        %1059 = vmatpush1.msra.mxu0 %v1039
        %1060 = vmatprep.subr.mxu0 0.0
        %1061 = vmatpush1.msra.mxu0 0.0
        %1062 = vmatprep.subr.mxu0 0.0
        %1063 = vmatpush1.msra.mxu0 0.0
        %1064 = vmatprep.subr.mxu0 0.0
        %1065 = vmatpush1.msra.mxu0 0.0
        %1066 = vmatprep.subr.mxu0 0.0
        %1067 = vmatpush1.msra.mxu0 0.0
        %1068 = vmatprep.subr.mxu0 0.0
        %1069 = vmatpush1.msra.mxu0 0.0
        %1070 = vmatprep.subr.mxu0 0.0
        %1071 = vmatpush1.msra.mxu0 0.0
        %1072 = vmatprep.subr.mxu0 0.0
        %1073 = vmatpush1.msra.mxu0 0.0
        %1074 = vmatprep.subr.mxu0 0.0
        %1075 = vmatpush1.msra.mxu0 0.0
        %1076 = vmatprep.subr.mxu0 0.0
        %1077 = vmatpush1.msra.mxu0 0.0
        %1078 = vmatprep.subr.mxu0 0.0
        %1079 = vmatpush1.msra.mxu0 0.0
        %1080 = vmatprep.subr.mxu0 0.0
        %1081 = vmatpush1.msra.mxu0 0.0
        %1082 = vmatprep.subr.mxu0 0.0
        %1083 = vmatpush1.msra.mxu0 0.0
        %1084 = vmatprep.subr.mxu0 0.0
        %1085 = vmatpush1.msra.mxu0 0.0
        %1086 = vmatprep.subr.mxu0 0.0
        %1087 = vmatpush1.msra.mxu0 0.0
        %1088 = vmatprep.subr.mxu0 0.0
        %1089 = vmatpush1.msra.mxu0 0.0
        %1090 = vmatprep.subr.mxu0 0.0
        %1091 = vmatpush1.msra.mxu0 0.0
        %1092 = vmatprep.subr.mxu0 0.0
        %1093 = vmatpush1.msra.mxu0 0.0
        %1094 = vmatprep.subr.mxu0 0.0
        %1095 = vmatpush1.msra.mxu0 0.0
        %1096 = vmatprep.subr.mxu0 0.0
        %1097 = vmatpush1.msra.mxu0 0.0
        %1098 = vmatprep.subr.mxu0 0.0
        %1099 = vmatpush1.msra.mxu0 0.0
        %1100 = vmatprep.subr.mxu0 0.0
        %1101 = vmatpush1.msra.mxu0 0.0
        %1102 = vmatprep.subr.mxu0 0.0
        %1103 = vmatpush1.msra.mxu0 0.0
        %1104 = vmatprep.subr.mxu0 0.0
        %1105 = vmatpush1.msra.mxu0 0.0
        %1106 = vmatprep.subr.mxu0 0.0
        %1107 = vmatpush1.msra.mxu0 0.0
        %1108 = vmatprep.mubr.f32.mxu0 0.0
        %1109 = vmatmul.mubr.f32.gmra.mrb[0].mxu0 %v1042
        %v1110 = vpop.f32.mrb[0].mxu0
        %v1111 = vadd.f32 0.0, %v1110
        %v1112 = vpop.f32.mrb[0].mxu0
        %1113 = vdwg.mxu0
        %v1114 = vadd.f32 %v239, %v1111
        %v1115 = vld [vmem:[#allocation5 + $0x3] sm:$0x1]
        %v1116 = vlaneseq
        %v1117 = vshrl.u32 %v1116, 7
        %v1118 = vsub.s32 0, %v1117
        %v1119 = vrot.slane %v1115, %v1118
        %v1120 = vadd.f32 %v1114, %v1119
        %v1121 = vld [vmem:[#allocation2 + $0xb0] sm:$0xff]
        %v1122 = vld [vmem:[#allocation2 + $0xb8] sm:$0xff]
        %v1123 = vld [vmem:[#allocation2 + $0xc0] sm:$0xff]
        %v1124 = vld [vmem:[#allocation2 + $0xc8] sm:$0xff]
        %v1125 = vld [vmem:[#allocation2 + $0xd0] sm:$0xff]
        %v1126 = vld [vmem:[#allocation2 + $0xd8] sm:$0xff]
        %v1127 = vld [vmem:[#allocation2 + $0xe0] sm:$0xff]
        %v1128 = vld [vmem:[#allocation2 + $0xe8] sm:$0xff]
        %s1129 = scalar_lea.vmem [#allocation2], 3
        %v1130 = vld [vmem:[%s1129] ss:$8 sm:$0x3]
        %v1132 = vlaneseq
        %v1133 = vshrl.u32 %v1132, 7
        %v1134 = vsub.s32 0, %v1133
        %v1135 = vrot.slane %v1130, %v1134
        %v1136 = vlaneseq
        %v1137 = vshrl.u32 %v1136, 7
        %v1138 = vsub.s32 1, %v1137
        %v1139 = vrot.slane %v1130, %v1138
        %v1143 = vsel %vm416, %v1120, 0
        %1145 = vmatprep.subr.mxu0 %v1122
        %1146 = vmatpush1.msra.mxu0 %v1121
        %1147 = vmatprep.subr.mxu0 %v1124
        %1148 = vmatpush1.msra.mxu0 %v1123
        %1149 = vmatprep.subr.mxu0 %v1126
        %1150 = vmatpush1.msra.mxu0 %v1125
        %1151 = vmatprep.subr.mxu0 %v1128
        %1152 = vmatpush1.msra.mxu0 %v1127
        %1153 = vmatprep.subr.mxu0 0.0
        %1154 = vmatpush1.msra.mxu0 0.0
        %1155 = vmatprep.subr.mxu0 0.0
        %1156 = vmatpush1.msra.mxu0 0.0
        %1157 = vmatprep.subr.mxu0 0.0
        %1158 = vmatpush1.msra.mxu0 0.0
        %1159 = vmatprep.subr.mxu0 0.0
        %1160 = vmatpush1.msra.mxu0 0.0
        %1161 = vmatprep.subr.mxu0 0.0
        %1162 = vmatpush1.msra.mxu0 0.0
        %1163 = vmatprep.subr.mxu0 0.0
        %1164 = vmatpush1.msra.mxu0 0.0
        %1165 = vmatprep.subr.mxu0 0.0
        %1166 = vmatpush1.msra.mxu0 0.0
        %1167 = vmatprep.subr.mxu0 0.0
        %1168 = vmatpush1.msra.mxu0 0.0
        %1169 = vmatprep.subr.mxu0 0.0
        %1170 = vmatpush1.msra.mxu0 0.0
        %1171 = vmatprep.subr.mxu0 0.0
        %1172 = vmatpush1.msra.mxu0 0.0
        %1173 = vmatprep.subr.mxu0 0.0
        %1174 = vmatpush1.msra.mxu0 0.0
        %1175 = vmatprep.subr.mxu0 0.0
        %1176 = vmatpush1.msra.mxu0 0.0
        %1177 = vmatprep.subr.mxu0 0.0
        %1178 = vmatpush1.msra.mxu0 0.0
        %1179 = vmatprep.subr.mxu0 0.0
        %1180 = vmatpush1.msra.mxu0 0.0
        %1181 = vmatprep.subr.mxu0 0.0
        %1182 = vmatpush1.msra.mxu0 0.0
        %1183 = vmatprep.subr.mxu0 0.0
        %1184 = vmatpush1.msra.mxu0 0.0
        %1185 = vmatprep.subr.mxu0 0.0
        %1186 = vmatpush1.msra.mxu0 0.0
        %1187 = vmatprep.subr.mxu0 0.0
        %1188 = vmatpush1.msra.mxu0 0.0
        %1189 = vmatprep.subr.mxu0 0.0
        %1190 = vmatpush1.msra.mxu0 0.0
        %1191 = vmatprep.subr.mxu0 0.0
        %1192 = vmatpush1.msra.mxu0 0.0
        %1193 = vmatprep.subr.mxu0 0.0
        %1194 = vmatpush1.msra.mxu0 0.0
        %1195 = vmatprep.subr.mxu0 0.0
        %1196 = vmatpush1.msra.mxu0 0.0
        %1197 = vmatprep.subr.mxu0 0.0
        %1198 = vmatpush1.msra.mxu0 0.0
        %1199 = vmatprep.subr.mxu0 0.0
        %1200 = vmatpush1.msra.mxu0 0.0
        %1201 = vmatprep.subr.mxu0 0.0
        %1202 = vmatpush1.msra.mxu0 0.0
        %1203 = vmatprep.subr.mxu0 0.0
        %1204 = vmatpush1.msra.mxu0 0.0
        %1205 = vmatprep.subr.mxu0 0.0
        %1206 = vmatpush1.msra.mxu0 0.0
        %1207 = vmatprep.subr.mxu0 0.0
        %1208 = vmatpush1.msra.mxu0 0.0
        %1209 = vmatprep.mubr.f32.mxu0 0.0
        %1210 = vmatmul.mubr.f32.gmra.mrb[0].mxu0 %v1143
        %v1211 = vpop.f32.mrb[0].mxu0
        %v1212 = vadd.f32 %v1135, %v1211
        %v1213 = vpop.f32.mrb[0].mxu0
        %v1214 = vadd.f32 %v1139, %v1213
        %1215 = vdwg.mxu0
        %1216 = vmatprep.subr.mxu0 0.0
        %1217 = vmatpush1.msra.mxu0 %v1120
        %1218 = vmatprep.subr.mxu0 0.0
        %1219 = vmatpush1.msra.mxu0 0.0
        %1220 = vmatprep.subr.mxu0 0.0
        %1221 = vmatpush1.msra.mxu0 0.0
        %1222 = vmatprep.subr.mxu0 0.0
        %1223 = vmatpush1.msra.mxu0 0.0
        %1224 = vmatprep.subr.mxu0 0.0
        %1225 = vmatpush1.msra.mxu0 0.0
        %1226 = vmatprep.subr.mxu0 0.0
        %1227 = vmatpush1.msra.mxu0 0.0
        %1228 = vmatprep.subr.mxu0 0.0
        %1229 = vmatpush1.msra.mxu0 0.0
        %1230 = vmatprep.subr.mxu0 0.0
        %1231 = vmatpush1.msra.mxu0 0.0
        %1232 = vmatprep.subr.mxu0 0.0
        %1233 = vmatpush1.msra.mxu0 0.0
        %1234 = vmatprep.subr.mxu0 0.0
        %1235 = vmatpush1.msra.mxu0 0.0
        %1236 = vmatprep.subr.mxu0 0.0
        %1237 = vmatpush1.msra.mxu0 0.0
        %1238 = vmatprep.subr.mxu0 0.0
        %1239 = vmatpush1.msra.mxu0 0.0
        %1240 = vmatprep.subr.mxu0 0.0
        %1241 = vmatpush1.msra.mxu0 0.0
        %1242 = vmatprep.subr.mxu0 0.0
        %1243 = vmatpush1.msra.mxu0 0.0
        %1244 = vmatprep.subr.mxu0 0.0
        %1245 = vmatpush1.msra.mxu0 0.0
        %1246 = vmatprep.subr.mxu0 0.0
        %1247 = vmatpush1.msra.mxu0 0.0
        %1248 = vmatprep.subr.mxu0 0.0
        %1249 = vmatpush1.msra.mxu0 0.0
        %1250 = vmatprep.subr.mxu0 0.0
        %1251 = vmatpush1.msra.mxu0 0.0
        %1252 = vmatprep.subr.mxu0 0.0
        %1253 = vmatpush1.msra.mxu0 0.0
        %1254 = vmatprep.subr.mxu0 0.0
        %1255 = vmatpush1.msra.mxu0 0.0
        %1256 = vmatprep.subr.mxu0 0.0
        %1257 = vmatpush1.msra.mxu0 0.0
        %1258 = vmatprep.subr.mxu0 0.0
        %1259 = vmatpush1.msra.mxu0 0.0
        %1260 = vmatprep.subr.mxu0 0.0
        %1261 = vmatpush1.msra.mxu0 0.0
        %1262 = vmatprep.subr.mxu0 0.0
        %1263 = vmatpush1.msra.mxu0 0.0
        %1264 = vmatprep.subr.mxu0 0.0
        %1265 = vmatpush1.msra.mxu0 0.0
        %1266 = vmatprep.subr.mxu0 0.0
        %1267 = vmatpush1.msra.mxu0 0.0
        %1268 = vmatprep.subr.mxu0 0.0
        %1269 = vmatpush1.msra.mxu0 0.0
        %1270 = vmatprep.subr.mxu0 0.0
        %1271 = vmatpush1.msra.mxu0 0.0
        %1272 = vmatprep.subr.mxu0 0.0
        %1273 = vmatpush1.msra.mxu0 0.0
        %1274 = vmatprep.subr.mxu0 0.0
        %1275 = vmatpush1.msra.mxu0 0.0
        %1276 = vmatprep.subr.mxu0 0.0
        %1277 = vmatpush1.msra.mxu0 0.0
        %1278 = vmatprep.subr.mxu0 0.0
        %1279 = vmatpush1.msra.mxu0 0.0
        %1280 = vmatprep.mubr.f32.mxu0 0.0
        %1281 = vmatmul.mubr.f32.gmra.mrb[0].mxu0 %v492
        %v1282 = vpop.f32.mrb[0].mxu0
        %v1283 = vadd.f32 0.0, %v1282
        %v1284 = vpop.f32.mrb[0].mxu0
        %1285 = vmatprep.mubr.f32.mxu0 0.0
        %1286 = vmatmul.mubr.f32.gmra.mrb[0].mxu0 %v495
        %v1287 = vpop.f32.mrb[0].mxu0
        %v1288 = vadd.f32 0.0, %v1287
        %v1289 = vpop.f32.mrb[0].mxu0
        %1290 = vmatprep.mubr.f32.mxu0 0.0
        %1291 = vmatmul.mubr.f32.gmra.mrb[0].mxu0 %v498
        %v1292 = vpop.f32.mrb[0].mxu0
        %v1293 = vadd.f32 0.0, %v1292
        %v1294 = vpop.f32.mrb[0].mxu0
        %1295 = vdwg.mxu0
        %v1296 = vld [vmem:[#allocation2 + $0xf0] sm:$0xff]
        %v1297 = vld [vmem:[#allocation2 + $0xf8] sm:$0xff]
        %v1298 = vld [vmem:[#allocation2 + $0x100] sm:$0xff]
        %v1299 = vld [vmem:[#allocation2 + $0x108] sm:$0xff]
        %v1300 = vld [vmem:[#allocation2 + $0x110] sm:$0xff]
        %v1301 = vld [vmem:[#allocation2 + $0x118] sm:$0xff]
        %v1302 = vld [vmem:[#allocation2 + $0x120] sm:$0xff]
        %v1303 = vld [vmem:[#allocation2 + $0x128] sm:$0xff]
        %v1305 = vsel %vm416, %v1283, 0
        %v1308 = vsel %vm416, %v1288, 0
        %v1311 = vsel %vm416, %v1293, 0
        %1313 = vmatprep.subr.mxu0 %v1297
        %1314 = vmatpush1.msra.mxu0 %v1296
        %1315 = vmatprep.subr.mxu0 %v1299
        %1316 = vmatpush1.msra.mxu0 %v1298
        %1317 = vmatprep.subr.mxu0 %v1301
        %1318 = vmatpush1.msra.mxu0 %v1300
        %1319 = vmatprep.subr.mxu0 %v1303
        %1320 = vmatpush1.msra.mxu0 %v1302
        %1321 = vmatprep.subr.mxu0 0.0
        %1322 = vmatpush1.msra.mxu0 0.0
        %1323 = vmatprep.subr.mxu0 0.0
        %1324 = vmatpush1.msra.mxu0 0.0
        %1325 = vmatprep.subr.mxu0 0.0
        %1326 = vmatpush1.msra.mxu0 0.0
        %1327 = vmatprep.subr.mxu0 0.0
        %1328 = vmatpush1.msra.mxu0 0.0
        %1329 = vmatprep.subr.mxu0 0.0
        %1330 = vmatpush1.msra.mxu0 0.0
        %1331 = vmatprep.subr.mxu0 0.0
        %1332 = vmatpush1.msra.mxu0 0.0
        %1333 = vmatprep.subr.mxu0 0.0
        %1334 = vmatpush1.msra.mxu0 0.0
        %1335 = vmatprep.subr.mxu0 0.0
        %1336 = vmatpush1.msra.mxu0 0.0
        %1337 = vmatprep.subr.mxu0 0.0
        %1338 = vmatpush1.msra.mxu0 0.0
        %1339 = vmatprep.subr.mxu0 0.0
        %1340 = vmatpush1.msra.mxu0 0.0
        %1341 = vmatprep.subr.mxu0 0.0
        %1342 = vmatpush1.msra.mxu0 0.0
        %1343 = vmatprep.subr.mxu0 0.0
        %1344 = vmatpush1.msra.mxu0 0.0
        %1345 = vmatprep.subr.mxu0 0.0
        %1346 = vmatpush1.msra.mxu0 0.0
        %1347 = vmatprep.subr.mxu0 0.0
        %1348 = vmatpush1.msra.mxu0 0.0
        %1349 = vmatprep.subr.mxu0 0.0
        %1350 = vmatpush1.msra.mxu0 0.0
        %1351 = vmatprep.subr.mxu0 0.0
        %1352 = vmatpush1.msra.mxu0 0.0
        %1353 = vmatprep.subr.mxu0 0.0
        %1354 = vmatpush1.msra.mxu0 0.0
        %1355 = vmatprep.subr.mxu0 0.0
        %1356 = vmatpush1.msra.mxu0 0.0
        %1357 = vmatprep.subr.mxu0 0.0
        %1358 = vmatpush1.msra.mxu0 0.0
        %1359 = vmatprep.subr.mxu0 0.0
        %1360 = vmatpush1.msra.mxu0 0.0
        %1361 = vmatprep.subr.mxu0 0.0
        %1362 = vmatpush1.msra.mxu0 0.0
        %1363 = vmatprep.subr.mxu0 0.0
        %1364 = vmatpush1.msra.mxu0 0.0
        %1365 = vmatprep.subr.mxu0 0.0
        %1366 = vmatpush1.msra.mxu0 0.0
        %1367 = vmatprep.subr.mxu0 0.0
        %1368 = vmatpush1.msra.mxu0 0.0
        %1369 = vmatprep.subr.mxu0 0.0
        %1370 = vmatpush1.msra.mxu0 0.0
        %1371 = vmatprep.subr.mxu0 0.0
        %1372 = vmatpush1.msra.mxu0 0.0
        %1373 = vmatprep.subr.mxu0 0.0
        %1374 = vmatpush1.msra.mxu0 0.0
        %1375 = vmatprep.subr.mxu0 0.0
        %1376 = vmatpush1.msra.mxu0 0.0
        %1377 = vmatprep.mubr.f32.mxu0 0.0
        %1378 = vmatmul.mubr.f32.gmra.mrb[0].mxu0 %v1305
        %v1379 = vpop.f32.mrb[0].mxu0
        %v1380 = vadd.f32 0.0, %v1379
        %v1381 = vpop.f32.mrb[0].mxu0
        %v1382 = vadd.f32 0.0, %v1381
        %1383 = vmatprep.mubr.f32.mxu0 0.0
        %1384 = vmatmul.mubr.f32.gmra.mrb[0].mxu0 %v1308
        %v1385 = vpop.f32.mrb[0].mxu0
        %v1386 = vadd.f32 0.0, %v1385
        %v1387 = vpop.f32.mrb[0].mxu0
        %v1388 = vadd.f32 0.0, %v1387
        %1389 = vmatprep.mubr.f32.mxu0 0.0
        %1390 = vmatmul.mubr.f32.gmra.mrb[0].mxu0 %v1311
        %v1391 = vpop.f32.mrb[0].mxu0
        %v1392 = vadd.f32 0.0, %v1391
        %v1393 = vpop.f32.mrb[0].mxu0
        %v1394 = vadd.f32 0.0, %v1393
        %1395 = vdwg.mxu0
        %v1396 = vadd.f32 %v1212, %v1380
        %v1397 = vadd.f32 %v1214, %v1382
        %v1398 = vadd.f32 %v1212, %v1386
        %v1399 = vadd.f32 %v1214, %v1388
        %v1400 = vadd.f32 %v1212, %v1392
        %v1401 = vadd.f32 %v1214, %v1394
        %s1402 = scalar_lea.vmem [#allocation2], 2
        %v1403 = vld [vmem:[%s1402] ss:$8 sm:$0x3]
        %v1405 = vlaneseq
        %v1406 = vshrl.u32 %v1405, 7
        %v1407 = vsub.s32 0, %v1406
        %v1408 = vrot.slane %v1403, %v1407
        %v1409 = vlaneseq
        %v1410 = vshrl.u32 %v1409, 7
        %v1411 = vsub.s32 1, %v1410
        %v1412 = vrot.slane %v1403, %v1411
        %v1415 = vmul.f32 %v690, %v1408
        %v1416 = vmul.f32 %v690, %v1412
        %v1417 = vmul.f32 %v695, %v1408
        %v1418 = vmul.f32 %v695, %v1412
        %v1419 = vmul.f32 %v700, %v1408
        %v1420 = vmul.f32 %v700, %v1412
        %v1421 = vadd.f32 %v1396, %v1415
        %v1422 = vadd.f32 %v1397, %v1416
        %v1423 = vadd.f32 %v1398, %v1417
        %v1424 = vadd.f32 %v1399, %v1418
        %v1425 = vadd.f32 %v1400, %v1419
        %v1426 = vadd.f32 %v1401, %v1420
        %v1427 = vsub.f32 0.0, %v1421
        %v1428 = vsub.f32 0.0, %v1422
        %v1429 = vsub.f32 0.0, %v1423
        %v1430 = vsub.f32 0.0, %v1424
        %v1431 = vsub.f32 0.0, %v1425
        %v1432 = vsub.f32 0.0, %v1426
        %v1433 = vmul.f32 %v1427, 1.442695
        %v1434 = vpow.pop %v1433
        %v1435 = vmul.f32 %v1428, 1.442695
        %v1436 = vpow.pop %v1435
        %v1437 = vmul.f32 %v1429, 1.442695
        %v1438 = vpow.pop %v1437
        %v1439 = vmul.f32 %v1430, 1.442695
        %v1440 = vpow.pop %v1439
        %v1441 = vmul.f32 %v1431, 1.442695
        %v1442 = vpow.pop %v1441
        %v1443 = vmul.f32 %v1432, 1.442695
        %v1444 = vpow.pop %v1443
        %v1445 = vadd.f32 %v1434, 1.0
        %v1446 = vadd.f32 %v1436, 1.0
        %v1447 = vadd.f32 %v1438, 1.0
        %v1448 = vadd.f32 %v1440, 1.0
        %v1449 = vadd.f32 %v1442, 1.0
        %v1450 = vadd.f32 %v1444, 1.0
        %v1451 = vrcp.pop %v1445
        %v1452 = vrcp.pop %v1446
        %v1453 = vrcp.pop %v1447
        %v1454 = vrcp.pop %v1448
        %v1455 = vrcp.pop %v1449
        %v1456 = vrcp.pop %v1450
        %v1457 = vmul.f32 %v1421, %v1451
        %v1458 = vmul.f32 %v1422, %v1452
        %v1459 = vmul.f32 %v1423, %v1453
        %v1460 = vmul.f32 %v1424, %v1454
        %v1461 = vmul.f32 %v1425, %v1455
        %v1462 = vmul.f32 %v1426, %v1456
        %v1463 = vld [vmem:[#allocation2 + $0x130] sm:$0xff]
        %v1464 = vld [vmem:[#allocation2 + $0x138] sm:$0xff]
        %v1465 = vld [vmem:[#allocation2 + $0x140] sm:$0xff]
        %v1466 = vld [vmem:[#allocation2 + $0x148] sm:$0xff]
        %v1467 = vld [vmem:[#allocation5 + $0x7] sm:$0x1]
        %v1468 = vlaneseq
        %v1469 = vshrl.u32 %v1468, 7
        %v1470 = vsub.s32 0, %v1469
        %v1471 = vrot.slane %v1467, %v1470
        %1472 = vmatprep.subr.mxu0 %v1464
        %1473 = vmatpush1.xpose.msra.mxu0 %v1463
        %1474 = vmatprep.subr.mxu0 %v1466
        %1475 = vmatpush1.xpose.msra.mxu0 %v1465
        %1476 = vmatprep.subr.mxu0 0.0
        %1477 = vmatpush1.xpose.msra.mxu0 0.0
        %1478 = vmatprep.subr.mxu0 0.0
        %1479 = vmatpush1.xpose.msra.mxu0 0.0
        %1480 = vmatprep.subr.mxu0 0.0
        %1481 = vmatpush1.xpose.msra.mxu0 0.0
        %1482 = vmatprep.subr.mxu0 0.0
        %1483 = vmatpush1.xpose.msra.mxu0 0.0
        %1484 = vmatprep.subr.mxu0 0.0
        %1485 = vmatpush1.xpose.msra.mxu0 0.0
        %1486 = vmatprep.subr.mxu0 0.0
        %1487 = vmatpush1.xpose.msra.mxu0 0.0
        %1488 = vmatprep.subr.mxu0 0.0
        %1489 = vmatpush1.xpose.msra.mxu0 0.0
        %1490 = vmatprep.subr.mxu0 0.0
        %1491 = vmatpush1.xpose.msra.mxu0 0.0
        %1492 = vmatprep.subr.mxu0 0.0
        %1493 = vmatpush1.xpose.msra.mxu0 0.0
        %1494 = vmatprep.subr.mxu0 0.0
        %1495 = vmatpush1.xpose.msra.mxu0 0.0
        %1496 = vmatprep.subr.mxu0 0.0
        %1497 = vmatpush1.xpose.msra.mxu0 0.0
        %1498 = vmatprep.subr.mxu0 0.0
        %1499 = vmatpush1.xpose.msra.mxu0 0.0
        %1500 = vmatprep.subr.mxu0 0.0
        %1501 = vmatpush1.xpose.msra.mxu0 0.0
        %1502 = vmatprep.subr.mxu0 0.0
        %1503 = vmatpush1.xpose.msra.mxu0 0.0
        %1504 = vmatprep.subr.mxu0 0.0
        %1505 = vmatpush1.xpose.msra.mxu0 0.0
        %1506 = vmatprep.subr.mxu0 0.0
        %1507 = vmatpush1.xpose.msra.mxu0 0.0
        %1508 = vmatprep.subr.mxu0 0.0
        %1509 = vmatpush1.xpose.msra.mxu0 0.0
        %1510 = vmatprep.subr.mxu0 0.0
        %1511 = vmatpush1.xpose.msra.mxu0 0.0
        %1512 = vmatprep.subr.mxu0 0.0
        %1513 = vmatpush1.xpose.msra.mxu0 0.0
        %1514 = vmatprep.subr.mxu0 0.0
        %1515 = vmatpush1.xpose.msra.mxu0 0.0
        %1516 = vmatprep.subr.mxu0 0.0
        %1517 = vmatpush1.xpose.msra.mxu0 0.0
        %1518 = vmatprep.subr.mxu0 0.0
        %1519 = vmatpush1.xpose.msra.mxu0 0.0
        %1520 = vmatprep.subr.mxu0 0.0
        %1521 = vmatpush1.xpose.msra.mxu0 0.0
        %1522 = vmatprep.subr.mxu0 0.0
        %1523 = vmatpush1.xpose.msra.mxu0 0.0
        %1524 = vmatprep.subr.mxu0 0.0
        %1525 = vmatpush1.xpose.msra.mxu0 0.0
        %1526 = vmatprep.subr.mxu0 0.0
        %1527 = vmatpush1.xpose.msra.mxu0 0.0
        %1528 = vmatprep.subr.mxu0 0.0
        %1529 = vmatpush1.xpose.msra.mxu0 0.0
        %1530 = vmatprep.subr.mxu0 0.0
        %1531 = vmatpush1.xpose.msra.mxu0 0.0
        %1532 = vmatprep.subr.mxu0 0.0
        %1533 = vmatpush1.xpose.msra.mxu0 0.0
        %1534 = vmatprep.subr.mxu0 0.0
        %1535 = vmatpush1.xpose.msra.mxu0 0.0
        %1536 = vmatprep.mubr.f32.mxu0 %v1458
        %1537 = vmatmul.mubr.f32.gmra.mrb[0].mxu0 %v1457
        %v1538 = vpop.f32.mrb[0].mxu0
        %v1539 = vadd.f32 %v1471, %v1538
        %v1540 = vpop.f32.mrb[0].mxu0
        %1541 = vmatprep.mubr.f32.mxu0 %v1460
        %1542 = vmatmul.mubr.f32.gmra.mrb[0].mxu0 %v1459
        %v1543 = vpop.f32.mrb[0].mxu0
        %v1544 = vadd.f32 %v1471, %v1543
        %v1545 = vpop.f32.mrb[0].mxu0
        %1546 = vmatprep.mubr.f32.mxu0 %v1462
        %1547 = vmatmul.mubr.f32.gmra.mrb[0].mxu0 %v1461
        %v1548 = vpop.f32.mrb[0].mxu0
        %v1549 = vadd.f32 %v1471, %v1548
        %v1550 = vpop.f32.mrb[0].mxu0
        %1551 = vdwg.mxu0
        %v1552 = vsub.f32 0.0, %v1539
        %v1553 = vsub.f32 0.0, %v1544
        %v1554 = vsub.f32 0.0, %v1549
        %v1555 = vmul.f32 %v1552, 1.442695
        %v1556 = vpow.pop %v1555
        %v1557 = vmul.f32 %v1553, 1.442695
        %v1558 = vpow.pop %v1557
        %v1559 = vmul.f32 %v1554, 1.442695
        %v1560 = vpow.pop %v1559
        %v1561 = vadd.f32 %v1556, 1.0
        %v1562 = vadd.f32 %v1558, 1.0
        %v1563 = vadd.f32 %v1560, 1.0
        %v1564 = vrcp.pop %v1561
        %v1565 = vrcp.pop %v1562
        %v1566 = vrcp.pop %v1563
        %v1567 = vmul.f32 %v1539, %v1564
        %v1568 = vmul.f32 %v1544, %v1565
        %v1569 = vmul.f32 %v1549, %v1566
        %v1570 = vadd.f32 %v1567, %v1568
        %v1571 = vadd.f32 %v1570, %v1569
        %v1572 = vld [vmem:[#allocation5 + $0x80] sm:$0xff]
        %v1573 = vld [vmem:[#allocation5 + $0x88] sm:$0xff]
        %v1574 = vld [vmem:[#allocation5 + $0x90] sm:$0xff]
        %v1575 = vld [vmem:[#allocation5 + $0x98] sm:$0xff]
        %v1576 = vld [vmem:[#allocation5 + $0xa0] sm:$0xff]
        %v1577 = vld [vmem:[#allocation5 + $0xa8] sm:$0xff]
        %v1579 = vsel %vm876, %v1571, 0
        %1581 = vmatprep.subr.mxu0 0.0
        %1582 = vmatpush1.msra.mxu0 %v1576
        %1583 = vmatprep.subr.mxu0 0.0
        %1584 = vmatpush1.msra.mxu0 %v1577
        %1585 = vmatprep.subr.mxu0 0.0
        %1586 = vmatpush1.msra.mxu0 0.0
        %1587 = vmatprep.subr.mxu0 0.0
        %1588 = vmatpush1.msra.mxu0 0.0
        %1589 = vmatprep.subr.mxu0 0.0
        %1590 = vmatpush1.msra.mxu0 0.0
        %1591 = vmatprep.subr.mxu0 0.0
        %1592 = vmatpush1.msra.mxu0 0.0
        %1593 = vmatprep.subr.mxu0 0.0
        %1594 = vmatpush1.msra.mxu0 0.0
        %1595 = vmatprep.subr.mxu0 0.0
        %1596 = vmatpush1.msra.mxu0 0.0
        %1597 = vmatprep.subr.mxu0 0.0
        %1598 = vmatpush1.msra.mxu0 0.0
        %1599 = vmatprep.subr.mxu0 0.0
        %1600 = vmatpush1.msra.mxu0 0.0
        %1601 = vmatprep.subr.mxu0 0.0
        %1602 = vmatpush1.msra.mxu0 0.0
        %1603 = vmatprep.subr.mxu0 0.0
        %1604 = vmatpush1.msra.mxu0 0.0
        %1605 = vmatprep.subr.mxu0 0.0
        %1606 = vmatpush1.msra.mxu0 0.0
        %1607 = vmatprep.subr.mxu0 0.0
        %1608 = vmatpush1.msra.mxu0 0.0
        %1609 = vmatprep.subr.mxu0 0.0
        %1610 = vmatpush1.msra.mxu0 0.0
        %1611 = vmatprep.subr.mxu0 0.0
        %1612 = vmatpush1.msra.mxu0 0.0
        %1613 = vmatprep.subr.mxu0 0.0
        %1614 = vmatpush1.msra.mxu0 0.0
        %1615 = vmatprep.subr.mxu0 0.0
        %1616 = vmatpush1.msra.mxu0 0.0
        %1617 = vmatprep.subr.mxu0 0.0
        %1618 = vmatpush1.msra.mxu0 0.0
        %1619 = vmatprep.subr.mxu0 0.0
        %1620 = vmatpush1.msra.mxu0 0.0
        %1621 = vmatprep.subr.mxu0 0.0
        %1622 = vmatpush1.msra.mxu0 0.0
        %1623 = vmatprep.subr.mxu0 0.0
        %1624 = vmatpush1.msra.mxu0 0.0
        %1625 = vmatprep.subr.mxu0 0.0
        %1626 = vmatpush1.msra.mxu0 0.0
        %1627 = vmatprep.subr.mxu0 0.0
        %1628 = vmatpush1.msra.mxu0 0.0
        %1629 = vmatprep.subr.mxu0 0.0
        %1630 = vmatpush1.msra.mxu0 0.0
        %1631 = vmatprep.subr.mxu0 0.0
        %1632 = vmatpush1.msra.mxu0 0.0
        %1633 = vmatprep.subr.mxu0 0.0
        %1634 = vmatpush1.msra.mxu0 0.0
        %1635 = vmatprep.subr.mxu0 0.0
        %1636 = vmatpush1.msra.mxu0 0.0
        %1637 = vmatprep.subr.mxu0 0.0
        %1638 = vmatpush1.msra.mxu0 0.0
        %1639 = vmatprep.subr.mxu0 0.0
        %1640 = vmatpush1.msra.mxu0 0.0
        %1641 = vmatprep.subr.mxu0 0.0
        %1642 = vmatpush1.msra.mxu0 0.0
        %1643 = vmatprep.subr.mxu0 0.0
        %1644 = vmatpush1.msra.mxu0 0.0
        %1645 = vmatprep.mubr.f32.mxu0 0.0
        %1646 = vmatmul.mubr.f32.gmra.mrb[0].mxu0 %v1579
        %v1647 = vpop.f32.mrb[0].mxu0
        %v1648 = vadd.f32 0.0, %v1647
        %v1649 = vpop.f32.mrb[0].mxu0
        %1650 = vdwg.mxu0
        %1651 = vmatprep.subr.mxu0 0.0
        %1652 = vmatpush1.msra.mxu0 %v1572
        %1653 = vmatprep.subr.mxu0 0.0
        %1654 = vmatpush1.msra.mxu0 %v1573
        %1655 = vmatprep.subr.mxu0 0.0
        %1656 = vmatpush1.msra.mxu0 %v1574
        %1657 = vmatprep.subr.mxu0 0.0
        %1658 = vmatpush1.msra.mxu0 %v1575
        %1659 = vmatprep.subr.mxu0 0.0
        %1660 = vmatpush1.msra.mxu0 0.0
        %1661 = vmatprep.subr.mxu0 0.0
        %1662 = vmatpush1.msra.mxu0 0.0
        %1663 = vmatprep.subr.mxu0 0.0
        %1664 = vmatpush1.msra.mxu0 0.0
        %1665 = vmatprep.subr.mxu0 0.0
        %1666 = vmatpush1.msra.mxu0 0.0
        %1667 = vmatprep.subr.mxu0 0.0
        %1668 = vmatpush1.msra.mxu0 0.0
        %1669 = vmatprep.subr.mxu0 0.0
        %1670 = vmatpush1.msra.mxu0 0.0
        %1671 = vmatprep.subr.mxu0 0.0
        %1672 = vmatpush1.msra.mxu0 0.0
        %1673 = vmatprep.subr.mxu0 0.0
        %1674 = vmatpush1.msra.mxu0 0.0
        %1675 = vmatprep.subr.mxu0 0.0
        %1676 = vmatpush1.msra.mxu0 0.0
        %1677 = vmatprep.subr.mxu0 0.0
        %1678 = vmatpush1.msra.mxu0 0.0
        %1679 = vmatprep.subr.mxu0 0.0
        %1680 = vmatpush1.msra.mxu0 0.0
        %1681 = vmatprep.subr.mxu0 0.0
        %1682 = vmatpush1.msra.mxu0 0.0
        %1683 = vmatprep.subr.mxu0 0.0
        %1684 = vmatpush1.msra.mxu0 0.0
        %1685 = vmatprep.subr.mxu0 0.0
        %1686 = vmatpush1.msra.mxu0 0.0
        %1687 = vmatprep.subr.mxu0 0.0
        %1688 = vmatpush1.msra.mxu0 0.0
        %1689 = vmatprep.subr.mxu0 0.0
        %1690 = vmatpush1.msra.mxu0 0.0
        %1691 = vmatprep.subr.mxu0 0.0
        %1692 = vmatpush1.msra.mxu0 0.0
        %1693 = vmatprep.subr.mxu0 0.0
        %1694 = vmatpush1.msra.mxu0 0.0
        %1695 = vmatprep.subr.mxu0 0.0
        %1696 = vmatpush1.msra.mxu0 0.0
        %1697 = vmatprep.subr.mxu0 0.0
        %1698 = vmatpush1.msra.mxu0 0.0
        %1699 = vmatprep.subr.mxu0 0.0
        %1700 = vmatpush1.msra.mxu0 0.0
        %1701 = vmatprep.subr.mxu0 0.0
        %1702 = vmatpush1.msra.mxu0 0.0
        %1703 = vmatprep.subr.mxu0 0.0
        %1704 = vmatpush1.msra.mxu0 0.0
        %1705 = vmatprep.subr.mxu0 0.0
        %1706 = vmatpush1.msra.mxu0 0.0
        %1707 = vmatprep.subr.mxu0 0.0
        %1708 = vmatpush1.msra.mxu0 0.0
        %1709 = vmatprep.subr.mxu0 0.0
        %1710 = vmatpush1.msra.mxu0 0.0
        %1711 = vmatprep.subr.mxu0 0.0
        %1712 = vmatpush1.msra.mxu0 0.0
        %1713 = vmatprep.subr.mxu0 0.0
        %1714 = vmatpush1.msra.mxu0 0.0
        %1715 = vmatprep.mubr.f32.mxu0 0.0
        %1716 = vmatmul.mubr.f32.gmra.mrb[0].mxu0 %v1143
        %v1717 = vpop.f32.mrb[0].mxu0
        %v1718 = vadd.f32 %v1648, %v1717
        %v1719 = vpop.f32.mrb[0].mxu0
        %1720 = vdwg.mxu0
        %v1721 = vld [vmem:[#allocation5 + $0x1] sm:$0x1]
        %v1722 = vlaneseq
        %v1723 = vshrl.u32 %v1722, 7
        %v1724 = vsub.s32 0, %v1723
        %v1725 = vrot.slane %v1721, %v1724
        %v1726 = vadd.f32 %v1718, %v1725
        %v1727 = vsub.f32 0.0, %v1726
        %v1728 = vmul.f32 %v1727, 1.442695
        %v1729 = vpow.pop %v1728
        %v1730 = vadd.f32 %v1729, 1.0
        %v1731 = vrcp.pop %v1730
        %v1732 = vmul.f32 %v1726, %v1731
        %v1733 = vld [vmem:[#allocation5 + $0xb0] sm:$0xff]
        %v1734 = vld [vmem:[#allocation5 + $0xb8] sm:$0xff]
        %v1735 = vld [vmem:[#allocation5 + $0xc0] sm:$0xff]
        %v1736 = vld [vmem:[#allocation5 + $0xc8] sm:$0xff]
        %v1737 = vld [vmem:[#allocation5 + $0xd0] sm:$0xff]
        %v1738 = vld [vmem:[#allocation5 + $0xd8] sm:$0xff]
        %v1739 = vld [vmem:[#allocation5 + $0xe0] sm:$0xff]
        %v1740 = vld [vmem:[#allocation5 + $0xe8] sm:$0xff]
        %v1742 = vsel %vm1040, %v1732, 0
        %1744 = vmatprep.subr.mxu0 0.0
        %1745 = vmatpush1.msra.mxu0 %v1733
        %1746 = vmatprep.subr.mxu0 0.0
        %1747 = vmatpush1.msra.mxu0 %v1734
        %1748 = vmatprep.subr.mxu0 0.0
        %1749 = vmatpush1.msra.mxu0 %v1735
        %1750 = vmatprep.subr.mxu0 0.0
        %1751 = vmatpush1.msra.mxu0 %v1736
        %1752 = vmatprep.subr.mxu0 0.0
        %1753 = vmatpush1.msra.mxu0 %v1737
        %1754 = vmatprep.subr.mxu0 0.0
        %1755 = vmatpush1.msra.mxu0 %v1738
        %1756 = vmatprep.subr.mxu0 0.0
        %1757 = vmatpush1.msra.mxu0 %v1739
        %1758 = vmatprep.subr.mxu0 0.0
        %1759 = vmatpush1.msra.mxu0 %v1740
        %1760 = vmatprep.subr.mxu0 0.0
        %1761 = vmatpush1.msra.mxu0 0.0
        %1762 = vmatprep.subr.mxu0 0.0
        %1763 = vmatpush1.msra.mxu0 0.0
        %1764 = vmatprep.subr.mxu0 0.0
        %1765 = vmatpush1.msra.mxu0 0.0
        %1766 = vmatprep.subr.mxu0 0.0
        %1767 = vmatpush1.msra.mxu0 0.0
        %1768 = vmatprep.subr.mxu0 0.0
        %1769 = vmatpush1.msra.mxu0 0.0
        %1770 = vmatprep.subr.mxu0 0.0
        %1771 = vmatpush1.msra.mxu0 0.0
        %1772 = vmatprep.subr.mxu0 0.0
        %1773 = vmatpush1.msra.mxu0 0.0
        %1774 = vmatprep.subr.mxu0 0.0
        %1775 = vmatpush1.msra.mxu0 0.0
        %1776 = vmatprep.subr.mxu0 0.0
        %1777 = vmatpush1.msra.mxu0 0.0
        %1778 = vmatprep.subr.mxu0 0.0
        %1779 = vmatpush1.msra.mxu0 0.0
        %1780 = vmatprep.subr.mxu0 0.0
        %1781 = vmatpush1.msra.mxu0 0.0
        %1782 = vmatprep.subr.mxu0 0.0
        %1783 = vmatpush1.msra.mxu0 0.0
        %1784 = vmatprep.subr.mxu0 0.0
        %1785 = vmatpush1.msra.mxu0 0.0
        %1786 = vmatprep.subr.mxu0 0.0
        %1787 = vmatpush1.msra.mxu0 0.0
        %1788 = vmatprep.subr.mxu0 0.0
        %1789 = vmatpush1.msra.mxu0 0.0
        %1790 = vmatprep.subr.mxu0 0.0
        %1791 = vmatpush1.msra.mxu0 0.0
        %1792 = vmatprep.subr.mxu0 0.0
        %1793 = vmatpush1.msra.mxu0 0.0
        %1794 = vmatprep.subr.mxu0 0.0
        %1795 = vmatpush1.msra.mxu0 0.0
        %1796 = vmatprep.subr.mxu0 0.0
        %1797 = vmatpush1.msra.mxu0 0.0
        %1798 = vmatprep.subr.mxu0 0.0
        %1799 = vmatpush1.msra.mxu0 0.0
        %1800 = vmatprep.subr.mxu0 0.0
        %1801 = vmatpush1.msra.mxu0 0.0
        %1802 = vmatprep.subr.mxu0 0.0
        %1803 = vmatpush1.msra.mxu0 0.0
        %1804 = vmatprep.subr.mxu0 0.0
        %1805 = vmatpush1.msra.mxu0 0.0
        %1806 = vmatprep.subr.mxu0 0.0
        %1807 = vmatpush1.msra.mxu0 0.0
        %1808 = vmatprep.mubr.f32.mxu0 0.0
        %1809 = vmatmul.mubr.f32.gmra.mrb[0].mxu0 %v1742
        %v1810 = vpop.f32.mrb[0].mxu0
        %v1811 = vadd.f32 0.0, %v1810
        %v1812 = vpop.f32.mrb[0].mxu0
        %1813 = vdwg.mxu0
        %v1814 = vadd.f32 %v1120, %v1811
        %v1815 = vld [vmem:[#allocation5 + $0x4] sm:$0x1]
        %v1816 = vlaneseq
        %v1817 = vshrl.u32 %v1816, 7
        %v1818 = vsub.s32 0, %v1817
        %v1819 = vrot.slane %v1815, %v1818
        %v1820 = vadd.f32 %v1814, %v1819
        %v1821 = vld [vmem:[#allocation2 + $0x150] sm:$0xff]
        %v1822 = vld [vmem:[#allocation2 + $0x158] sm:$0xff]
        %v1823 = vld [vmem:[#allocation2 + $0x160] sm:$0xff]
        %v1824 = vld [vmem:[#allocation2 + $0x168] sm:$0xff]
        %v1825 = vld [vmem:[#allocation2 + $0x170] sm:$0xff]
        %v1826 = vld [vmem:[#allocation2 + $0x178] sm:$0xff]
        %v1827 = vld [vmem:[#allocation2 + $0x180] sm:$0xff]
        %v1828 = vld [vmem:[#allocation2 + $0x188] sm:$0xff]
        %s1829 = scalar_lea.vmem [#allocation2], 5
        %v1830 = vld [vmem:[%s1829] ss:$8 sm:$0x3]
        %v1832 = vlaneseq
        %v1833 = vshrl.u32 %v1832, 7
        %v1834 = vsub.s32 0, %v1833
        %v1835 = vrot.slane %v1830, %v1834
        %v1836 = vlaneseq
        %v1837 = vshrl.u32 %v1836, 7
        %v1838 = vsub.s32 1, %v1837
        %v1839 = vrot.slane %v1830, %v1838
        %v1843 = vsel %vm416, %v1820, 0
        %1845 = vmatprep.subr.mxu0 %v1822
        %1846 = vmatpush1.msra.mxu0 %v1821
        %1847 = vmatprep.subr.mxu0 %v1824
        %1848 = vmatpush1.msra.mxu0 %v1823
        %1849 = vmatprep.subr.mxu0 %v1826
        %1850 = vmatpush1.msra.mxu0 %v1825
        %1851 = vmatprep.subr.mxu0 %v1828
        %1852 = vmatpush1.msra.mxu0 %v1827
        %1853 = vmatprep.subr.mxu0 0.0
        %1854 = vmatpush1.msra.mxu0 0.0
        %1855 = vmatprep.subr.mxu0 0.0
        %1856 = vmatpush1.msra.mxu0 0.0
        %1857 = vmatprep.subr.mxu0 0.0
        %1858 = vmatpush1.msra.mxu0 0.0
        %1859 = vmatprep.subr.mxu0 0.0
        %1860 = vmatpush1.msra.mxu0 0.0
        %1861 = vmatprep.subr.mxu0 0.0
        %1862 = vmatpush1.msra.mxu0 0.0
        %1863 = vmatprep.subr.mxu0 0.0
        %1864 = vmatpush1.msra.mxu0 0.0
        %1865 = vmatprep.subr.mxu0 0.0
        %1866 = vmatpush1.msra.mxu0 0.0
        %1867 = vmatprep.subr.mxu0 0.0
        %1868 = vmatpush1.msra.mxu0 0.0
        %1869 = vmatprep.subr.mxu0 0.0
        %1870 = vmatpush1.msra.mxu0 0.0
        %1871 = vmatprep.subr.mxu0 0.0
        %1872 = vmatpush1.msra.mxu0 0.0
        %1873 = vmatprep.subr.mxu0 0.0
        %1874 = vmatpush1.msra.mxu0 0.0
        %1875 = vmatprep.subr.mxu0 0.0
        %1876 = vmatpush1.msra.mxu0 0.0
        %1877 = vmatprep.subr.mxu0 0.0
        %1878 = vmatpush1.msra.mxu0 0.0
        %1879 = vmatprep.subr.mxu0 0.0
        %1880 = vmatpush1.msra.mxu0 0.0
        %1881 = vmatprep.subr.mxu0 0.0
        %1882 = vmatpush1.msra.mxu0 0.0
        %1883 = vmatprep.subr.mxu0 0.0
        %1884 = vmatpush1.msra.mxu0 0.0
        %1885 = vmatprep.subr.mxu0 0.0
        %1886 = vmatpush1.msra.mxu0 0.0
        %1887 = vmatprep.subr.mxu0 0.0
        %1888 = vmatpush1.msra.mxu0 0.0
        %1889 = vmatprep.subr.mxu0 0.0
        %1890 = vmatpush1.msra.mxu0 0.0
        %1891 = vmatprep.subr.mxu0 0.0
        %1892 = vmatpush1.msra.mxu0 0.0
        %1893 = vmatprep.subr.mxu0 0.0
        %1894 = vmatpush1.msra.mxu0 0.0
        %1895 = vmatprep.subr.mxu0 0.0
        %1896 = vmatpush1.msra.mxu0 0.0
        %1897 = vmatprep.subr.mxu0 0.0
        %1898 = vmatpush1.msra.mxu0 0.0
        %1899 = vmatprep.subr.mxu0 0.0
        %1900 = vmatpush1.msra.mxu0 0.0
        %1901 = vmatprep.subr.mxu0 0.0
        %1902 = vmatpush1.msra.mxu0 0.0
        %1903 = vmatprep.subr.mxu0 0.0
        %1904 = vmatpush1.msra.mxu0 0.0
        %1905 = vmatprep.subr.mxu0 0.0
        %1906 = vmatpush1.msra.mxu0 0.0
        %1907 = vmatprep.subr.mxu0 0.0
        %1908 = vmatpush1.msra.mxu0 0.0
        %1909 = vmatprep.mubr.f32.mxu0 0.0
        %1910 = vmatmul.mubr.f32.gmra.mrb[0].mxu0 %v1843
        %v1911 = vpop.f32.mrb[0].mxu0
        %v1912 = vadd.f32 %v1835, %v1911
        %v1913 = vpop.f32.mrb[0].mxu0
        %v1914 = vadd.f32 %v1839, %v1913
        %1915 = vdwg.mxu0
        %1916 = vmatprep.subr.mxu0 0.0
        %1917 = vmatpush1.msra.mxu0 %v1820
        %1918 = vmatprep.subr.mxu0 0.0
        %1919 = vmatpush1.msra.mxu0 0.0
        %1920 = vmatprep.subr.mxu0 0.0
        %1921 = vmatpush1.msra.mxu0 0.0
        %1922 = vmatprep.subr.mxu0 0.0
        %1923 = vmatpush1.msra.mxu0 0.0
        %1924 = vmatprep.subr.mxu0 0.0
        %1925 = vmatpush1.msra.mxu0 0.0
        %1926 = vmatprep.subr.mxu0 0.0
        %1927 = vmatpush1.msra.mxu0 0.0
        %1928 = vmatprep.subr.mxu0 0.0
        %1929 = vmatpush1.msra.mxu0 0.0
        %1930 = vmatprep.subr.mxu0 0.0
        %1931 = vmatpush1.msra.mxu0 0.0
        %1932 = vmatprep.subr.mxu0 0.0
        %1933 = vmatpush1.msra.mxu0 0.0
        %1934 = vmatprep.subr.mxu0 0.0
        %1935 = vmatpush1.msra.mxu0 0.0
        %1936 = vmatprep.subr.mxu0 0.0
        %1937 = vmatpush1.msra.mxu0 0.0
        %1938 = vmatprep.subr.mxu0 0.0
        %1939 = vmatpush1.msra.mxu0 0.0
        %1940 = vmatprep.subr.mxu0 0.0
        %1941 = vmatpush1.msra.mxu0 0.0
        %1942 = vmatprep.subr.mxu0 0.0
        %1943 = vmatpush1.msra.mxu0 0.0
        %1944 = vmatprep.subr.mxu0 0.0
        %1945 = vmatpush1.msra.mxu0 0.0
        %1946 = vmatprep.subr.mxu0 0.0
        %1947 = vmatpush1.msra.mxu0 0.0
        %1948 = vmatprep.subr.mxu0 0.0
        %1949 = vmatpush1.msra.mxu0 0.0
        %1950 = vmatprep.subr.mxu0 0.0
        %1951 = vmatpush1.msra.mxu0 0.0
        %1952 = vmatprep.subr.mxu0 0.0
        %1953 = vmatpush1.msra.mxu0 0.0
        %1954 = vmatprep.subr.mxu0 0.0
        %1955 = vmatpush1.msra.mxu0 0.0
        %1956 = vmatprep.subr.mxu0 0.0
        %1957 = vmatpush1.msra.mxu0 0.0
        %1958 = vmatprep.subr.mxu0 0.0
        %1959 = vmatpush1.msra.mxu0 0.0
        %1960 = vmatprep.subr.mxu0 0.0
        %1961 = vmatpush1.msra.mxu0 0.0
        %1962 = vmatprep.subr.mxu0 0.0
        %1963 = vmatpush1.msra.mxu0 0.0
        %1964 = vmatprep.subr.mxu0 0.0
        %1965 = vmatpush1.msra.mxu0 0.0
        %1966 = vmatprep.subr.mxu0 0.0
        %1967 = vmatpush1.msra.mxu0 0.0
        %1968 = vmatprep.subr.mxu0 0.0
        %1969 = vmatpush1.msra.mxu0 0.0
        %1970 = vmatprep.subr.mxu0 0.0
        %1971 = vmatpush1.msra.mxu0 0.0
        %1972 = vmatprep.subr.mxu0 0.0
        %1973 = vmatpush1.msra.mxu0 0.0
        %1974 = vmatprep.subr.mxu0 0.0
        %1975 = vmatpush1.msra.mxu0 0.0
        %1976 = vmatprep.subr.mxu0 0.0
        %1977 = vmatpush1.msra.mxu0 0.0
        %1978 = vmatprep.subr.mxu0 0.0
        %1979 = vmatpush1.msra.mxu0 0.0
        %1980 = vmatprep.mubr.f32.mxu0 0.0
        %1981 = vmatmul.mubr.f32.gmra.mrb[0].mxu0 %v492
        %v1982 = vpop.f32.mrb[0].mxu0
        %v1983 = vadd.f32 0.0, %v1982
        %v1984 = vpop.f32.mrb[0].mxu0
        %1985 = vmatprep.mubr.f32.mxu0 0.0
        %1986 = vmatmul.mubr.f32.gmra.mrb[0].mxu0 %v495
        %v1987 = vpop.f32.mrb[0].mxu0
        %v1988 = vadd.f32 0.0, %v1987
        %v1989 = vpop.f32.mrb[0].mxu0
        %1990 = vmatprep.mubr.f32.mxu0 0.0
        %1991 = vmatmul.mubr.f32.gmra.mrb[0].mxu0 %v498
        %v1992 = vpop.f32.mrb[0].mxu0
        %v1993 = vadd.f32 0.0, %v1992
        %v1994 = vpop.f32.mrb[0].mxu0
        %1995 = vdwg.mxu0
        %v1996 = vld [vmem:[#allocation2 + $0x190] sm:$0xff]
        %v1997 = vld [vmem:[#allocation2 + $0x198] sm:$0xff]
        %v1998 = vld [vmem:[#allocation2 + $0x1a0] sm:$0xff]
        %v1999 = vld [vmem:[#allocation2 + $0x1a8] sm:$0xff]
        %v2000 = vld [vmem:[#allocation2 + $0x1b0] sm:$0xff]
        %v2001 = vld [vmem:[#allocation2 + $0x1b8] sm:$0xff]
        %v2002 = vld [vmem:[#allocation2 + $0x1c0] sm:$0xff]
        %v2003 = vld [vmem:[#allocation2 + $0x1c8] sm:$0xff]
        %v2005 = vsel %vm416, %v1983, 0
        %v2008 = vsel %vm416, %v1988, 0
        %v2011 = vsel %vm416, %v1993, 0
        %2013 = vmatprep.subr.mxu0 %v1997
        %2014 = vmatpush1.msra.mxu0 %v1996
        %2015 = vmatprep.subr.mxu0 %v1999
        %2016 = vmatpush1.msra.mxu0 %v1998
        %2017 = vmatprep.subr.mxu0 %v2001
        %2018 = vmatpush1.msra.mxu0 %v2000
        %2019 = vmatprep.subr.mxu0 %v2003
        %2020 = vmatpush1.msra.mxu0 %v2002
        %2021 = vmatprep.subr.mxu0 0.0
        %2022 = vmatpush1.msra.mxu0 0.0
        %2023 = vmatprep.subr.mxu0 0.0
        %2024 = vmatpush1.msra.mxu0 0.0
        %2025 = vmatprep.subr.mxu0 0.0
        %2026 = vmatpush1.msra.mxu0 0.0
        %2027 = vmatprep.subr.mxu0 0.0
        %2028 = vmatpush1.msra.mxu0 0.0
        %2029 = vmatprep.subr.mxu0 0.0
        %2030 = vmatpush1.msra.mxu0 0.0
        %2031 = vmatprep.subr.mxu0 0.0
        %2032 = vmatpush1.msra.mxu0 0.0
        %2033 = vmatprep.subr.mxu0 0.0
        %2034 = vmatpush1.msra.mxu0 0.0
        %2035 = vmatprep.subr.mxu0 0.0
        %2036 = vmatpush1.msra.mxu0 0.0
        %2037 = vmatprep.subr.mxu0 0.0
        %2038 = vmatpush1.msra.mxu0 0.0
        %2039 = vmatprep.subr.mxu0 0.0
        %2040 = vmatpush1.msra.mxu0 0.0
        %2041 = vmatprep.subr.mxu0 0.0
        %2042 = vmatpush1.msra.mxu0 0.0
        %2043 = vmatprep.subr.mxu0 0.0
        %2044 = vmatpush1.msra.mxu0 0.0
        %2045 = vmatprep.subr.mxu0 0.0
        %2046 = vmatpush1.msra.mxu0 0.0
        %2047 = vmatprep.subr.mxu0 0.0
        %2048 = vmatpush1.msra.mxu0 0.0
        %2049 = vmatprep.subr.mxu0 0.0
        %2050 = vmatpush1.msra.mxu0 0.0
        %2051 = vmatprep.subr.mxu0 0.0
        %2052 = vmatpush1.msra.mxu0 0.0
        %2053 = vmatprep.subr.mxu0 0.0
        %2054 = vmatpush1.msra.mxu0 0.0
        %2055 = vmatprep.subr.mxu0 0.0
        %2056 = vmatpush1.msra.mxu0 0.0
        %2057 = vmatprep.subr.mxu0 0.0
        %2058 = vmatpush1.msra.mxu0 0.0
        %2059 = vmatprep.subr.mxu0 0.0
        %2060 = vmatpush1.msra.mxu0 0.0
        %2061 = vmatprep.subr.mxu0 0.0
        %2062 = vmatpush1.msra.mxu0 0.0
        %2063 = vmatprep.subr.mxu0 0.0
        %2064 = vmatpush1.msra.mxu0 0.0
        %2065 = vmatprep.subr.mxu0 0.0
        %2066 = vmatpush1.msra.mxu0 0.0
        %2067 = vmatprep.subr.mxu0 0.0
        %2068 = vmatpush1.msra.mxu0 0.0
        %2069 = vmatprep.subr.mxu0 0.0
        %2070 = vmatpush1.msra.mxu0 0.0
        %2071 = vmatprep.subr.mxu0 0.0
        %2072 = vmatpush1.msra.mxu0 0.0
        %2073 = vmatprep.subr.mxu0 0.0
        %2074 = vmatpush1.msra.mxu0 0.0
        %2075 = vmatprep.subr.mxu0 0.0
        %2076 = vmatpush1.msra.mxu0 0.0
        %2077 = vmatprep.mubr.f32.mxu0 0.0
        %2078 = vmatmul.mubr.f32.gmra.mrb[0].mxu0 %v2005
        %v2079 = vpop.f32.mrb[0].mxu0
        %v2080 = vadd.f32 0.0, %v2079
        %v2081 = vpop.f32.mrb[0].mxu0
        %v2082 = vadd.f32 0.0, %v2081
        %2083 = vmatprep.mubr.f32.mxu0 0.0
        %2084 = vmatmul.mubr.f32.gmra.mrb[0].mxu0 %v2008
        %v2085 = vpop.f32.mrb[0].mxu0
        %v2086 = vadd.f32 0.0, %v2085
        %v2087 = vpop.f32.mrb[0].mxu0
        %v2088 = vadd.f32 0.0, %v2087
        %2089 = vmatprep.mubr.f32.mxu0 0.0
        %2090 = vmatmul.mubr.f32.gmra.mrb[0].mxu0 %v2011
        %v2091 = vpop.f32.mrb[0].mxu0
        %v2092 = vadd.f32 0.0, %v2091
        %v2093 = vpop.f32.mrb[0].mxu0
        %v2094 = vadd.f32 0.0, %v2093
        %2095 = vdwg.mxu0
        %v2096 = vadd.f32 %v1912, %v2080
        %v2097 = vadd.f32 %v1914, %v2082
        %v2098 = vadd.f32 %v1912, %v2086
        %v2099 = vadd.f32 %v1914, %v2088
        %v2100 = vadd.f32 %v1912, %v2092
        %v2101 = vadd.f32 %v1914, %v2094
        %s2102 = scalar_lea.vmem [#allocation2], 4
        %v2103 = vld [vmem:[%s2102] ss:$8 sm:$0x3]
        %v2105 = vlaneseq
        %v2106 = vshrl.u32 %v2105, 7
        %v2107 = vsub.s32 0, %v2106
        %v2108 = vrot.slane %v2103, %v2107
        %v2109 = vlaneseq
        %v2110 = vshrl.u32 %v2109, 7
        %v2111 = vsub.s32 1, %v2110
        %v2112 = vrot.slane %v2103, %v2111
        %v2115 = vmul.f32 %v690, %v2108
        %v2116 = vmul.f32 %v690, %v2112
        %v2117 = vmul.f32 %v695, %v2108
        %v2118 = vmul.f32 %v695, %v2112
        %v2119 = vmul.f32 %v700, %v2108
        %v2120 = vmul.f32 %v700, %v2112
        %v2121 = vadd.f32 %v2096, %v2115
        %v2122 = vadd.f32 %v2097, %v2116
        %v2123 = vadd.f32 %v2098, %v2117
        %v2124 = vadd.f32 %v2099, %v2118
        %v2125 = vadd.f32 %v2100, %v2119
        %v2126 = vadd.f32 %v2101, %v2120
        %v2127 = vsub.f32 0.0, %v2121
        %v2128 = vsub.f32 0.0, %v2122
        %v2129 = vsub.f32 0.0, %v2123
        %v2130 = vsub.f32 0.0, %v2124
        %v2131 = vsub.f32 0.0, %v2125
        %v2132 = vsub.f32 0.0, %v2126
        %v2133 = vmul.f32 %v2127, 1.442695
        %v2134 = vpow.pop %v2133
        %v2135 = vmul.f32 %v2128, 1.442695
        %v2136 = vpow.pop %v2135
        %v2137 = vmul.f32 %v2129, 1.442695
        %v2138 = vpow.pop %v2137
        %v2139 = vmul.f32 %v2130, 1.442695
        %v2140 = vpow.pop %v2139
        %v2141 = vmul.f32 %v2131, 1.442695
        %v2142 = vpow.pop %v2141
        %v2143 = vmul.f32 %v2132, 1.442695
        %v2144 = vpow.pop %v2143
        %v2145 = vadd.f32 %v2134, 1.0
        %v2146 = vadd.f32 %v2136, 1.0
        %v2147 = vadd.f32 %v2138, 1.0
        %v2148 = vadd.f32 %v2140, 1.0
        %v2149 = vadd.f32 %v2142, 1.0
        %v2150 = vadd.f32 %v2144, 1.0
        %v2151 = vrcp.pop %v2145
        %v2152 = vrcp.pop %v2146
        %v2153 = vrcp.pop %v2147
        %v2154 = vrcp.pop %v2148
        %v2155 = vrcp.pop %v2149
        %v2156 = vrcp.pop %v2150
        %v2157 = vmul.f32 %v2121, %v2151
        %v2158 = vmul.f32 %v2122, %v2152
        %v2159 = vmul.f32 %v2123, %v2153
        %v2160 = vmul.f32 %v2124, %v2154
        %v2161 = vmul.f32 %v2125, %v2155
        %v2162 = vmul.f32 %v2126, %v2156
        %v2163 = vld [vmem:[#allocation2 + $0x1d0] sm:$0xff]
        %v2164 = vld [vmem:[#allocation2 + $0x1d8] sm:$0xff]
        %v2165 = vld [vmem:[#allocation2 + $0x1e0] sm:$0xff]
        %v2166 = vld [vmem:[#allocation2 + $0x1e8] sm:$0xff]
        %v2167 = vld [vmem:[#allocation5 + $0x8] sm:$0x1]
        %v2168 = vlaneseq
        %v2169 = vshrl.u32 %v2168, 7
        %v2170 = vsub.s32 0, %v2169
        %v2171 = vrot.slane %v2167, %v2170
        %2172 = vmatprep.subr.mxu0 %v2164
        %2173 = vmatpush1.xpose.msra.mxu0 %v2163
        %2174 = vmatprep.subr.mxu0 %v2166
        %2175 = vmatpush1.xpose.msra.mxu0 %v2165
        %2176 = vmatprep.subr.mxu0 0.0
        %2177 = vmatpush1.xpose.msra.mxu0 0.0
        %2178 = vmatprep.subr.mxu0 0.0
        %2179 = vmatpush1.xpose.msra.mxu0 0.0
        %2180 = vmatprep.subr.mxu0 0.0
        %2181 = vmatpush1.xpose.msra.mxu0 0.0
        %2182 = vmatprep.subr.mxu0 0.0
        %2183 = vmatpush1.xpose.msra.mxu0 0.0
        %2184 = vmatprep.subr.mxu0 0.0
        %2185 = vmatpush1.xpose.msra.mxu0 0.0
        %2186 = vmatprep.subr.mxu0 0.0
        %2187 = vmatpush1.xpose.msra.mxu0 0.0
        %2188 = vmatprep.subr.mxu0 0.0
        %2189 = vmatpush1.xpose.msra.mxu0 0.0
        %2190 = vmatprep.subr.mxu0 0.0
        %2191 = vmatpush1.xpose.msra.mxu0 0.0
        %2192 = vmatprep.subr.mxu0 0.0
        %2193 = vmatpush1.xpose.msra.mxu0 0.0
        %2194 = vmatprep.subr.mxu0 0.0
        %2195 = vmatpush1.xpose.msra.mxu0 0.0
        %2196 = vmatprep.subr.mxu0 0.0
        %2197 = vmatpush1.xpose.msra.mxu0 0.0
        %2198 = vmatprep.subr.mxu0 0.0
        %2199 = vmatpush1.xpose.msra.mxu0 0.0
        %2200 = vmatprep.subr.mxu0 0.0
        %2201 = vmatpush1.xpose.msra.mxu0 0.0
        %2202 = vmatprep.subr.mxu0 0.0
        %2203 = vmatpush1.xpose.msra.mxu0 0.0
        %2204 = vmatprep.subr.mxu0 0.0
        %2205 = vmatpush1.xpose.msra.mxu0 0.0
        %2206 = vmatprep.subr.mxu0 0.0
        %2207 = vmatpush1.xpose.msra.mxu0 0.0
        %2208 = vmatprep.subr.mxu0 0.0
        %2209 = vmatpush1.xpose.msra.mxu0 0.0
        %2210 = vmatprep.subr.mxu0 0.0
        %2211 = vmatpush1.xpose.msra.mxu0 0.0
        %2212 = vmatprep.subr.mxu0 0.0
        %2213 = vmatpush1.xpose.msra.mxu0 0.0
        %2214 = vmatprep.subr.mxu0 0.0
        %2215 = vmatpush1.xpose.msra.mxu0 0.0
        %2216 = vmatprep.subr.mxu0 0.0
        %2217 = vmatpush1.xpose.msra.mxu0 0.0
        %2218 = vmatprep.subr.mxu0 0.0
        %2219 = vmatpush1.xpose.msra.mxu0 0.0
        %2220 = vmatprep.subr.mxu0 0.0
        %2221 = vmatpush1.xpose.msra.mxu0 0.0
        %2222 = vmatprep.subr.mxu0 0.0
        %2223 = vmatpush1.xpose.msra.mxu0 0.0
        %2224 = vmatprep.subr.mxu0 0.0
        %2225 = vmatpush1.xpose.msra.mxu0 0.0
        %2226 = vmatprep.subr.mxu0 0.0
        %2227 = vmatpush1.xpose.msra.mxu0 0.0
        %2228 = vmatprep.subr.mxu0 0.0
        %2229 = vmatpush1.xpose.msra.mxu0 0.0
        %2230 = vmatprep.subr.mxu0 0.0
        %2231 = vmatpush1.xpose.msra.mxu0 0.0
        %2232 = vmatprep.subr.mxu0 0.0
        %2233 = vmatpush1.xpose.msra.mxu0 0.0
        %2234 = vmatprep.subr.mxu0 0.0
        %2235 = vmatpush1.xpose.msra.mxu0 0.0
        %2236 = vmatprep.mubr.f32.mxu0 %v2158
        %2237 = vmatmul.mubr.f32.gmra.mrb[0].mxu0 %v2157
        %v2238 = vpop.f32.mrb[0].mxu0
        %v2239 = vadd.f32 %v2171, %v2238
        %v2240 = vpop.f32.mrb[0].mxu0
        %2241 = vmatprep.mubr.f32.mxu0 %v2160
        %2242 = vmatmul.mubr.f32.gmra.mrb[0].mxu0 %v2159
        %v2243 = vpop.f32.mrb[0].mxu0
        %v2244 = vadd.f32 %v2171, %v2243
        %v2245 = vpop.f32.mrb[0].mxu0
        %2246 = vmatprep.mubr.f32.mxu0 %v2162
        %2247 = vmatmul.mubr.f32.gmra.mrb[0].mxu0 %v2161
        %v2248 = vpop.f32.mrb[0].mxu0
        %v2249 = vadd.f32 %v2171, %v2248
        %v2250 = vpop.f32.mrb[0].mxu0
        %2251 = vdwg.mxu0
        %v2252 = vsub.f32 0.0, %v2239
        %v2253 = vsub.f32 0.0, %v2244
        %v2254 = vsub.f32 0.0, %v2249
        %v2255 = vmul.f32 %v2252, 1.442695
        %v2256 = vpow.pop %v2255
        %v2257 = vmul.f32 %v2253, 1.442695
        %v2258 = vpow.pop %v2257
        %v2259 = vmul.f32 %v2254, 1.442695
        %v2260 = vpow.pop %v2259
        %v2261 = vadd.f32 %v2256, 1.0
        %v2262 = vadd.f32 %v2258, 1.0
        %v2263 = vadd.f32 %v2260, 1.0
        %v2264 = vrcp.pop %v2261
        %v2265 = vrcp.pop %v2262
        %v2266 = vrcp.pop %v2263
        %v2267 = vmul.f32 %v2239, %v2264
        %v2268 = vmul.f32 %v2244, %v2265
        %v2269 = vmul.f32 %v2249, %v2266
        %v2270 = vadd.f32 %v2267, %v2268
        %v2271 = vadd.f32 %v2270, %v2269
        %v2272 = vld [vmem:[#allocation5 + $0xf0] sm:$0xff]
        %v2273 = vld [vmem:[#allocation5 + $0xf8] sm:$0xff]
        %v2274 = vld [vmem:[#allocation5 + $0x100] sm:$0xff]
        %v2275 = vld [vmem:[#allocation5 + $0x108] sm:$0xff]
        %v2276 = vld [vmem:[#allocation5 + $0x110] sm:$0xff]
        %v2277 = vld [vmem:[#allocation5 + $0x118] sm:$0xff]
        %v2279 = vsel %vm876, %v2271, 0
        %2281 = vmatprep.subr.mxu0 0.0
        %2282 = vmatpush1.msra.mxu0 %v2276
        %2283 = vmatprep.subr.mxu0 0.0
        %2284 = vmatpush1.msra.mxu0 %v2277
        %2285 = vmatprep.subr.mxu0 0.0
        %2286 = vmatpush1.msra.mxu0 0.0
        %2287 = vmatprep.subr.mxu0 0.0
        %2288 = vmatpush1.msra.mxu0 0.0
        %2289 = vmatprep.subr.mxu0 0.0
        %2290 = vmatpush1.msra.mxu0 0.0
        %2291 = vmatprep.subr.mxu0 0.0
        %2292 = vmatpush1.msra.mxu0 0.0
        %2293 = vmatprep.subr.mxu0 0.0
        %2294 = vmatpush1.msra.mxu0 0.0
        %2295 = vmatprep.subr.mxu0 0.0
        %2296 = vmatpush1.msra.mxu0 0.0
        %2297 = vmatprep.subr.mxu0 0.0
        %2298 = vmatpush1.msra.mxu0 0.0
        %2299 = vmatprep.subr.mxu0 0.0
        %2300 = vmatpush1.msra.mxu0 0.0
        %2301 = vmatprep.subr.mxu0 0.0
        %2302 = vmatpush1.msra.mxu0 0.0
        %2303 = vmatprep.subr.mxu0 0.0
        %2304 = vmatpush1.msra.mxu0 0.0
        %2305 = vmatprep.subr.mxu0 0.0
        %2306 = vmatpush1.msra.mxu0 0.0
        %2307 = vmatprep.subr.mxu0 0.0
        %2308 = vmatpush1.msra.mxu0 0.0
        %2309 = vmatprep.subr.mxu0 0.0
        %2310 = vmatpush1.msra.mxu0 0.0
        %2311 = vmatprep.subr.mxu0 0.0
        %2312 = vmatpush1.msra.mxu0 0.0
        %2313 = vmatprep.subr.mxu0 0.0
        %2314 = vmatpush1.msra.mxu0 0.0
        %2315 = vmatprep.subr.mxu0 0.0
        %2316 = vmatpush1.msra.mxu0 0.0
        %2317 = vmatprep.subr.mxu0 0.0
        %2318 = vmatpush1.msra.mxu0 0.0
        %2319 = vmatprep.subr.mxu0 0.0
        %2320 = vmatpush1.msra.mxu0 0.0
        %2321 = vmatprep.subr.mxu0 0.0
        %2322 = vmatpush1.msra.mxu0 0.0
        %2323 = vmatprep.subr.mxu0 0.0
        %2324 = vmatpush1.msra.mxu0 0.0
        %2325 = vmatprep.subr.mxu0 0.0
        %2326 = vmatpush1.msra.mxu0 0.0
        %2327 = vmatprep.subr.mxu0 0.0
        %2328 = vmatpush1.msra.mxu0 0.0
        %2329 = vmatprep.subr.mxu0 0.0
        %2330 = vmatpush1.msra.mxu0 0.0
        %2331 = vmatprep.subr.mxu0 0.0
        %2332 = vmatpush1.msra.mxu0 0.0
        %2333 = vmatprep.subr.mxu0 0.0
        %2334 = vmatpush1.msra.mxu0 0.0
        %2335 = vmatprep.subr.mxu0 0.0
        %2336 = vmatpush1.msra.mxu0 0.0
        %2337 = vmatprep.subr.mxu0 0.0
        %2338 = vmatpush1.msra.mxu0 0.0
        %2339 = vmatprep.subr.mxu0 0.0
        %2340 = vmatpush1.msra.mxu0 0.0
        %2341 = vmatprep.subr.mxu0 0.0
        %2342 = vmatpush1.msra.mxu0 0.0
        %2343 = vmatprep.subr.mxu0 0.0
        %2344 = vmatpush1.msra.mxu0 0.0
        %2345 = vmatprep.mubr.f32.mxu0 0.0
        %2346 = vmatmul.mubr.f32.gmra.mrb[0].mxu0 %v2279
        %v2347 = vpop.f32.mrb[0].mxu0
        %v2348 = vadd.f32 0.0, %v2347
        %v2349 = vpop.f32.mrb[0].mxu0
        %2350 = vdwg.mxu0
        %2351 = vmatprep.subr.mxu0 0.0
        %2352 = vmatpush1.msra.mxu0 %v2272
        %2353 = vmatprep.subr.mxu0 0.0
        %2354 = vmatpush1.msra.mxu0 %v2273
        %2355 = vmatprep.subr.mxu0 0.0
        %2356 = vmatpush1.msra.mxu0 %v2274
        %2357 = vmatprep.subr.mxu0 0.0
        %2358 = vmatpush1.msra.mxu0 %v2275
        %2359 = vmatprep.subr.mxu0 0.0
        %2360 = vmatpush1.msra.mxu0 0.0
        %2361 = vmatprep.subr.mxu0 0.0
        %2362 = vmatpush1.msra.mxu0 0.0
        %2363 = vmatprep.subr.mxu0 0.0
        %2364 = vmatpush1.msra.mxu0 0.0
        %2365 = vmatprep.subr.mxu0 0.0
        %2366 = vmatpush1.msra.mxu0 0.0
        %2367 = vmatprep.subr.mxu0 0.0
        %2368 = vmatpush1.msra.mxu0 0.0
        %2369 = vmatprep.subr.mxu0 0.0
        %2370 = vmatpush1.msra.mxu0 0.0
        %2371 = vmatprep.subr.mxu0 0.0
        %2372 = vmatpush1.msra.mxu0 0.0
        %2373 = vmatprep.subr.mxu0 0.0
        %2374 = vmatpush1.msra.mxu0 0.0
        %2375 = vmatprep.subr.mxu0 0.0
        %2376 = vmatpush1.msra.mxu0 0.0
        %2377 = vmatprep.subr.mxu0 0.0
        %2378 = vmatpush1.msra.mxu0 0.0
        %2379 = vmatprep.subr.mxu0 0.0
        %2380 = vmatpush1.msra.mxu0 0.0
        %2381 = vmatprep.subr.mxu0 0.0
        %2382 = vmatpush1.msra.mxu0 0.0
        %2383 = vmatprep.subr.mxu0 0.0
        %2384 = vmatpush1.msra.mxu0 0.0
        %2385 = vmatprep.subr.mxu0 0.0
        %2386 = vmatpush1.msra.mxu0 0.0
        %2387 = vmatprep.subr.mxu0 0.0
        %2388 = vmatpush1.msra.mxu0 0.0
        %2389 = vmatprep.subr.mxu0 0.0
        %2390 = vmatpush1.msra.mxu0 0.0
        %2391 = vmatprep.subr.mxu0 0.0
        %2392 = vmatpush1.msra.mxu0 0.0
        %2393 = vmatprep.subr.mxu0 0.0
        %2394 = vmatpush1.msra.mxu0 0.0
        %2395 = vmatprep.subr.mxu0 0.0
        %2396 = vmatpush1.msra.mxu0 0.0
        %2397 = vmatprep.subr.mxu0 0.0
        %2398 = vmatpush1.msra.mxu0 0.0
        %2399 = vmatprep.subr.mxu0 0.0
        %2400 = vmatpush1.msra.mxu0 0.0
        %2401 = vmatprep.subr.mxu0 0.0
        %2402 = vmatpush1.msra.mxu0 0.0
        %2403 = vmatprep.subr.mxu0 0.0
        %2404 = vmatpush1.msra.mxu0 0.0
        %2405 = vmatprep.subr.mxu0 0.0
        %2406 = vmatpush1.msra.mxu0 0.0
        %2407 = vmatprep.subr.mxu0 0.0
        %2408 = vmatpush1.msra.mxu0 0.0
        %2409 = vmatprep.subr.mxu0 0.0
        %2410 = vmatpush1.msra.mxu0 0.0
        %2411 = vmatprep.subr.mxu0 0.0
        %2412 = vmatpush1.msra.mxu0 0.0
        %2413 = vmatprep.subr.mxu0 0.0
        %2414 = vmatpush1.msra.mxu0 0.0
        %2415 = vmatprep.mubr.f32.mxu0 0.0
        %2416 = vmatmul.mubr.f32.gmra.mrb[0].mxu0 %v1843
        %v2417 = vpop.f32.mrb[0].mxu0
        %v2418 = vadd.f32 %v2348, %v2417
        %v2419 = vpop.f32.mrb[0].mxu0
        %2420 = vdwg.mxu0
        %v2421 = vld [vmem:[#allocation5 + $0x2] sm:$0x1]
        %v2422 = vlaneseq
        %v2423 = vshrl.u32 %v2422, 7
        %v2424 = vsub.s32 0, %v2423
        %v2425 = vrot.slane %v2421, %v2424
        %v2426 = vadd.f32 %v2418, %v2425
        %v2427 = vsub.f32 0.0, %v2426
        %v2428 = vmul.f32 %v2427, 1.442695
        %v2429 = vpow.pop %v2428
        %v2430 = vadd.f32 %v2429, 1.0
        %v2431 = vrcp.pop %v2430
        %v2432 = vmul.f32 %v2426, %v2431
        %v2433 = vld [vmem:[#allocation5 + $0x120] sm:$0xff]
        %v2434 = vld [vmem:[#allocation5 + $0x128] sm:$0xff]
        %v2435 = vld [vmem:[#allocation5 + $0x130] sm:$0xff]
        %v2436 = vld [vmem:[#allocation5 + $0x138] sm:$0xff]
        %v2437 = vld [vmem:[#allocation5 + $0x140] sm:$0xff]
        %v2438 = vld [vmem:[#allocation5 + $0x148] sm:$0xff]
        %v2439 = vld [vmem:[#allocation5 + $0x150] sm:$0xff]
        %v2440 = vld [vmem:[#allocation5 + $0x158] sm:$0xff]
        %v2442 = vsel %vm1040, %v2432, 0
        %2444 = vmatprep.subr.mxu0 0.0
        %2445 = vmatpush1.msra.mxu0 %v2433
        %2446 = vmatprep.subr.mxu0 0.0
        %2447 = vmatpush1.msra.mxu0 %v2434
        %2448 = vmatprep.subr.mxu0 0.0
        %2449 = vmatpush1.msra.mxu0 %v2435
        %2450 = vmatprep.subr.mxu0 0.0
        %2451 = vmatpush1.msra.mxu0 %v2436
        %2452 = vmatprep.subr.mxu0 0.0
        %2453 = vmatpush1.msra.mxu0 %v2437
        %2454 = vmatprep.subr.mxu0 0.0
        %2455 = vmatpush1.msra.mxu0 %v2438
        %2456 = vmatprep.subr.mxu0 0.0
        %2457 = vmatpush1.msra.mxu0 %v2439
        %2458 = vmatprep.subr.mxu0 0.0
        %2459 = vmatpush1.msra.mxu0 %v2440
        %2460 = vmatprep.subr.mxu0 0.0
        %2461 = vmatpush1.msra.mxu0 0.0
        %2462 = vmatprep.subr.mxu0 0.0
        %2463 = vmatpush1.msra.mxu0 0.0
        %2464 = vmatprep.subr.mxu0 0.0
        %2465 = vmatpush1.msra.mxu0 0.0
        %2466 = vmatprep.subr.mxu0 0.0
        %2467 = vmatpush1.msra.mxu0 0.0
        %2468 = vmatprep.subr.mxu0 0.0
        %2469 = vmatpush1.msra.mxu0 0.0
        %2470 = vmatprep.subr.mxu0 0.0
        %2471 = vmatpush1.msra.mxu0 0.0
        %2472 = vmatprep.subr.mxu0 0.0
        %2473 = vmatpush1.msra.mxu0 0.0
        %2474 = vmatprep.subr.mxu0 0.0
        %2475 = vmatpush1.msra.mxu0 0.0
        %2476 = vmatprep.subr.mxu0 0.0
        %2477 = vmatpush1.msra.mxu0 0.0
        %2478 = vmatprep.subr.mxu0 0.0
        %2479 = vmatpush1.msra.mxu0 0.0
        %2480 = vmatprep.subr.mxu0 0.0
        %2481 = vmatpush1.msra.mxu0 0.0
        %2482 = vmatprep.subr.mxu0 0.0
        %2483 = vmatpush1.msra.mxu0 0.0
        %2484 = vmatprep.subr.mxu0 0.0
        %2485 = vmatpush1.msra.mxu0 0.0
        %2486 = vmatprep.subr.mxu0 0.0
        %2487 = vmatpush1.msra.mxu0 0.0
        %2488 = vmatprep.subr.mxu0 0.0
        %2489 = vmatpush1.msra.mxu0 0.0
        %2490 = vmatprep.subr.mxu0 0.0
        %2491 = vmatpush1.msra.mxu0 0.0
        %2492 = vmatprep.subr.mxu0 0.0
        %2493 = vmatpush1.msra.mxu0 0.0
        %2494 = vmatprep.subr.mxu0 0.0
        %2495 = vmatpush1.msra.mxu0 0.0
        %2496 = vmatprep.subr.mxu0 0.0
        %2497 = vmatpush1.msra.mxu0 0.0
        %2498 = vmatprep.subr.mxu0 0.0
        %2499 = vmatpush1.msra.mxu0 0.0
        %2500 = vmatprep.subr.mxu0 0.0
        %2501 = vmatpush1.msra.mxu0 0.0
        %2502 = vmatprep.subr.mxu0 0.0
        %2503 = vmatpush1.msra.mxu0 0.0
        %2504 = vmatprep.subr.mxu0 0.0
        %2505 = vmatpush1.msra.mxu0 0.0
        %2506 = vmatprep.subr.mxu0 0.0
        %2507 = vmatpush1.msra.mxu0 0.0
        %2508 = vmatprep.mubr.f32.mxu0 0.0
        %2509 = vmatmul.mubr.f32.gmra.mrb[0].mxu0 %v2442
        %v2510 = vpop.f32.mrb[0].mxu0
        %v2511 = vadd.f32 0.0, %v2510
        %v2512 = vpop.f32.mrb[0].mxu0
        %2513 = vdwg.mxu0
        %v2514 = vadd.f32 %v1820, %v2511
        %v2515 = vld [vmem:[#allocation5 + $0x5] sm:$0x1]
        %v2516 = vlaneseq
        %v2517 = vshrl.u32 %v2516, 7
        %v2518 = vsub.s32 0, %v2517
        %v2519 = vrot.slane %v2515, %v2518
        %v2520 = vadd.f32 %v2514, %v2519
        %v2521 = vsel %vm416, %v2520, 0.0
        %v2522 = vrot.slane %v2521, 4
        %v2523 = vadd.f32 %v2521, %v2522
        %v2524 = vrot.slane %v2523, 2
        %v2525 = vadd.f32 %v2523, %v2524
        %v2526 = vrot.slane %v2525, 1
        %v2527 = vadd.f32 %v2525, %v2526
        %v2528 = vrcp.pop 8.0
        %v2529 = vmul.f32 %v2527, %v2528
        %v2530 = vld [vmem:[#allocation5 + $0x160] sm:$0xff]
        %v2531 = vld [vmem:[#allocation5 + $0x168] sm:$0xff]
        %v2532 = vld [vmem:[#allocation5 + $0x170] sm:$0xff]
        %v2533 = vld [vmem:[#allocation5 + $0x178] sm:$0xff]
        %v2534 = vld [vmem:[#allocation5 + $0x9] sm:$0x1]
        %v2536 = vsel %vm416, %v2529, 0
        %2538 = vmatprep.subr.mxu0 0.0
        %2539 = vmatpush1.msra.mxu0 %v2530
        %2540 = vmatprep.subr.mxu0 0.0
        %2541 = vmatpush1.msra.mxu0 %v2531
        %2542 = vmatprep.subr.mxu0 0.0
        %2543 = vmatpush1.msra.mxu0 %v2532
        %2544 = vmatprep.subr.mxu0 0.0
        %2545 = vmatpush1.msra.mxu0 %v2533
        %2546 = vmatprep.subr.mxu0 0.0
        %2547 = vmatpush1.msra.mxu0 0.0
        %2548 = vmatprep.subr.mxu0 0.0
        %2549 = vmatpush1.msra.mxu0 0.0
        %2550 = vmatprep.subr.mxu0 0.0
        %2551 = vmatpush1.msra.mxu0 0.0
        %2552 = vmatprep.subr.mxu0 0.0
        %2553 = vmatpush1.msra.mxu0 0.0
        %2554 = vmatprep.subr.mxu0 0.0
        %2555 = vmatpush1.msra.mxu0 0.0
        %2556 = vmatprep.subr.mxu0 0.0
        %2557 = vmatpush1.msra.mxu0 0.0
        %2558 = vmatprep.subr.mxu0 0.0
        %2559 = vmatpush1.msra.mxu0 0.0
        %2560 = vmatprep.subr.mxu0 0.0
        %2561 = vmatpush1.msra.mxu0 0.0
        %2562 = vmatprep.subr.mxu0 0.0
        %2563 = vmatpush1.msra.mxu0 0.0
        %2564 = vmatprep.subr.mxu0 0.0
        %2565 = vmatpush1.msra.mxu0 0.0
        %2566 = vmatprep.subr.mxu0 0.0
        %2567 = vmatpush1.msra.mxu0 0.0
        %2568 = vmatprep.subr.mxu0 0.0
        %2569 = vmatpush1.msra.mxu0 0.0
        %2570 = vmatprep.subr.mxu0 0.0
        %2571 = vmatpush1.msra.mxu0 0.0
        %2572 = vmatprep.subr.mxu0 0.0
        %2573 = vmatpush1.msra.mxu0 0.0
        %2574 = vmatprep.subr.mxu0 0.0
        %2575 = vmatpush1.msra.mxu0 0.0
        %2576 = vmatprep.subr.mxu0 0.0
        %2577 = vmatpush1.msra.mxu0 0.0
        %2578 = vmatprep.subr.mxu0 0.0
        %2579 = vmatpush1.msra.mxu0 0.0
        %2580 = vmatprep.subr.mxu0 0.0
        %2581 = vmatpush1.msra.mxu0 0.0
        %2582 = vmatprep.subr.mxu0 0.0
        %2583 = vmatpush1.msra.mxu0 0.0
        %2584 = vmatprep.subr.mxu0 0.0
        %2585 = vmatpush1.msra.mxu0 0.0
        %2586 = vmatprep.subr.mxu0 0.0
        %2587 = vmatpush1.msra.mxu0 0.0
        %2588 = vmatprep.subr.mxu0 0.0
        %2589 = vmatpush1.msra.mxu0 0.0
        %2590 = vmatprep.subr.mxu0 0.0
        %2591 = vmatpush1.msra.mxu0 0.0
        %2592 = vmatprep.subr.mxu0 0.0
        %2593 = vmatpush1.msra.mxu0 0.0
        %2594 = vmatprep.subr.mxu0 0.0
        %2595 = vmatpush1.msra.mxu0 0.0
        %2596 = vmatprep.subr.mxu0 0.0
        %2597 = vmatpush1.msra.mxu0 0.0
        %2598 = vmatprep.subr.mxu0 0.0
        %2599 = vmatpush1.msra.mxu0 0.0
        %2600 = vmatprep.subr.mxu0 0.0
        %2601 = vmatpush1.msra.mxu0 0.0
        %2602 = vmatprep.mubr.f32.mxu0 0.0
        %2603 = vmatmul.mubr.f32.gmra.mrb[0].mxu0 %v2536
        %v2604 = vpop.f32.mrb[0].mxu0
        %v2605 = vadd.f32 %v2534, %v2604
        %v2606 = vpop.f32.mrb[0].mxu0
        %2607 = vdwg.mxu0
        %vm2608 = vcmask 122880
        %2609 = vst.msk [vmem:[%s230] sm:$0x1] %vm2608, %v2605
        %s2610 = sand.u32 %s122, 1
        %s2611 = scalar_lea.sflag [#allocation4], %s2610
        %s2612 = sand.u32 %s122, 1
        %s2613 = scalar_lea.vmem [#allocation7], %s2612
        // Predicated region
        $region45: #{tpu_custom_call.1} parent=35 // pred_check
          %p2614 = pneg %p132
        $region46: #{tpu_custom_call.1} parent=35 // pred_check_branch
          %2616 = sbr.rel (%p2614) target = $region48
        $region47: #{tpu_custom_call.1} parent=35 // pred_region
          %s2618 = ssub.s32 16, 16
          %2619 = vsyncadd %s2611, %s2618
          %s2620 = smul.addr %s20, 16
          %s2621 = scalar_lea.hbm %s4, %s2620
          %s2623 = sshll.u32 %s2613, 4
          %s2624 = int_to_ptr.vmem [resolvable:$true] %s2623
          %2626 = dma.vmem_to_hbm [thread:$0]  %s2624, 16, %s2621, %s2611
        $region48: #{tpu_custom_call.1} parent=35 // pred_fallthru
          _
      $region36: #{tpu_custom_call.1} parent=5 // pred_fallthru
        _
      %p2627 = scmp.le.s32.totalorder 2, %s15
      // Predicated region
      $region49: #{tpu_custom_call.1} parent=5 // pred_check
        %p2628 = pneg %p2627
      $region50: #{tpu_custom_call.1} parent=5 // pred_check_branch
        %2630 = sbr.rel (%p2628) target = $region52
      $region51: #{tpu_custom_call.1} parent=5 // pred_region
        %s2631 = ssub.s32 %s15, 2
        // Predicated region
        $region53: #{tpu_custom_call.1} parent=51 // pred_check
          %p2632 = pneg %p138
        $region54: #{tpu_custom_call.1} parent=51 // pred_check_branch
          %2634 = sbr.rel (%p2632) target = $region56
        $region55: #{tpu_custom_call.1} parent=51 // pred_region
          %s2635 = sand.u32 %s123, 1
          %s2636 = scalar_lea.sflag [#allocation4], %s2635
          %s2637 = sand.u32 %s123, 1
          %s2638 = scalar_lea.vmem [#allocation7], %s2637
          %2639 = dma.done %s2636, 16
        $region56: #{tpu_custom_call.1} parent=51 // pred_fallthru
          _
      $region52: #{tpu_custom_call.1} parent=5 // pred_fallthru
        _
    $region6: #{tpu_custom_call.1} parent=1 // loop_footer
      %s19 = sadd.s32 1, %s15
    $region7: #{tpu_custom_call.1} parent=1 // loop_footer_branch
      %14 = sbr.rel target = $region3
    $region8: #{tpu_custom_call.1} parent=1 // loop_exit
      _
    %2640 = vsyncpa [#allocation3], 1
    %s2641 = scalar_lea.sflag [#allocation3], 1
    %2642 = vsyncpa %s2641, 1
    %2643 = vsyncpa [#allocation6], 1
    %2644 = vsyncpa [#allocation4], 1
    %s2645 = scalar_lea.sflag [#allocation4], 1
    %2646 = vsyncpa %s2645, 1

</llo_original>
